<compile_context>
chip_gen: v7x
topology: tpu7x:2x2x1
jax: 0.10.0
libtpu: 0.0.40
codegen_flags: <defaults>
</compile_context>

<pallas_src>
import math
import numpy as np
import jax
import jax.numpy as jnp
from jax.experimental import pallas as pl
from jax.experimental.pallas import tpu as pltpu

FEATURE_DIM = 480  # feature_number in ESM2_only_sol


def _round_up(x: int, m: int) -> int:
    return ((x + m - 1) // m) * m


def _make_sol_kernel(TB: int, TS: int, Vp: int, Dp: int, S_inner: int, inv_count: float):
    """Fused (token-embedding gather) + seq-mean pool + Linear(D,1) + Sigmoid kernel."""

    def kernel(plen_ref, bias_ref, tok_ref, table_ref, w_ref, out_ref, acc_ref):
        # plen_ref:  SMEM (1,) int32   -- max(mask), clamped to L
        # bias_ref:  SMEM (1,) f32
        # tok_ref:   VMEM (TB, TS) int32   tokens for positions 1..L-2 of this tile
        # table_ref: VMEM (Vp, Dp) f32     zero-padded embedding table (backbone stand-in)
        # w_ref:     VMEM (1, Dp) f32      zero-padded fc weight
        # out_ref:   VMEM (TB, 1) f32
        # acc_ref:   VMEM (TB, Dp) f32     running sequence-sum of embeddings
        k = pl.program_id(1)

        @pl.when(k == 0)
        def _init():
            acc_ref[...] = jnp.zeros_like(acc_ref)

        # --- fused "embedding gather" + sequence-sum for this (batch, seq) tile ---
        plen = plen_ref[0]
        # position within emb[:, 1:L-1]; original token index is pos + 1
        pos = k * TS + jax.lax.broadcasted_iota(jnp.int32, (TB, TS), 1)
        valid = (pos < (plen - 1)) & (pos < S_inner)          # zero-pad + seq-pad mask
        tok = jnp.where(valid, tok_ref[...], Vp)              # sentinel row -> contributes 0
        vocab = jax.lax.broadcasted_iota(jnp.int32, (TB, TS, Vp), 2)
        onehot = (tok[:, :, None] == vocab).astype(jnp.float32)   # [TB, TS, Vp] (VPU)
        counts = jnp.sum(onehot, axis=1)                           # [TB, Vp]     (XLU)
        acc_ref[...] += jnp.dot(counts, table_ref[...],            # [TB, Dp]     (MXU)
                                preferred_element_type=jnp.float32,
                                precision=jax.lax.Precision.HIGHEST)

        # --- finalize: mean over padded sequence length, matvec with w, bias, sigmoid ---
        @pl.when(k == pl.num_programs(1) - 1)
        def _fin():
            # NOTE: AdaptiveAvgPool2d divides by the full padded length (L-2), including
            # zero-padded positions -- this matches the reference module (not a masked mean).
            pooled = acc_ref[...] * inv_count                                    # [TB, Dp]
            logits = jnp.sum(pooled * w_ref[...], axis=1, keepdims=True)         # [TB, 1]
            logits = logits + bias_ref[0]
            out_ref[...] = jax.nn.sigmoid(logits)

    return kernel


def esm2_only_sol_forward(params, tokens, mask, *, tb: int = 8, ts: int = 512):
    """Mirrors ESM2_only_sol.forward(x, mask) with a fused Pallas TPU kernel."""
    table = params["embed_tokens"]
    w = params["fc_w"].reshape(-1)
    bias = params["fc_b"].reshape(-1)[:1].astype(jnp.float32)        # (1,)

    V, D = table.shape
    B, L = tokens.shape
    assert L >= 3, "need BOS + at least one residue + EOS"
    S = L - 2                                                        # inner sequence length

    # Tile sizes (respect the (8, 128) block constraint on every generation).
    TB = _round_up(max(tb, 8), 8)
    TS = min(_round_up(ts, 128), _round_up(S, 128))
    B_pad = _round_up(B, TB)
    S_pad = _round_up(S, TS)
    Vp = _round_up(V, 128)                                           # lane-dense vocab
    Dp = _round_up(D, 128)                                           # 480 -> 512

    # On-device mask handling: padding_length = max(mask) (no host sync / np round-trip).
    plen = jnp.minimum(jnp.max(mask.astype(jnp.int32)), L).astype(jnp.int32).reshape(1)

    # Tokens for emb[:, 1:L-1] (BOS / last position dropped), zero-padded to tile multiples.
    toks_inner = tokens[:, 1:L - 1].astype(jnp.int32)                # [B, S]
    toks_p = jnp.zeros((B_pad, S_pad), jnp.int32).at[:B, :S].set(toks_inner)
    table_p = jnp.zeros((Vp, Dp), jnp.float32).at[:V, :D].set(table.astype(jnp.float32))
    w_p = jnp.zeros((1, Dp), jnp.float32).at[0, :D].set(w.astype(jnp.float32))

    kernel = _make_sol_kernel(TB, TS, Vp, Dp, S, 1.0 / float(S))
    grid = (B_pad // TB, S_pad // TS)                                # seq (reduction) LAST

    out = pl.pallas_call(
        kernel,
        out_shape=jax.ShapeDtypeStruct((B_pad, 1), jnp.float32),
        grid=grid,
        in_specs=[
            pl.BlockSpec(memory_space=pltpu.MemorySpace.SMEM),       # plen
            pl.BlockSpec(memory_space=pltpu.MemorySpace.SMEM),       # bias
            pl.BlockSpec((TB, TS), lambda b, k: (b, k)),             # tokens tile
            pl.BlockSpec((Vp, Dp), lambda b, k: (0, 0)),             # embedding table (resident)
            pl.BlockSpec((1, Dp), lambda b, k: (0, 0)),              # fc weight
        ],
        out_specs=pl.BlockSpec((TB, 1), lambda b, k: (b, 0)),        # same block across k -> acc
        scratch_shapes=[pltpu.VMEM((TB, Dp), jnp.float32)],
        compiler_params=pltpu.CompilerParams(
            dimension_semantics=("parallel", "arbitrary"),
            vmem_limit_bytes=16 * 1024 * 1024,                       # safe on v5e/v6e/v7x
        ),
    )(plen, bias, toks_p, table_p, w_p)

    return out[:B]


def forward_reference(params, tokens, mask):
    """Pure-JAX reference of the same forward semantics (for validation)."""
    B, L = tokens.shape
    S = L - 2
    plen = jnp.minimum(jnp.max(mask.astype(jnp.int32)), L)
    emb = params["embed_tokens"][tokens]                             # [B, L, D]
    pos = jnp.arange(L)
    emb = jnp.where((pos < plen)[None, :, None], emb, 0.0)           # zero-pad past max(mask)
    emb = emb[:, 1:L - 1, :]                                         # [B, L-2, D]
    pooled = jnp.mean(emb, axis=1)                                   # AdaptiveAvgPool2d((D, 1))
    logits = pooled @ params["fc_w"].reshape(-1, 1) + params["fc_b"].reshape(1, 1)
    return jax.nn.sigmoid(logits)


if __name__ == "__main__":
    key = jax.random.PRNGKey(0)
    k_tok, k_len, k_emb, k_w, k_b = jax.random.split(key, 5)

    # Small-but-representative shapes: exercises 2 batch tiles x 2 sequence tiles.
    B, L, V, D = 10, 258, 33, FEATURE_DIM        # S = L - 2 = 256
    tokens = jax.random.randint(k_tok, (B, L), 0, V, dtype=jnp.int32)
    mask = jax.random.randint(k_len, (B,), 10, L + 1, dtype=jnp.int32)   # per-sequence lengths

    params = {
        "embed_tokens": jax.random.normal(k_emb, (V, D), jnp.float32) * 0.02,
        "fc_w": jax.random.normal(k_w, (D,), jnp.float32) * (1.0 / math.sqrt(D)),
        "fc_b": jax.random.normal(k_b, (), jnp.float32) * 0.1,
    }

    out = esm2_only_sol_forward(params, tokens, mask, ts=128)
    out = jax.block_until_ready(out)

    ref = jax.block_until_ready(forward_reference(params, tokens, mask))

    assert out.shape == (B, 1)
    assert bool(jnp.all((out >= 0.0) & (out <= 1.0)))
    np.testing.assert_allclose(np.asarray(out), np.asarray(ref), rtol=1e-3, atol=1e-4)
    print("KERNEL_OK")
</pallas_src>

<mosaic_0001>
module attributes {stable_mosaic.version = 11 : i64} {
  func.func @kernel(%arg0: i32, %arg1: i32, %arg2: memref<1xi32, #tpu.memory_space<smem>>, %arg3: memref<1xf32, #tpu.memory_space<smem>>, %arg4: memref<8x128xi32, #tpu.memory_space<vmem>>, %arg5: memref<128x512xf32, #tpu.memory_space<vmem>>, %arg6: memref<1x512xf32, #tpu.memory_space<vmem>>, %arg7: memref<8x1xf32, #tpu.memory_space<vmem>>, %arg8: memref<8x512xf32, #tpu.memory_space<vmem>>) attributes {dimension_semantics = [#tpu.dimension_semantics<parallel>, #tpu.dimension_semantics<arbitrary>], iteration_bounds = array<i64: 2, 2>, scalar_prefetch = 0 : i64, scratch_operands = 1 : i64, tpu.core_type = #tpu.core_type<tc>, window_params = [{transform_indices = @transform_0, window_bounds = array<i64: 1>}, {transform_indices = @transform_1, window_bounds = array<i64: 1>}, {transform_indices = @transform_2, window_bounds = array<i64: 8, 128>}, {pipeline_mode = #tpu.pipeline_mode<synchronous>, transform_indices = @transform_3, window_bounds = array<i64: 128, 512>}, {pipeline_mode = #tpu.pipeline_mode<synchronous>, transform_indices = @transform_4, window_bounds = array<i64: 1, 512>}, {transform_indices = @transform_5, window_bounds = array<i64: 8, 1>}]} {
    %c0_i32 = arith.constant 0 : i32
    %0 = arith.cmpi eq, %arg1, %c0_i32 : i32
    %1 = arith.extui %0 : i1 to i32
    %c0_i32_0 = arith.constant 0 : i32
    %2 = arith.cmpi ne, %1, %c0_i32_0 : i32
    scf.if %2 {
      %cst_13 = arith.constant 0.000000e+00 : f32
      %32 = vector.broadcast %cst_13 : f32 to vector<8x512xf32>
      %c0_14 = arith.constant 0 : index
      %c0_15 = arith.constant 0 : index
      %33 = vector.load %arg8[%c0_14, %c0_15] : memref<8x512xf32, #tpu.memory_space<vmem>>, vector<8x512xf32>
      tpu.vector_store %arg8[%c0_14, %c0_15], %32 {strides = array<i32>} : memref<8x512xf32, #tpu.memory_space<vmem>>, vector<8x512xf32>,
    } else {
    }
    %c0 = arith.constant 0 : index
    %3 = memref.load %arg2[%c0] : memref<1xi32, #tpu.memory_space<smem>>
    %c128_i32 = arith.constant 128 : i32
    %4 = arith.muli %arg1, %c128_i32 : i32
    %5 = tpu.iota {dimensions = array<i32: 1>} : vector<8x128xi32>
    %6 = vector.broadcast %4 : i32 to vector<8x128xi32>
    %7 = arith.addi %6, %5 : vector<8x128xi32>
    %c1_i32 = arith.constant 1 : i32
    %8 = arith.subi %3, %c1_i32 : i32
    %9 = vector.broadcast %8 : i32 to vector<8x128xi32>
    %10 = arith.cmpi slt, %7, %9 : vector<8x128xi32>
    %c256_i32 = arith.constant 256 : i32
    %11 = vector.broadcast %c256_i32 : i32 to vector<8x128xi32>
    %12 = arith.cmpi slt, %7, %11 : vector<8x128xi32>
    %13 = arith.andi %10, %12 : vector<8x128xi1>
    %c0_1 = arith.constant 0 : index
    %c0_2 = arith.constant 0 : index
    %14 = vector.load %arg4[%c0_1, %c0_2] : memref<8x128xi32, #tpu.memory_space<vmem>>, vector<8x128xi32>
    %c128_i32_3 = arith.constant 128 : i32
    %15 = vector.broadcast %c128_i32_3 : i32 to vector<8x128xi32>
    %16 = arith.select %13, %14, %15 : vector<8x128xi1>, vector<8x128xi32>
    %17 = tpu.iota {dimensions = array<i32: 2>} : vector<8x128x128xi32>
    %18 = vector.shape_cast %16 : vector<8x128xi32> to vector<8x128x1xi32>
    %19 = vector.broadcast %18 : vector<8x128x1xi32> to vector<8x128x128xi32>
    %20 = arith.cmpi eq, %19, %17 : vector<8x128x128xi32>
    %21 = arith.extui %20 : vector<8x128x128xi1> to vector<8x128x128xi32>
    %22 = arith.sitofp %21 : vector<8x128x128xi32> to vector<8x128x128xf32>
    %cst = arith.constant dense<0.000000e+00> : vector<8x128xf32>
    %23 = vector.multi_reduction <add>, %22, %cst [1] : vector<8x128x128xf32> to vector<8x128xf32>
    %c0_4 = arith.constant 0 : index
    %c0_5 = arith.constant 0 : index
    %24 = vector.load %arg8[%c0_4, %c0_5] : memref<8x512xf32, #tpu.memory_space<vmem>>, vector<8x512xf32>
    %c0_6 = arith.constant 0 : index
    %c0_7 = arith.constant 0 : index
    %25 = vector.load %arg5[%c0_6, %c0_7] : memref<128x512xf32, #tpu.memory_space<vmem>>, vector<128x512xf32>
    %cst_8 = arith.constant dense<0.000000e+00> : vector<8x512xf32>
    %26 = tpu.matmul %23, %25, %cst_8 {dimension_numbers = #tpu.dot_dimension_numbers<[1], [0], [0], [1], [0, 0, 1, 1], [], []>, precision = #tpu.contract_precision<fp32>} : vector<8x128xf32>, vector<128x512xf32>, vector<8x512xf32> -> vector<8x512xf32>
    %27 = arith.addf %24, %26 : vector<8x512xf32>
    %c0_9 = arith.constant 0 : index
    %c0_10 = arith.constant 0 : index
    %28 = vector.load %arg8[%c0_9, %c0_10] : memref<8x512xf32, #tpu.memory_space<vmem>>, vector<8x512xf32>
    tpu.vector_store %arg8[%c0_9, %c0_10], %27 {strides = array<i32>} : memref<8x512xf32, #tpu.memory_space<vmem>>, vector<8x512xf32>,
    %c1_i32_11 = arith.constant 1 : i32
    %29 = arith.cmpi eq, %arg1, %c1_i32_11 : i32
    %30 = arith.extui %29 : i1 to i32
    %c0_i32_12 = arith.constant 0 : i32
    %31 = arith.cmpi ne, %30, %c0_i32_12 : i32
    scf.if %31 {
      %c0_13 = arith.constant 0 : index
      %c0_14 = arith.constant 0 : index
      %32 = vector.load %arg8[%c0_13, %c0_14] : memref<8x512xf32, #tpu.memory_space<vmem>>, vector<8x512xf32>
      %cst_15 = arith.constant 3.906250e-03 : f32
      %33 = vector.broadcast %cst_15 : f32 to vector<8x512xf32>
      %34 = arith.mulf %32, %33 : vector<8x512xf32>
      %c0_16 = arith.constant 0 : index
      %c0_17 = arith.constant 0 : index
      %35 = vector.load %arg6[%c0_16, %c0_17] : memref<1x512xf32, #tpu.memory_space<vmem>>, vector<1x512xf32>
      %36 = vector.broadcast %35 : vector<1x512xf32> to vector<8x512xf32>
      %37 = arith.mulf %34, %36 : vector<8x512xf32>
      %cst_18 = arith.constant dense<0.000000e+00> : vector<8xf32>
      %38 = vector.multi_reduction <add>, %37, %cst_18 [1] : vector<8x512xf32> to vector<8xf32>
      %39 = vector.shape_cast %38 : vector<8xf32> to vector<8x1xf32>
      %c0_19 = arith.constant 0 : index
      %40 = memref.load %arg3[%c0_19] : memref<1xf32, #tpu.memory_space<smem>>
      %41 = vector.broadcast %40 : f32 to vector<8x1xf32>
      %42 = arith.addf %39, %41 : vector<8x1xf32>
      %43 = arith.negf %42 : vector<8x1xf32>
      %44 = math.exp %43 : vector<8x1xf32>
      %cst_20 = arith.constant 1.000000e+00 : f32
      %45 = vector.broadcast %cst_20 : f32 to vector<8x1xf32>
      %46 = arith.addf %45, %44 : vector<8x1xf32>
      %47 = arith.divf %45, %46 : vector<8x1xf32>
      %c0_21 = arith.constant 0 : index
      %c0_22 = arith.constant 0 : index
      %48 = vector.load %arg7[%c0_21, %c0_22] : memref<8x1xf32, #tpu.memory_space<vmem>>, vector<8x1xf32>
      tpu.vector_store %arg7[%c0_21, %c0_22], %47 {strides = array<i32>} : memref<8x1xf32, #tpu.memory_space<vmem>>, vector<8x1xf32>,
    } else {
    }
    return
  }
  func.func @transform_0(%arg0: i32, %arg1: i32) -> i32 {
    %c0_i32 = arith.constant 0 : i32
    %c0_i32_0 = arith.constant 0 : i32
    return %c0_i32 : i32
  }
  func.func @transform_1(%arg0: i32, %arg1: i32) -> i32 {
    %c0_i32 = arith.constant 0 : i32
    %c0_i32_0 = arith.constant 0 : i32
    return %c0_i32 : i32
  }
  func.func @transform_2(%arg0: i32, %arg1: i32) -> (i32, i32) {
    %c0_i32 = arith.constant 0 : i32
    return %arg0, %arg1 : i32, i32
  }
  func.func @transform_3(%arg0: i32, %arg1: i32) -> (i32, i32) {
    %c0_i32 = arith.constant 0 : i32
    %c0_i32_0 = arith.constant 0 : i32
    %c0_i32_1 = arith.constant 0 : i32
    return %c0_i32, %c0_i32_0 : i32, i32
  }
  func.func @transform_4(%arg0: i32, %arg1: i32) -> (i32, i32) {
    %c0_i32 = arith.constant 0 : i32
    %c0_i32_0 = arith.constant 0 : i32
    %c0_i32_1 = arith.constant 0 : i32
    return %c0_i32, %c0_i32_0 : i32, i32
  }
  func.func @transform_5(%arg0: i32, %arg1: i32) -> (i32, i32) {
    %c0_i32 = arith.constant 0 : i32
    %c0_i32_0 = arith.constant 0 : i32
    return %arg0, %c0_i32 : i32, i32
  }
}

</mosaic_0001>

<llo_original>
// kernel: tpu_custom_call.1
$region0: #{tpu_custom_call.1}
  #allocation0 [shape = 'u32[]', space=smem, size = 0x4, offset = 0x4, fixed_abs, tag = 'smem constant byte address 0x4 - core index']
  #allocation1 [shape = 'u32[144,128]{1,0:T(1,128)}', space=vmem, size = 0x12000, scoped, tag = 'internal scratch']
  #allocation2 [shape = 'f32[8,512]{1,0:T(8,128)}', space=vmem, size = 0x4000, scoped, tag = 'scratch operand']
  #allocation3 [shape = 's32[1]{0:T(128)S(6)}', space=smem, size = 0x200, scoped, tag = 'scoped memory for tpu_custom_call.1']
  #allocation4 [shape = 'f32[1]{0:T(128)S(6)}', space=smem, size = 0x200, scoped, tag = 'scoped memory for tpu_custom_call.1']
  %s0 = inlined_call_operand.<no memory space> [shape: s32[1], index: 0, kind: input, shape index: {}]
  %s1 = inlined_call_operand.<no memory space> [shape: f32[1], index: 1, kind: input, shape index: {}]
  %s2 = inlined_call_operand.hbm [shape: s32[16,256], index: 2, kind: input, shape index: {}]
  %s3 = inlined_call_operand.hbm [shape: f32[128,512], index: 3, kind: input, shape index: {}]
  %s4 = inlined_call_operand.vmem [shape: f32[1,512], index: 4, kind: input, shape index: {}]
  %s5 = inlined_call_operand.vmem [shape: f32[16,1], index: 5, kind: output, shape index: {}]
  %s6 = sld [smem:[#allocation0]]
  $region69: #{tpu_custom_call.1} parent=0
    _
  %s8 = ssub.s32 1, %s6
  %s9 = scalar_select 0, %s8, %s6
  %10 = sst [smem:[#allocation3]] %s0
  %11 = sst [smem:[#allocation4]] %s1
  $region1: #{tpu_custom_call.1} parent=0
    #allocation5 [shape = 'u8[8192]{0}', space=vmem, size = 0x2000, scoped, tag = 'input window, operand 2']
    #allocation6 [shape = 's32[2]{0}', space=sflag, size = 0x8, scoped, tag = 'scoped memory for tpu_custom_call.1']
    #allocation7 [shape = 'u8[262144]{0}', space=vmem, size = 0x40000, scoped, tag = 'input window, operand 3, single buffered']
    #allocation8 [shape = 's32[1]{0}', space=sflag, size = 0x4, scoped, tag = 'scoped memory for tpu_custom_call.1']
    %12 = vsyncpa [#allocation6], 0
    %s13 = scalar_lea.sflag [#allocation6], 1
    %14 = vsyncpa %s13, 0
    %15 = vsyncpa [#allocation8], 0
    loop: start=0, step=1, limit=6
    $region2: #{tpu_custom_call.1} parent=1 // loop_pre_header
      _
    $region3: #{tpu_custom_call.1} parent=1 // loop_header
      %s17 = sphi 0, %s21
      %p18 = scmp.ge.s32.totalorder %s17, 6
      %s24 = sphi 0, %s36
      %s25 = sphi 0, %s32
      %s26 = sphi 0, %s24
      %s27 = sphi 0, %s25
      %s28 = sphi 0, %s26
      %s29 = sphi 0, %s27
      %s37 = sphi 0, %s37
      %s39 = sphi 0, %s37
      %s40 = sphi 0, %s39
      %s54 = sphi 0, %s40
      %s58 = sphi 0, %s58
      %s60 = sphi 0, %s58
      %s61 = sphi 0, %s60
      %s75 = sphi 0, %s61
      %s83 = sphi 0, %s85
      %s86 = sphi 0, %s83
      %s87 = sphi 0, %s86
      %s103 = sphi 0, %s87
      %s107 = sphi 0, %s107
      %s109 = sphi 0, %s107
      %s110 = sphi 0, %s109
      %s124 = sphi 0, %s110
      %s128 = sphi 0, %s128
      %s130 = sphi 0, %s128
      %s131 = sphi 0, %s130
      %s145 = sphi 0, %s131
      %s151 = sphi 0, %s153
      %s154 = sphi 0, %s151
      %s155 = sphi 0, %s154
      %s171 = sphi 0, %s155
    $region4: #{tpu_custom_call.1} parent=1 // loop_header_branch
      %20 = sbr.rel (%p18) target = $region8
    $region5: #{tpu_custom_call.1} parent=1 // loop_body
      %s22 = ssub.s32 %s17, 1
      %s23 = ssub.s32 %s17, 2
      %s30 = sadd.s32 1, %s25
      %p31 = scmp.ge.s32.totalorder %s30, 2
      %s32 = scalar_select %p31, 0, %s30
      %s33 = sadd.s32 1, %s24
      %s34 = scalar_select %p31, %s33, %s24
      %p35 = scmp.ge.s32.totalorder %s34, 2
      %s36 = scalar_select %p35, 0, %s34
      %s38 = sadd.s32 %s37, 1
      %p41 = scmp.eq.s32.totalorder %s17, 3
      %p42 = scmp.ne.s32.totalorder %s37, %s39
      %p43 = scmp.eq.s32.totalorder %s17, 0
      %p44 = por %p42, %p43
      %p45 = scmp.ne.s32.totalorder %s37, %s39
      %p46 = scmp.eq.s32.totalorder %s22, 3
      %p47 = por %p45, %p46
      %p48 = scmp.ne.s32.totalorder %s39, %s40
      %p49 = scmp.eq.s32.totalorder %s22, 0
      %p50 = por %p48, %p49
      %p51 = scmp.ne.s32.totalorder %s39, %s40
      %p52 = scmp.eq.s32.totalorder %s23, 3
      %p53 = por %p51, %p52
      %p55 = scmp.ne.s32.totalorder %s40, %s54
      %p56 = scmp.eq.s32.totalorder %s23, 0
      %p57 = por %p55, %p56
      %s59 = sadd.s32 %s58, 1
      %p62 = scmp.eq.s32.totalorder %s17, 3
      %p63 = scmp.ne.s32.totalorder %s58, %s60
      %p64 = scmp.eq.s32.totalorder %s17, 0
      %p65 = por %p63, %p64
      %p66 = scmp.ne.s32.totalorder %s58, %s60
      %p67 = scmp.eq.s32.totalorder %s22, 3
      %p68 = por %p66, %p67
      %p69 = scmp.ne.s32.totalorder %s60, %s61
      %p70 = scmp.eq.s32.totalorder %s22, 0
      %p71 = por %p69, %p70
      %p72 = scmp.ne.s32.totalorder %s60, %s61
      %p73 = scmp.eq.s32.totalorder %s23, 3
      %p74 = por %p72, %p73
      %p76 = scmp.ne.s32.totalorder %s61, %s75
      %p77 = scmp.eq.s32.totalorder %s23, 0
      %p78 = por %p76, %p77
      %s79 = ssub.s32 %s24, %s36
      %s80 = ssub.s32 %s25, %s32
      %s81 = sor.u32 %s79, %s80
      %p82 = scmp.eq.s32.totalorder %s81, 0
      %s84 = sadd.s32 %s83, 1
      %s85 = scalar_select %p82, %s83, %s84
      %p88 = pneg %p82
      %p89 = scmp.eq.s32.totalorder %s17, 3
      %p90 = por %p88, %p89
      %p91 = scmp.ne.s32.totalorder %s83, %s86
      %p92 = scmp.eq.s32.totalorder %s17, 0
      %p93 = por %p91, %p92
      %p94 = scmp.ne.s32.totalorder %s83, %s86
      %p95 = scmp.eq.s32.totalorder %s22, 3
      %p96 = por %p94, %p95
      %p97 = scmp.ne.s32.totalorder %s86, %s87
      %p98 = scmp.eq.s32.totalorder %s22, 0
      %p99 = por %p97, %p98
      %p100 = scmp.ne.s32.totalorder %s86, %s87
      %p101 = scmp.eq.s32.totalorder %s23, 3
      %p102 = por %p100, %p101
      %p104 = scmp.ne.s32.totalorder %s87, %s103
      %p105 = scmp.eq.s32.totalorder %s23, 0
      %p106 = por %p104, %p105
      %s108 = sadd.s32 %s107, 1
      %p111 = scmp.eq.s32.totalorder %s17, 3
      %p112 = scmp.ne.s32.totalorder %s107, %s109
      %p113 = scmp.eq.s32.totalorder %s17, 0
      %p114 = por %p112, %p113
      %p115 = scmp.ne.s32.totalorder %s107, %s109
      %p116 = scmp.eq.s32.totalorder %s22, 3
      %p117 = por %p115, %p116
      %p118 = scmp.ne.s32.totalorder %s109, %s110
      %p119 = scmp.eq.s32.totalorder %s22, 0
      %p120 = por %p118, %p119
      %p121 = scmp.ne.s32.totalorder %s109, %s110
      %p122 = scmp.eq.s32.totalorder %s23, 3
      %p123 = por %p121, %p122
      %p125 = scmp.ne.s32.totalorder %s110, %s124
      %p126 = scmp.eq.s32.totalorder %s23, 0
      %p127 = por %p125, %p126
      %s129 = sadd.s32 %s128, 1
      %p132 = scmp.eq.s32.totalorder %s17, 3
      %p133 = scmp.ne.s32.totalorder %s128, %s130
      %p134 = scmp.eq.s32.totalorder %s17, 0
      %p135 = por %p133, %p134
      %p136 = scmp.ne.s32.totalorder %s128, %s130
      %p137 = scmp.eq.s32.totalorder %s22, 3
      %p138 = por %p136, %p137
      %p139 = scmp.ne.s32.totalorder %s130, %s131
      %p140 = scmp.eq.s32.totalorder %s22, 0
      %p141 = por %p139, %p140
      %p142 = scmp.ne.s32.totalorder %s130, %s131
      %p143 = scmp.eq.s32.totalorder %s23, 3
      %p144 = por %p142, %p143
      %p146 = scmp.ne.s32.totalorder %s131, %s145
      %p147 = scmp.eq.s32.totalorder %s23, 0
      %p148 = por %p146, %p147
      %s149 = ssub.s32 %s24, %s36
      %p150 = scmp.eq.s32.totalorder %s149, 0
      %s152 = sadd.s32 %s151, 1
      %s153 = scalar_select %p150, %s151, %s152
      %p156 = pneg %p150
      %p157 = scmp.eq.s32.totalorder %s17, 3
      %p158 = por %p156, %p157
      %p159 = scmp.ne.s32.totalorder %s151, %s154
      %p160 = scmp.eq.s32.totalorder %s17, 0
      %p161 = por %p159, %p160
      %p162 = scmp.ne.s32.totalorder %s151, %s154
      %p163 = scmp.eq.s32.totalorder %s22, 3
      %p164 = por %p162, %p163
      %p165 = scmp.ne.s32.totalorder %s154, %s155
      %p166 = scmp.eq.s32.totalorder %s22, 0
      %p167 = por %p165, %p166
      %p168 = scmp.ne.s32.totalorder %s154, %s155
      %p169 = scmp.eq.s32.totalorder %s23, 3
      %p170 = por %p168, %p169
      %p172 = scmp.ne.s32.totalorder %s155, %s171
      %p173 = scmp.eq.s32.totalorder %s23, 0
      %p174 = por %p172, %p173
      %p175 = scmp.le.s32.totalorder 1, %s17
      %p176 = scmp.lt.s32.totalorder %s17, 5
      %p177 = pnand %p175, %p176
      %p178 = pneg %p177
      // Predicated region
      $region9: #{tpu_custom_call.1} parent=5 // pred_check
        _
      $region10: #{tpu_custom_call.1} parent=5 // pred_check_branch
        %180 = sbr.rel (%p177) target = $region12
      $region11: #{tpu_custom_call.1} parent=5 // pred_region
        %s181 = ssub.s32 %s17, 1
        // Predicated region
        $region13: #{tpu_custom_call.1} parent=11 // pred_check
          %p182 = pneg %p50
        $region14: #{tpu_custom_call.1} parent=11 // pred_check_branch
          %184 = sbr.rel (%p182) target = $region16
        $region15: #{tpu_custom_call.1} parent=11 // pred_region
          _
        $region16: #{tpu_custom_call.1} parent=11 // pred_fallthru
          _
        // Predicated region
        $region17: #{tpu_custom_call.1} parent=11 // pred_check
          %p185 = pneg %p71
        $region18: #{tpu_custom_call.1} parent=11 // pred_check_branch
          %187 = sbr.rel (%p185) target = $region20
        $region19: #{tpu_custom_call.1} parent=11 // pred_region
          _
        $region20: #{tpu_custom_call.1} parent=11 // pred_fallthru
          _
        // Predicated region
        $region21: #{tpu_custom_call.1} parent=11 // pred_check
          %p188 = pneg %p120
        $region22: #{tpu_custom_call.1} parent=11 // pred_check_branch
          %190 = sbr.rel (%p188) target = $region24
        $region23: #{tpu_custom_call.1} parent=11 // pred_region
          %s192 = ssub.s32 8192, 8192
          %193 = vsyncadd [#allocation8], %s192
          %s194 = sshll.u32 [#allocation7], 4
          %s195 = int_to_ptr.vmem [resolvable:$true] %s194
          %200 = dma.hbm_to_vmem [thread:$0]  %s3, 8192, %s195, [#allocation8], 512, 512, 32
        $region24: #{tpu_custom_call.1} parent=11 // pred_fallthru
          _
        // Predicated region
        $region25: #{tpu_custom_call.1} parent=11 // pred_check
          %p201 = pneg %p141
        $region26: #{tpu_custom_call.1} parent=11 // pred_check_branch
          %203 = sbr.rel (%p201) target = $region28
        $region27: #{tpu_custom_call.1} parent=11 // pred_region
          _
        $region28: #{tpu_custom_call.1} parent=11 // pred_fallthru
          _
      $region12: #{tpu_custom_call.1} parent=5 // pred_fallthru
        _
      %p204 = scmp.lt.s32.totalorder %s17, 4
      // Predicated region
      $region29: #{tpu_custom_call.1} parent=5 // pred_check
        %p205 = pneg %p204
      $region30: #{tpu_custom_call.1} parent=5 // pred_check_branch
        %207 = sbr.rel (%p205) target = $region32
      $region31: #{tpu_custom_call.1} parent=5 // pred_region
        // Predicated region
        $region33: #{tpu_custom_call.1} parent=31 // pred_check
          %p208 = pneg %p93
        $region34: #{tpu_custom_call.1} parent=31 // pred_check_branch
          %210 = sbr.rel (%p208) target = $region36
        $region35: #{tpu_custom_call.1} parent=31 // pred_region
          %s211 = sand.u32 %s83, 1
          %s212 = scalar_lea.sflag [#allocation6], %s211
          %s213 = sand.u32 %s83, 1
          %s214 = smul.addr %s213, 8
          %s215 = scalar_lea.vmem [#allocation5], %s214
          %s217 = ssub.s32 128, 128
          %218 = vsyncadd %s212, %s217
          %s219 = smul.addr %s24, 2
          %s220 = sadd.s32 %s25, %s219
          %s221 = smul.addr %s220, 128
          %s222 = scalar_lea.hbm %s2, %s221
          %s224 = sshll.u32 %s215, 4
          %s225 = int_to_ptr.vmem [resolvable:$true] %s224
          %227 = dma.hbm_to_vmem [thread:$0]  %s222, 128, %s225, %s212
        $region36: #{tpu_custom_call.1} parent=31 // pred_fallthru
          _
      $region32: #{tpu_custom_call.1} parent=5 // pred_fallthru
        _
      %p228 = scmp.le.s32.totalorder 1, %s17
      %p229 = scmp.lt.s32.totalorder %s17, 5
      %p230 = pnand %p228, %p229
      %p231 = pneg %p230
      // Predicated region
      $region37: #{tpu_custom_call.1} parent=5 // pred_check
        _
      $region38: #{tpu_custom_call.1} parent=5 // pred_check_branch
        %233 = sbr.rel (%p230) target = $region40
      $region39: #{tpu_custom_call.1} parent=5 // pred_region
        %s234 = ssub.s32 %s17, 1
        %s235 = sand.u32 %s86, 1
        %s236 = scalar_lea.sflag [#allocation6], %s235
        %s237 = sand.u32 %s86, 1
        %s238 = smul.addr %s237, 8
        %s239 = scalar_lea.vmem [#allocation5], %s238
        // Predicated region
        $region41: #{tpu_custom_call.1} parent=39 // pred_check
          %p240 = pneg %p99
        $region42: #{tpu_custom_call.1} parent=39 // pred_check_branch
          %242 = sbr.rel (%p240) target = $region44
        $region43: #{tpu_custom_call.1} parent=39 // pred_region
          %243 = dma.done %s236, 128
        $region44: #{tpu_custom_call.1} parent=39 // pred_fallthru
          _
        // Predicated region
        $region45: #{tpu_custom_call.1} parent=39 // pred_check
          %p244 = pneg %p120
        $region46: #{tpu_custom_call.1} parent=39 // pred_check_branch
          %246 = sbr.rel (%p244) target = $region48
        $region47: #{tpu_custom_call.1} parent=39 // pred_region
          %247 = dma.done [#allocation8], 8192
        $region48: #{tpu_custom_call.1} parent=39 // pred_fallthru
          _
        %p248 = pneg %p50
        %p249 = pneg %p47
        %p250 = pneg %p71
        %p251 = pneg %p68
        %s252 = sand.u32 %s86, 1
        %s253 = scalar_lea.sflag [#allocation6], %s252
        %s254 = sand.u32 %s86, 1
        %s255 = smul.addr %s254, 8
        %s256 = scalar_lea.vmem [#allocation5], %s255
        %p257 = pneg %p99
        %p258 = pneg %p96
        %p259 = pneg %p120
        %p260 = pneg %p117
        %p261 = pneg %p141
        %p262 = pneg %p138
        %p263 = pneg %p167
        %p264 = pneg %p164
        %p265 = scmp.lt.s32.totalorder %s26, 1
        %s266 = scalar_select %p265, %s26, 1
        %s267 = smul.addr %s266, 8
        %s268 = scalar_lea.vmem %s5, %s267
        %p269 = scmp.lt.s32.totalorder %s26, 1
        %s270 = scalar_select %p269, %s26, 1
        %s271 = smul.addr %s270, 8
        %s272 = scalar_lea.vmem %s5, %s271
        %p273 = scmp.eq.s32.totalorder %s27, 0
        // Predicated region
        $region49: #{tpu_custom_call.1} parent=39 // pred_check
          %p274 = pneg %p273
        $region50: #{tpu_custom_call.1} parent=39 // pred_check_branch
          %276 = sbr.rel (%p274) target = $region52
        $region51: #{tpu_custom_call.1} parent=39 // pred_region
          %277 = vst [vmem:[#allocation2] sm:$0xff] 0.0
          %278 = vst [vmem:[#allocation2 + $0x8] sm:$0xff] 0.0
          %279 = vst [vmem:[#allocation2 + $0x10] sm:$0xff] 0.0
          %280 = vst [vmem:[#allocation2 + $0x18] sm:$0xff] 0.0
        $region52: #{tpu_custom_call.1} parent=39 // pred_fallthru
          _
        %s281 = sld [smem:[#allocation3]]
        %s282 = smul.u32 %s27, 128
        %v283 = vlaneseq
        %v284 = vand.u32 %v283, 127
        %v285 = vstv %s282
        %v286 = vadd.s32 %v285, %v284
        %s287 = ssub.s32 %s281, 1
        %v288 = vstv %s287
        %vm289 = vcmp.lt.s32.totalorder %v286, %v288
        %vm290 = vcmp.lt.s32.totalorder %v286, 256
        %vm291 = vmand %vm289, %vm290
        %v292 = vld [vmem:[%s239] sm:$0xff]
        %v293 = vsel %vm291, %v292, 128
        %v294 = vlaneseq
        %v295 = vshrl.u32 %v294, 7
        %v296 = vsub.s32 0, %v295
        %v297 = vrot.slane %v293, %v296
        %299 = vbcast.lane.b32.xlu0 %v297, 256
        %v300 = vpop.permute.xlu0 %299
        %s302 = sor.u32 256, 8
        %303 = vbcast.lane.b32.xlu0 %v297, %s302
        %v304 = vpop.permute.xlu0 %303
        %s306 = sor.u32 256, 16
        %307 = vbcast.lane.b32.xlu0 %v297, %s306
        %v308 = vpop.permute.xlu0 %307
        %s310 = sor.u32 256, 24
        %311 = vbcast.lane.b32.xlu0 %v297, %s310
        %v312 = vpop.permute.xlu0 %311
        %s314 = sor.u32 256, 32
        %315 = vbcast.lane.b32.xlu0 %v297, %s314
        %v316 = vpop.permute.xlu0 %315
        %s318 = sor.u32 256, 40
        %319 = vbcast.lane.b32.xlu0 %v297, %s318
        %v320 = vpop.permute.xlu0 %319
        %s322 = sor.u32 256, 48
        %323 = vbcast.lane.b32.xlu0 %v297, %s322
        %v324 = vpop.permute.xlu0 %323
        %s326 = sor.u32 256, 56
        %327 = vbcast.lane.b32.xlu0 %v297, %s326
        %v328 = vpop.permute.xlu0 %327
        %s330 = sor.u32 256, 64
        %331 = vbcast.lane.b32.xlu0 %v297, %s330
        %v332 = vpop.permute.xlu0 %331
        %s334 = sor.u32 256, 72
        %335 = vbcast.lane.b32.xlu0 %v297, %s334
        %v336 = vpop.permute.xlu0 %335
        %s338 = sor.u32 256, 80
        %339 = vbcast.lane.b32.xlu0 %v297, %s338
        %v340 = vpop.permute.xlu0 %339
        %s342 = sor.u32 256, 88
        %343 = vbcast.lane.b32.xlu0 %v297, %s342
        %v344 = vpop.permute.xlu0 %343
        %s346 = sor.u32 256, 96
        %347 = vbcast.lane.b32.xlu0 %v297, %s346
        %v348 = vpop.permute.xlu0 %347
        %s350 = sor.u32 256, 104
        %351 = vbcast.lane.b32.xlu0 %v297, %s350
        %v352 = vpop.permute.xlu0 %351
        %s354 = sor.u32 256, 112
        %355 = vbcast.lane.b32.xlu0 %v297, %s354
        %v356 = vpop.permute.xlu0 %355
        %s358 = sor.u32 256, 120
        %359 = vbcast.lane.b32.xlu0 %v297, %s358
        %v360 = vpop.permute.xlu0 %359
        %v361 = vlaneseq
        %v362 = vshrl.u32 %v361, 7
        %v363 = vsub.s32 1, %v362
        %v364 = vrot.slane %v293, %v363
        %366 = vbcast.lane.b32.xlu0 %v364, 256
        %v367 = vpop.permute.xlu0 %366
        %s369 = sor.u32 256, 8
        %370 = vbcast.lane.b32.xlu0 %v364, %s369
        %v371 = vpop.permute.xlu0 %370
        %s373 = sor.u32 256, 16
        %374 = vbcast.lane.b32.xlu0 %v364, %s373
        %v375 = vpop.permute.xlu0 %374
        %s377 = sor.u32 256, 24
        %378 = vbcast.lane.b32.xlu0 %v364, %s377
        %v379 = vpop.permute.xlu0 %378
        %s381 = sor.u32 256, 32
        %382 = vbcast.lane.b32.xlu0 %v364, %s381
        %v383 = vpop.permute.xlu0 %382
        %s385 = sor.u32 256, 40
        %386 = vbcast.lane.b32.xlu0 %v364, %s385
        %v387 = vpop.permute.xlu0 %386
        %s389 = sor.u32 256, 48
        %390 = vbcast.lane.b32.xlu0 %v364, %s389
        %v391 = vpop.permute.xlu0 %390
        %s393 = sor.u32 256, 56
        %394 = vbcast.lane.b32.xlu0 %v364, %s393
        %v395 = vpop.permute.xlu0 %394
        %s397 = sor.u32 256, 64
        %398 = vbcast.lane.b32.xlu0 %v364, %s397
        %v399 = vpop.permute.xlu0 %398
        %s401 = sor.u32 256, 72
        %402 = vbcast.lane.b32.xlu0 %v364, %s401
        %v403 = vpop.permute.xlu0 %402
        %s405 = sor.u32 256, 80
        %406 = vbcast.lane.b32.xlu0 %v364, %s405
        %v407 = vpop.permute.xlu0 %406
        %s409 = sor.u32 256, 88
        %410 = vbcast.lane.b32.xlu0 %v364, %s409
        %v411 = vpop.permute.xlu0 %410
        %s413 = sor.u32 256, 96
        %414 = vbcast.lane.b32.xlu0 %v364, %s413
        %v415 = vpop.permute.xlu0 %414
        %s417 = sor.u32 256, 104
        %418 = vbcast.lane.b32.xlu0 %v364, %s417
        %v419 = vpop.permute.xlu0 %418
        %s421 = sor.u32 256, 112
        %422 = vbcast.lane.b32.xlu0 %v364, %s421
        %v423 = vpop.permute.xlu0 %422
        %s425 = sor.u32 256, 120
        %426 = vbcast.lane.b32.xlu0 %v364, %s425
        %v427 = vpop.permute.xlu0 %426
        %v428 = vlaneseq
        %v429 = vshrl.u32 %v428, 7
        %v430 = vsub.s32 2, %v429
        %v431 = vrot.slane %v293, %v430
        %433 = vbcast.lane.b32.xlu0 %v431, 256
        %v434 = vpop.permute.xlu0 %433
        %s436 = sor.u32 256, 8
        %437 = vbcast.lane.b32.xlu0 %v431, %s436
        %v438 = vpop.permute.xlu0 %437
        %s440 = sor.u32 256, 16
        %441 = vbcast.lane.b32.xlu0 %v431, %s440
        %v442 = vpop.permute.xlu0 %441
        %s444 = sor.u32 256, 24
        %445 = vbcast.lane.b32.xlu0 %v431, %s444
        %v446 = vpop.permute.xlu0 %445
        %s448 = sor.u32 256, 32
        %449 = vbcast.lane.b32.xlu0 %v431, %s448
        %v450 = vpop.permute.xlu0 %449
        %s452 = sor.u32 256, 40
        %453 = vbcast.lane.b32.xlu0 %v431, %s452
        %v454 = vpop.permute.xlu0 %453
        %s456 = sor.u32 256, 48
        %457 = vbcast.lane.b32.xlu0 %v431, %s456
        %v458 = vpop.permute.xlu0 %457
        %s460 = sor.u32 256, 56
        %461 = vbcast.lane.b32.xlu0 %v431, %s460
        %v462 = vpop.permute.xlu0 %461
        %s464 = sor.u32 256, 64
        %465 = vbcast.lane.b32.xlu0 %v431, %s464
        %v466 = vpop.permute.xlu0 %465
        %s468 = sor.u32 256, 72
        %469 = vbcast.lane.b32.xlu0 %v431, %s468
        %v470 = vpop.permute.xlu0 %469
        %s472 = sor.u32 256, 80
        %473 = vbcast.lane.b32.xlu0 %v431, %s472
        %v474 = vpop.permute.xlu0 %473
        %s476 = sor.u32 256, 88
        %477 = vbcast.lane.b32.xlu0 %v431, %s476
        %v478 = vpop.permute.xlu0 %477
        %s480 = sor.u32 256, 96
        %481 = vbcast.lane.b32.xlu0 %v431, %s480
        %v482 = vpop.permute.xlu0 %481
        %s484 = sor.u32 256, 104
        %485 = vbcast.lane.b32.xlu0 %v431, %s484
        %v486 = vpop.permute.xlu0 %485
        %s488 = sor.u32 256, 112
        %489 = vbcast.lane.b32.xlu0 %v431, %s488
        %v490 = vpop.permute.xlu0 %489
        %s492 = sor.u32 256, 120
        %493 = vbcast.lane.b32.xlu0 %v431, %s492
        %v494 = vpop.permute.xlu0 %493
        %v495 = vlaneseq
        %v496 = vshrl.u32 %v495, 7
        %v497 = vsub.s32 3, %v496
        %v498 = vrot.slane %v293, %v497
        %500 = vbcast.lane.b32.xlu0 %v498, 256
        %v501 = vpop.permute.xlu0 %500
        %s503 = sor.u32 256, 8
        %504 = vbcast.lane.b32.xlu0 %v498, %s503
        %v505 = vpop.permute.xlu0 %504
        %s507 = sor.u32 256, 16
        %508 = vbcast.lane.b32.xlu0 %v498, %s507
        %v509 = vpop.permute.xlu0 %508
        %s511 = sor.u32 256, 24
        %512 = vbcast.lane.b32.xlu0 %v498, %s511
        %v513 = vpop.permute.xlu0 %512
        %s515 = sor.u32 256, 32
        %516 = vbcast.lane.b32.xlu0 %v498, %s515
        %v517 = vpop.permute.xlu0 %516
        %s519 = sor.u32 256, 40
        %520 = vbcast.lane.b32.xlu0 %v498, %s519
        %v521 = vpop.permute.xlu0 %520
        %s523 = sor.u32 256, 48
        %524 = vbcast.lane.b32.xlu0 %v498, %s523
        %v525 = vpop.permute.xlu0 %524
        %s527 = sor.u32 256, 56
        %528 = vbcast.lane.b32.xlu0 %v498, %s527
        %v529 = vpop.permute.xlu0 %528
        %s531 = sor.u32 256, 64
        %532 = vbcast.lane.b32.xlu0 %v498, %s531
        %v533 = vpop.permute.xlu0 %532
        %s535 = sor.u32 256, 72
        %536 = vbcast.lane.b32.xlu0 %v498, %s535
        %v537 = vpop.permute.xlu0 %536
        %s539 = sor.u32 256, 80
        %540 = vbcast.lane.b32.xlu0 %v498, %s539
        %v541 = vpop.permute.xlu0 %540
        %s543 = sor.u32 256, 88
        %544 = vbcast.lane.b32.xlu0 %v498, %s543
        %v545 = vpop.permute.xlu0 %544
        %s547 = sor.u32 256, 96
        %548 = vbcast.lane.b32.xlu0 %v498, %s547
        %v549 = vpop.permute.xlu0 %548
        %s551 = sor.u32 256, 104
        %552 = vbcast.lane.b32.xlu0 %v498, %s551
        %v553 = vpop.permute.xlu0 %552
        %s555 = sor.u32 256, 112
        %556 = vbcast.lane.b32.xlu0 %v498, %s555
        %v557 = vpop.permute.xlu0 %556
        %s559 = sor.u32 256, 120
        %560 = vbcast.lane.b32.xlu0 %v498, %s559
        %v561 = vpop.permute.xlu0 %560
        %v562 = vlaneseq
        %v563 = vshrl.u32 %v562, 7
        %v564 = vsub.s32 4, %v563
        %v565 = vrot.slane %v293, %v564
        %567 = vbcast.lane.b32.xlu0 %v565, 256
        %v568 = vpop.permute.xlu0 %567
        %s570 = sor.u32 256, 8
        %571 = vbcast.lane.b32.xlu0 %v565, %s570
        %v572 = vpop.permute.xlu0 %571
        %s574 = sor.u32 256, 16
        %575 = vbcast.lane.b32.xlu0 %v565, %s574
        %v576 = vpop.permute.xlu0 %575
        %s578 = sor.u32 256, 24
        %579 = vbcast.lane.b32.xlu0 %v565, %s578
        %v580 = vpop.permute.xlu0 %579
        %s582 = sor.u32 256, 32
        %583 = vbcast.lane.b32.xlu0 %v565, %s582
        %v584 = vpop.permute.xlu0 %583
        %s586 = sor.u32 256, 40
        %587 = vbcast.lane.b32.xlu0 %v565, %s586
        %v588 = vpop.permute.xlu0 %587
        %s590 = sor.u32 256, 48
        %591 = vbcast.lane.b32.xlu0 %v565, %s590
        %v592 = vpop.permute.xlu0 %591
        %s594 = sor.u32 256, 56
        %595 = vbcast.lane.b32.xlu0 %v565, %s594
        %v596 = vpop.permute.xlu0 %595
        %s598 = sor.u32 256, 64
        %599 = vbcast.lane.b32.xlu0 %v565, %s598
        %v600 = vpop.permute.xlu0 %599
        %s602 = sor.u32 256, 72
        %603 = vbcast.lane.b32.xlu0 %v565, %s602
        %v604 = vpop.permute.xlu0 %603
        %s606 = sor.u32 256, 80
        %607 = vbcast.lane.b32.xlu0 %v565, %s606
        %v608 = vpop.permute.xlu0 %607
        %s610 = sor.u32 256, 88
        %611 = vbcast.lane.b32.xlu0 %v565, %s610
        %v612 = vpop.permute.xlu0 %611
        %s614 = sor.u32 256, 96
        %615 = vbcast.lane.b32.xlu0 %v565, %s614
        %v616 = vpop.permute.xlu0 %615
        %s618 = sor.u32 256, 104
        %619 = vbcast.lane.b32.xlu0 %v565, %s618
        %v620 = vpop.permute.xlu0 %619
        %s622 = sor.u32 256, 112
        %623 = vbcast.lane.b32.xlu0 %v565, %s622
        %v624 = vpop.permute.xlu0 %623
        %s626 = sor.u32 256, 120
        %627 = vbcast.lane.b32.xlu0 %v565, %s626
        %v628 = vpop.permute.xlu0 %627
        %v629 = vlaneseq
        %v630 = vshrl.u32 %v629, 7
        %v631 = vsub.s32 5, %v630
        %v632 = vrot.slane %v293, %v631
        %634 = vbcast.lane.b32.xlu0 %v632, 256
        %v635 = vpop.permute.xlu0 %634
        %s637 = sor.u32 256, 8
        %638 = vbcast.lane.b32.xlu0 %v632, %s637
        %v639 = vpop.permute.xlu0 %638
        %s641 = sor.u32 256, 16
        %642 = vbcast.lane.b32.xlu0 %v632, %s641
        %v643 = vpop.permute.xlu0 %642
        %s645 = sor.u32 256, 24
        %646 = vbcast.lane.b32.xlu0 %v632, %s645
        %v647 = vpop.permute.xlu0 %646
        %s649 = sor.u32 256, 32
        %650 = vbcast.lane.b32.xlu0 %v632, %s649
        %v651 = vpop.permute.xlu0 %650
        %s653 = sor.u32 256, 40
        %654 = vbcast.lane.b32.xlu0 %v632, %s653
        %v655 = vpop.permute.xlu0 %654
        %s657 = sor.u32 256, 48
        %658 = vbcast.lane.b32.xlu0 %v632, %s657
        %v659 = vpop.permute.xlu0 %658
        %s661 = sor.u32 256, 56
        %662 = vbcast.lane.b32.xlu0 %v632, %s661
        %v663 = vpop.permute.xlu0 %662
        %s665 = sor.u32 256, 64
        %666 = vbcast.lane.b32.xlu0 %v632, %s665
        %v667 = vpop.permute.xlu0 %666
        %s669 = sor.u32 256, 72
        %670 = vbcast.lane.b32.xlu0 %v632, %s669
        %v671 = vpop.permute.xlu0 %670
        %s673 = sor.u32 256, 80
        %674 = vbcast.lane.b32.xlu0 %v632, %s673
        %v675 = vpop.permute.xlu0 %674
        %s677 = sor.u32 256, 88
        %678 = vbcast.lane.b32.xlu0 %v632, %s677
        %v679 = vpop.permute.xlu0 %678
        %s681 = sor.u32 256, 96
        %682 = vbcast.lane.b32.xlu0 %v632, %s681
        %v683 = vpop.permute.xlu0 %682
        %s685 = sor.u32 256, 104
        %686 = vbcast.lane.b32.xlu0 %v632, %s685
        %v687 = vpop.permute.xlu0 %686
        %s689 = sor.u32 256, 112
        %690 = vbcast.lane.b32.xlu0 %v632, %s689
        %v691 = vpop.permute.xlu0 %690
        %s693 = sor.u32 256, 120
        %694 = vbcast.lane.b32.xlu0 %v632, %s693
        %v695 = vpop.permute.xlu0 %694
        %v696 = vlaneseq
        %v697 = vshrl.u32 %v696, 7
        %v698 = vsub.s32 6, %v697
        %v699 = vrot.slane %v293, %v698
        %701 = vbcast.lane.b32.xlu0 %v699, 256
        %v702 = vpop.permute.xlu0 %701
        %s704 = sor.u32 256, 8
        %705 = vbcast.lane.b32.xlu0 %v699, %s704
        %v706 = vpop.permute.xlu0 %705
        %s708 = sor.u32 256, 16
        %709 = vbcast.lane.b32.xlu0 %v699, %s708
        %v710 = vpop.permute.xlu0 %709
        %s712 = sor.u32 256, 24
        %713 = vbcast.lane.b32.xlu0 %v699, %s712
        %v714 = vpop.permute.xlu0 %713
        %s716 = sor.u32 256, 32
        %717 = vbcast.lane.b32.xlu0 %v699, %s716
        %v718 = vpop.permute.xlu0 %717
        %s720 = sor.u32 256, 40
        %721 = vbcast.lane.b32.xlu0 %v699, %s720
        %v722 = vpop.permute.xlu0 %721
        %s724 = sor.u32 256, 48
        %725 = vbcast.lane.b32.xlu0 %v699, %s724
        %v726 = vpop.permute.xlu0 %725
        %s728 = sor.u32 256, 56
        %729 = vbcast.lane.b32.xlu0 %v699, %s728
        %v730 = vpop.permute.xlu0 %729
        %s732 = sor.u32 256, 64
        %733 = vbcast.lane.b32.xlu0 %v699, %s732
        %v734 = vpop.permute.xlu0 %733
        %s736 = sor.u32 256, 72
        %737 = vbcast.lane.b32.xlu0 %v699, %s736
        %v738 = vpop.permute.xlu0 %737
        %s740 = sor.u32 256, 80
        %741 = vbcast.lane.b32.xlu0 %v699, %s740
        %v742 = vpop.permute.xlu0 %741
        %s744 = sor.u32 256, 88
        %745 = vbcast.lane.b32.xlu0 %v699, %s744
        %v746 = vpop.permute.xlu0 %745
        %s748 = sor.u32 256, 96
        %749 = vbcast.lane.b32.xlu0 %v699, %s748
        %v750 = vpop.permute.xlu0 %749
        %s752 = sor.u32 256, 104
        %753 = vbcast.lane.b32.xlu0 %v699, %s752
        %v754 = vpop.permute.xlu0 %753
        %s756 = sor.u32 256, 112
        %757 = vbcast.lane.b32.xlu0 %v699, %s756
        %v758 = vpop.permute.xlu0 %757
        %s760 = sor.u32 256, 120
        %761 = vbcast.lane.b32.xlu0 %v699, %s760
        %v762 = vpop.permute.xlu0 %761
        %v763 = vlaneseq
        %v764 = vshrl.u32 %v763, 7
        %v765 = vsub.s32 7, %v764
        %v766 = vrot.slane %v293, %v765
        %768 = vbcast.lane.b32.xlu0 %v766, 256
        %v769 = vpop.permute.xlu0 %768
        %s771 = sor.u32 256, 8
        %772 = vbcast.lane.b32.xlu0 %v766, %s771
        %v773 = vpop.permute.xlu0 %772
        %s775 = sor.u32 256, 16
        %776 = vbcast.lane.b32.xlu0 %v766, %s775
        %v777 = vpop.permute.xlu0 %776
        %s779 = sor.u32 256, 24
        %780 = vbcast.lane.b32.xlu0 %v766, %s779
        %v781 = vpop.permute.xlu0 %780
        %s783 = sor.u32 256, 32
        %784 = vbcast.lane.b32.xlu0 %v766, %s783
        %v785 = vpop.permute.xlu0 %784
        %s787 = sor.u32 256, 40
        %788 = vbcast.lane.b32.xlu0 %v766, %s787
        %v789 = vpop.permute.xlu0 %788
        %s791 = sor.u32 256, 48
        %792 = vbcast.lane.b32.xlu0 %v766, %s791
        %v793 = vpop.permute.xlu0 %792
        %s795 = sor.u32 256, 56
        %796 = vbcast.lane.b32.xlu0 %v766, %s795
        %v797 = vpop.permute.xlu0 %796
        %s799 = sor.u32 256, 64
        %800 = vbcast.lane.b32.xlu0 %v766, %s799
        %v801 = vpop.permute.xlu0 %800
        %s803 = sor.u32 256, 72
        %804 = vbcast.lane.b32.xlu0 %v766, %s803
        %v805 = vpop.permute.xlu0 %804
        %s807 = sor.u32 256, 80
        %808 = vbcast.lane.b32.xlu0 %v766, %s807
        %v809 = vpop.permute.xlu0 %808
        %s811 = sor.u32 256, 88
        %812 = vbcast.lane.b32.xlu0 %v766, %s811
        %v813 = vpop.permute.xlu0 %812
        %s815 = sor.u32 256, 96
        %816 = vbcast.lane.b32.xlu0 %v766, %s815
        %v817 = vpop.permute.xlu0 %816
        %s819 = sor.u32 256, 104
        %820 = vbcast.lane.b32.xlu0 %v766, %s819
        %v821 = vpop.permute.xlu0 %820
        %s823 = sor.u32 256, 112
        %824 = vbcast.lane.b32.xlu0 %v766, %s823
        %v825 = vpop.permute.xlu0 %824
        %s827 = sor.u32 256, 120
        %828 = vbcast.lane.b32.xlu0 %v766, %s827
        %v829 = vpop.permute.xlu0 %828
        %vm830 = vcmp.eq.s32.totalorder %v300, %v284
        %vm831 = vcmp.eq.s32.totalorder %v304, %v284
        %vm832 = vcmp.eq.s32.totalorder %v308, %v284
        %vm833 = vcmp.eq.s32.totalorder %v312, %v284
        %vm834 = vcmp.eq.s32.totalorder %v316, %v284
        %vm835 = vcmp.eq.s32.totalorder %v320, %v284
        %vm836 = vcmp.eq.s32.totalorder %v324, %v284
        %vm837 = vcmp.eq.s32.totalorder %v328, %v284
        %vm838 = vcmp.eq.s32.totalorder %v332, %v284
        %vm839 = vcmp.eq.s32.totalorder %v336, %v284
        %vm840 = vcmp.eq.s32.totalorder %v340, %v284
        %vm841 = vcmp.eq.s32.totalorder %v344, %v284
        %vm842 = vcmp.eq.s32.totalorder %v348, %v284
        %vm843 = vcmp.eq.s32.totalorder %v352, %v284
        %vm844 = vcmp.eq.s32.totalorder %v356, %v284
        %vm845 = vcmp.eq.s32.totalorder %v360, %v284
        %vm846 = vcmp.eq.s32.totalorder %v367, %v284
        %vm847 = vcmp.eq.s32.totalorder %v371, %v284
        %vm848 = vcmp.eq.s32.totalorder %v375, %v284
        %vm849 = vcmp.eq.s32.totalorder %v379, %v284
        %vm850 = vcmp.eq.s32.totalorder %v383, %v284
        %vm851 = vcmp.eq.s32.totalorder %v387, %v284
        %vm852 = vcmp.eq.s32.totalorder %v391, %v284
        %vm853 = vcmp.eq.s32.totalorder %v395, %v284
        %vm854 = vcmp.eq.s32.totalorder %v399, %v284
        %vm855 = vcmp.eq.s32.totalorder %v403, %v284
        %vm856 = vcmp.eq.s32.totalorder %v407, %v284
        %vm857 = vcmp.eq.s32.totalorder %v411, %v284
        %vm858 = vcmp.eq.s32.totalorder %v415, %v284
        %vm859 = vcmp.eq.s32.totalorder %v419, %v284
        %vm860 = vcmp.eq.s32.totalorder %v423, %v284
        %vm861 = vcmp.eq.s32.totalorder %v427, %v284
        %vm862 = vcmp.eq.s32.totalorder %v434, %v284
        %vm863 = vcmp.eq.s32.totalorder %v438, %v284
        %vm864 = vcmp.eq.s32.totalorder %v442, %v284
        %vm865 = vcmp.eq.s32.totalorder %v446, %v284
        %vm866 = vcmp.eq.s32.totalorder %v450, %v284
        %vm867 = vcmp.eq.s32.totalorder %v454, %v284
        %vm868 = vcmp.eq.s32.totalorder %v458, %v284
        %vm869 = vcmp.eq.s32.totalorder %v462, %v284
        %vm870 = vcmp.eq.s32.totalorder %v466, %v284
        %vm871 = vcmp.eq.s32.totalorder %v470, %v284
        %vm872 = vcmp.eq.s32.totalorder %v474, %v284
        %vm873 = vcmp.eq.s32.totalorder %v478, %v284
        %vm874 = vcmp.eq.s32.totalorder %v482, %v284
        %vm875 = vcmp.eq.s32.totalorder %v486, %v284
        %vm876 = vcmp.eq.s32.totalorder %v490, %v284
        %vm877 = vcmp.eq.s32.totalorder %v494, %v284
        %vm878 = vcmp.eq.s32.totalorder %v501, %v284
        %vm879 = vcmp.eq.s32.totalorder %v505, %v284
        %vm880 = vcmp.eq.s32.totalorder %v509, %v284
        %vm881 = vcmp.eq.s32.totalorder %v513, %v284
        %vm882 = vcmp.eq.s32.totalorder %v517, %v284
        %vm883 = vcmp.eq.s32.totalorder %v521, %v284
        %vm884 = vcmp.eq.s32.totalorder %v525, %v284
        %vm885 = vcmp.eq.s32.totalorder %v529, %v284
        %vm886 = vcmp.eq.s32.totalorder %v533, %v284
        %vm887 = vcmp.eq.s32.totalorder %v537, %v284
        %vm888 = vcmp.eq.s32.totalorder %v541, %v284
        %vm889 = vcmp.eq.s32.totalorder %v545, %v284
        %vm890 = vcmp.eq.s32.totalorder %v549, %v284
        %vm891 = vcmp.eq.s32.totalorder %v553, %v284
        %vm892 = vcmp.eq.s32.totalorder %v557, %v284
        %vm893 = vcmp.eq.s32.totalorder %v561, %v284
        %vm894 = vcmp.eq.s32.totalorder %v568, %v284
        %vm895 = vcmp.eq.s32.totalorder %v572, %v284
        %vm896 = vcmp.eq.s32.totalorder %v576, %v284
        %vm897 = vcmp.eq.s32.totalorder %v580, %v284
        %vm898 = vcmp.eq.s32.totalorder %v584, %v284
        %vm899 = vcmp.eq.s32.totalorder %v588, %v284
        %vm900 = vcmp.eq.s32.totalorder %v592, %v284
        %vm901 = vcmp.eq.s32.totalorder %v596, %v284
        %vm902 = vcmp.eq.s32.totalorder %v600, %v284
        %vm903 = vcmp.eq.s32.totalorder %v604, %v284
        %vm904 = vcmp.eq.s32.totalorder %v608, %v284
        %vm905 = vcmp.eq.s32.totalorder %v612, %v284
        %vm906 = vcmp.eq.s32.totalorder %v616, %v284
        %vm907 = vcmp.eq.s32.totalorder %v620, %v284
        %vm908 = vcmp.eq.s32.totalorder %v624, %v284
        %vm909 = vcmp.eq.s32.totalorder %v628, %v284
        %vm910 = vcmp.eq.s32.totalorder %v635, %v284
        %vm911 = vcmp.eq.s32.totalorder %v639, %v284
        %vm912 = vcmp.eq.s32.totalorder %v643, %v284
        %vm913 = vcmp.eq.s32.totalorder %v647, %v284
        %vm914 = vcmp.eq.s32.totalorder %v651, %v284
        %vm915 = vcmp.eq.s32.totalorder %v655, %v284
        %vm916 = vcmp.eq.s32.totalorder %v659, %v284
        %vm917 = vcmp.eq.s32.totalorder %v663, %v284
        %vm918 = vcmp.eq.s32.totalorder %v667, %v284
        %vm919 = vcmp.eq.s32.totalorder %v671, %v284
        %vm920 = vcmp.eq.s32.totalorder %v675, %v284
        %vm921 = vcmp.eq.s32.totalorder %v679, %v284
        %vm922 = vcmp.eq.s32.totalorder %v683, %v284
        %vm923 = vcmp.eq.s32.totalorder %v687, %v284
        %vm924 = vcmp.eq.s32.totalorder %v691, %v284
        %vm925 = vcmp.eq.s32.totalorder %v695, %v284
        %vm926 = vcmp.eq.s32.totalorder %v702, %v284
        %vm927 = vcmp.eq.s32.totalorder %v706, %v284
        %vm928 = vcmp.eq.s32.totalorder %v710, %v284
        %vm929 = vcmp.eq.s32.totalorder %v714, %v284
        %vm930 = vcmp.eq.s32.totalorder %v718, %v284
        %vm931 = vcmp.eq.s32.totalorder %v722, %v284
        %vm932 = vcmp.eq.s32.totalorder %v726, %v284
        %vm933 = vcmp.eq.s32.totalorder %v730, %v284
        %vm934 = vcmp.eq.s32.totalorder %v734, %v284
        %vm935 = vcmp.eq.s32.totalorder %v738, %v284
        %vm936 = vcmp.eq.s32.totalorder %v742, %v284
        %vm937 = vcmp.eq.s32.totalorder %v746, %v284
        %vm938 = vcmp.eq.s32.totalorder %v750, %v284
        %vm939 = vcmp.eq.s32.totalorder %v754, %v284
        %vm940 = vcmp.eq.s32.totalorder %v758, %v284
        %vm941 = vcmp.eq.s32.totalorder %v762, %v284
        %vm942 = vcmp.eq.s32.totalorder %v769, %v284
        %vm943 = vcmp.eq.s32.totalorder %v773, %v284
        %vm944 = vcmp.eq.s32.totalorder %v777, %v284
        %vm945 = vcmp.eq.s32.totalorder %v781, %v284
        %vm946 = vcmp.eq.s32.totalorder %v785, %v284
        %vm947 = vcmp.eq.s32.totalorder %v789, %v284
        %vm948 = vcmp.eq.s32.totalorder %v793, %v284
        %vm949 = vcmp.eq.s32.totalorder %v797, %v284
        %vm950 = vcmp.eq.s32.totalorder %v801, %v284
        %vm951 = vcmp.eq.s32.totalorder %v805, %v284
        %vm952 = vcmp.eq.s32.totalorder %v809, %v284
        %vm953 = vcmp.eq.s32.totalorder %v813, %v284
        %vm954 = vcmp.eq.s32.totalorder %v817, %v284
        %vm955 = vcmp.eq.s32.totalorder %v821, %v284
        %vm956 = vcmp.eq.s32.totalorder %v825, %v284
        %vm957 = vcmp.eq.s32.totalorder %v829, %v284
        %v958 = vsel %vm830, 1, 0
        %v959 = vsel %vm831, 1, 0
        %v960 = vsel %vm832, 1, 0
        %v961 = vsel %vm833, 1, 0
        %v962 = vsel %vm834, 1, 0
        %v963 = vsel %vm835, 1, 0
        %v964 = vsel %vm836, 1, 0
        %v965 = vsel %vm837, 1, 0
        %v966 = vsel %vm838, 1, 0
        %v967 = vsel %vm839, 1, 0
        %v968 = vsel %vm840, 1, 0
        %v969 = vsel %vm841, 1, 0
        %v970 = vsel %vm842, 1, 0
        %v971 = vsel %vm843, 1, 0
        %v972 = vsel %vm844, 1, 0
        %v973 = vsel %vm845, 1, 0
        %v974 = vsel %vm846, 1, 0
        %v975 = vsel %vm847, 1, 0
        %v976 = vsel %vm848, 1, 0
        %v977 = vsel %vm849, 1, 0
        %v978 = vsel %vm850, 1, 0
        %v979 = vsel %vm851, 1, 0
        %v980 = vsel %vm852, 1, 0
        %v981 = vsel %vm853, 1, 0
        %v982 = vsel %vm854, 1, 0
        %v983 = vsel %vm855, 1, 0
        %v984 = vsel %vm856, 1, 0
        %v985 = vsel %vm857, 1, 0
        %v986 = vsel %vm858, 1, 0
        %v987 = vsel %vm859, 1, 0
        %v988 = vsel %vm860, 1, 0
        %v989 = vsel %vm861, 1, 0
        %v990 = vsel %vm862, 1, 0
        %v991 = vsel %vm863, 1, 0
        %v992 = vsel %vm864, 1, 0
        %v993 = vsel %vm865, 1, 0
        %v994 = vsel %vm866, 1, 0
        %v995 = vsel %vm867, 1, 0
        %v996 = vsel %vm868, 1, 0
        %v997 = vsel %vm869, 1, 0
        %v998 = vsel %vm870, 1, 0
        %v999 = vsel %vm871, 1, 0
        %v1000 = vsel %vm872, 1, 0
        %v1001 = vsel %vm873, 1, 0
        %v1002 = vsel %vm874, 1, 0
        %v1003 = vsel %vm875, 1, 0
        %v1004 = vsel %vm876, 1, 0
        %v1005 = vsel %vm877, 1, 0
        %v1006 = vsel %vm878, 1, 0
        %v1007 = vsel %vm879, 1, 0
        %v1008 = vsel %vm880, 1, 0
        %v1009 = vsel %vm881, 1, 0
        %v1010 = vsel %vm882, 1, 0
        %v1011 = vsel %vm883, 1, 0
        %v1012 = vsel %vm884, 1, 0
        %v1013 = vsel %vm885, 1, 0
        %v1014 = vsel %vm886, 1, 0
        %v1015 = vsel %vm887, 1, 0
        %v1016 = vsel %vm888, 1, 0
        %v1017 = vsel %vm889, 1, 0
        %v1018 = vsel %vm890, 1, 0
        %v1019 = vsel %vm891, 1, 0
        %v1020 = vsel %vm892, 1, 0
        %v1021 = vsel %vm893, 1, 0
        %v1022 = vsel %vm894, 1, 0
        %v1023 = vsel %vm895, 1, 0
        %v1024 = vsel %vm896, 1, 0
        %v1025 = vsel %vm897, 1, 0
        %v1026 = vsel %vm898, 1, 0
        %v1027 = vsel %vm899, 1, 0
        %v1028 = vsel %vm900, 1, 0
        %v1029 = vsel %vm901, 1, 0
        %v1030 = vsel %vm902, 1, 0
        %v1031 = vsel %vm903, 1, 0
        %v1032 = vsel %vm904, 1, 0
        %v1033 = vsel %vm905, 1, 0
        %v1034 = vsel %vm906, 1, 0
        %v1035 = vsel %vm907, 1, 0
        %v1036 = vsel %vm908, 1, 0
        %v1037 = vsel %vm909, 1, 0
        %v1038 = vsel %vm910, 1, 0
        %v1039 = vsel %vm911, 1, 0
        %v1040 = vsel %vm912, 1, 0
        %v1041 = vsel %vm913, 1, 0
        %v1042 = vsel %vm914, 1, 0
        %v1043 = vsel %vm915, 1, 0
        %v1044 = vsel %vm916, 1, 0
        %v1045 = vsel %vm917, 1, 0
        %v1046 = vsel %vm918, 1, 0
        %v1047 = vsel %vm919, 1, 0
        %v1048 = vsel %vm920, 1, 0
        %v1049 = vsel %vm921, 1, 0
        %v1050 = vsel %vm922, 1, 0
        %v1051 = vsel %vm923, 1, 0
        %v1052 = vsel %vm924, 1, 0
        %v1053 = vsel %vm925, 1, 0
        %v1054 = vsel %vm926, 1, 0
        %v1055 = vsel %vm927, 1, 0
        %v1056 = vsel %vm928, 1, 0
        %v1057 = vsel %vm929, 1, 0
        %v1058 = vsel %vm930, 1, 0
        %v1059 = vsel %vm931, 1, 0
        %v1060 = vsel %vm932, 1, 0
        %v1061 = vsel %vm933, 1, 0
        %v1062 = vsel %vm934, 1, 0
        %v1063 = vsel %vm935, 1, 0
        %v1064 = vsel %vm936, 1, 0
        %v1065 = vsel %vm937, 1, 0
        %v1066 = vsel %vm938, 1, 0
        %v1067 = vsel %vm939, 1, 0
        %v1068 = vsel %vm940, 1, 0
        %v1069 = vsel %vm941, 1, 0
        %v1070 = vsel %vm942, 1, 0
        %v1071 = vsel %vm943, 1, 0
        %v1072 = vsel %vm944, 1, 0
        %v1073 = vsel %vm945, 1, 0
        %v1074 = vsel %vm946, 1, 0
        %v1075 = vsel %vm947, 1, 0
        %v1076 = vsel %vm948, 1, 0
        %v1077 = vsel %vm949, 1, 0
        %v1078 = vsel %vm950, 1, 0
        %v1079 = vsel %vm951, 1, 0
        %v1080 = vsel %vm952, 1, 0
        %v1081 = vsel %vm953, 1, 0
        %v1082 = vsel %vm954, 1, 0
        %v1083 = vsel %vm955, 1, 0
        %v1084 = vsel %vm956, 1, 0
        %v1085 = vsel %vm957, 1, 0
        %v1086 = vcvt.s32.f32 %v958
        %v1087 = vcvt.s32.f32 %v959
        %v1088 = vcvt.s32.f32 %v960
        %v1089 = vcvt.s32.f32 %v961
        %v1090 = vcvt.s32.f32 %v962
        %v1091 = vcvt.s32.f32 %v963
        %v1092 = vcvt.s32.f32 %v964
        %v1093 = vcvt.s32.f32 %v965
        %v1094 = vcvt.s32.f32 %v966
        %v1095 = vcvt.s32.f32 %v967
        %v1096 = vcvt.s32.f32 %v968
        %v1097 = vcvt.s32.f32 %v969
        %v1098 = vcvt.s32.f32 %v970
        %v1099 = vcvt.s32.f32 %v971
        %v1100 = vcvt.s32.f32 %v972
        %v1101 = vcvt.s32.f32 %v973
        %v1102 = vcvt.s32.f32 %v974
        %v1103 = vcvt.s32.f32 %v975
        %v1104 = vcvt.s32.f32 %v976
        %v1105 = vcvt.s32.f32 %v977
        %v1106 = vcvt.s32.f32 %v978
        %v1107 = vcvt.s32.f32 %v979
        %v1108 = vcvt.s32.f32 %v980
        %v1109 = vcvt.s32.f32 %v981
        %v1110 = vcvt.s32.f32 %v982
        %v1111 = vcvt.s32.f32 %v983
        %v1112 = vcvt.s32.f32 %v984
        %v1113 = vcvt.s32.f32 %v985
        %v1114 = vcvt.s32.f32 %v986
        %v1115 = vcvt.s32.f32 %v987
        %v1116 = vcvt.s32.f32 %v988
        %v1117 = vcvt.s32.f32 %v989
        %v1118 = vcvt.s32.f32 %v990
        %v1119 = vcvt.s32.f32 %v991
        %v1120 = vcvt.s32.f32 %v992
        %v1121 = vcvt.s32.f32 %v993
        %v1122 = vcvt.s32.f32 %v994
        %v1123 = vcvt.s32.f32 %v995
        %v1124 = vcvt.s32.f32 %v996
        %v1125 = vcvt.s32.f32 %v997
        %v1126 = vcvt.s32.f32 %v998
        %v1127 = vcvt.s32.f32 %v999
        %v1128 = vcvt.s32.f32 %v1000
        %v1129 = vcvt.s32.f32 %v1001
        %v1130 = vcvt.s32.f32 %v1002
        %v1131 = vcvt.s32.f32 %v1003
        %v1132 = vcvt.s32.f32 %v1004
        %v1133 = vcvt.s32.f32 %v1005
        %v1134 = vcvt.s32.f32 %v1006
        %v1135 = vcvt.s32.f32 %v1007
        %v1136 = vcvt.s32.f32 %v1008
        %v1137 = vcvt.s32.f32 %v1009
        %v1138 = vcvt.s32.f32 %v1010
        %v1139 = vcvt.s32.f32 %v1011
        %v1140 = vcvt.s32.f32 %v1012
        %v1141 = vcvt.s32.f32 %v1013
        %v1142 = vcvt.s32.f32 %v1014
        %v1143 = vcvt.s32.f32 %v1015
        %v1144 = vcvt.s32.f32 %v1016
        %v1145 = vcvt.s32.f32 %v1017
        %v1146 = vcvt.s32.f32 %v1018
        %v1147 = vcvt.s32.f32 %v1019
        %v1148 = vcvt.s32.f32 %v1020
        %v1149 = vcvt.s32.f32 %v1021
        %v1150 = vcvt.s32.f32 %v1022
        %v1151 = vcvt.s32.f32 %v1023
        %v1152 = vcvt.s32.f32 %v1024
        %v1153 = vcvt.s32.f32 %v1025
        %v1154 = vcvt.s32.f32 %v1026
        %v1155 = vcvt.s32.f32 %v1027
        %v1156 = vcvt.s32.f32 %v1028
        %v1157 = vcvt.s32.f32 %v1029
        %v1158 = vcvt.s32.f32 %v1030
        %v1159 = vcvt.s32.f32 %v1031
        %v1160 = vcvt.s32.f32 %v1032
        %v1161 = vcvt.s32.f32 %v1033
        %v1162 = vcvt.s32.f32 %v1034
        %v1163 = vcvt.s32.f32 %v1035
        %v1164 = vcvt.s32.f32 %v1036
        %v1165 = vcvt.s32.f32 %v1037
        %v1166 = vcvt.s32.f32 %v1038
        %v1167 = vcvt.s32.f32 %v1039
        %v1168 = vcvt.s32.f32 %v1040
        %v1169 = vcvt.s32.f32 %v1041
        %v1170 = vcvt.s32.f32 %v1042
        %v1171 = vcvt.s32.f32 %v1043
        %v1172 = vcvt.s32.f32 %v1044
        %v1173 = vcvt.s32.f32 %v1045
        %v1174 = vcvt.s32.f32 %v1046
        %v1175 = vcvt.s32.f32 %v1047
        %v1176 = vcvt.s32.f32 %v1048
        %v1177 = vcvt.s32.f32 %v1049
        %v1178 = vcvt.s32.f32 %v1050
        %v1179 = vcvt.s32.f32 %v1051
        %v1180 = vcvt.s32.f32 %v1052
        %v1181 = vcvt.s32.f32 %v1053
        %v1182 = vcvt.s32.f32 %v1054
        %v1183 = vcvt.s32.f32 %v1055
        %v1184 = vcvt.s32.f32 %v1056
        %v1185 = vcvt.s32.f32 %v1057
        %v1186 = vcvt.s32.f32 %v1058
        %v1187 = vcvt.s32.f32 %v1059
        %v1188 = vcvt.s32.f32 %v1060
        %v1189 = vcvt.s32.f32 %v1061
        %v1190 = vcvt.s32.f32 %v1062
        %v1191 = vcvt.s32.f32 %v1063
        %v1192 = vcvt.s32.f32 %v1064
        %v1193 = vcvt.s32.f32 %v1065
        %v1194 = vcvt.s32.f32 %v1066
        %v1195 = vcvt.s32.f32 %v1067
        %v1196 = vcvt.s32.f32 %v1068
        %v1197 = vcvt.s32.f32 %v1069
        %v1198 = vcvt.s32.f32 %v1070
        %v1199 = vcvt.s32.f32 %v1071
        %v1200 = vcvt.s32.f32 %v1072
        %v1201 = vcvt.s32.f32 %v1073
        %v1202 = vcvt.s32.f32 %v1074
        %v1203 = vcvt.s32.f32 %v1075
        %v1204 = vcvt.s32.f32 %v1076
        %v1205 = vcvt.s32.f32 %v1077
        %v1206 = vcvt.s32.f32 %v1078
        %v1207 = vcvt.s32.f32 %v1079
        %v1208 = vcvt.s32.f32 %v1080
        %v1209 = vcvt.s32.f32 %v1081
        %v1210 = vcvt.s32.f32 %v1082
        %v1211 = vcvt.s32.f32 %v1083
        %v1212 = vcvt.s32.f32 %v1084
        %v1213 = vcvt.s32.f32 %v1085
        %v1214 = vadd.f32 %v1086, %v1087
        %v1215 = vadd.f32 %v1214, %v1088
        %v1216 = vadd.f32 %v1215, %v1089
        %v1217 = vadd.f32 %v1216, %v1090
        %v1218 = vadd.f32 %v1217, %v1091
        %v1219 = vadd.f32 %v1218, %v1092
        %v1220 = vadd.f32 %v1219, %v1093
        %v1221 = vadd.f32 %v1220, %v1094
        %v1222 = vadd.f32 %v1221, %v1095
        %v1223 = vadd.f32 %v1222, %v1096
        %v1224 = vadd.f32 %v1223, %v1097
        %v1225 = vadd.f32 %v1224, %v1098
        %v1226 = vadd.f32 %v1225, %v1099
        %v1227 = vadd.f32 %v1226, %v1100
        %v1228 = vadd.f32 %v1227, %v1101
        %v1229 = vrot.slane %v1228, 4
        %v1230 = vadd.f32 %v1228, %v1229
        %v1231 = vrot.slane %v1230, 2
        %v1232 = vadd.f32 %v1230, %v1231
        %v1233 = vrot.slane %v1232, 1
        %v1234 = vadd.f32 %v1232, %v1233
        %v1235 = vadd.f32 %v1102, %v1103
        %v1236 = vadd.f32 %v1235, %v1104
        %v1237 = vadd.f32 %v1236, %v1105
        %v1238 = vadd.f32 %v1237, %v1106
        %v1239 = vadd.f32 %v1238, %v1107
        %v1240 = vadd.f32 %v1239, %v1108
        %v1241 = vadd.f32 %v1240, %v1109
        %v1242 = vadd.f32 %v1241, %v1110
        %v1243 = vadd.f32 %v1242, %v1111
        %v1244 = vadd.f32 %v1243, %v1112
        %v1245 = vadd.f32 %v1244, %v1113
        %v1246 = vadd.f32 %v1245, %v1114
        %v1247 = vadd.f32 %v1246, %v1115
        %v1248 = vadd.f32 %v1247, %v1116
        %v1249 = vadd.f32 %v1248, %v1117
        %v1250 = vrot.slane %v1249, 4
        %v1251 = vadd.f32 %v1249, %v1250
        %v1252 = vrot.slane %v1251, 2
        %v1253 = vadd.f32 %v1251, %v1252
        %v1254 = vrot.slane %v1253, 1
        %v1255 = vadd.f32 %v1253, %v1254
        %v1256 = vadd.f32 %v1118, %v1119
        %v1257 = vadd.f32 %v1256, %v1120
        %v1258 = vadd.f32 %v1257, %v1121
        %v1259 = vadd.f32 %v1258, %v1122
        %v1260 = vadd.f32 %v1259, %v1123
        %v1261 = vadd.f32 %v1260, %v1124
        %v1262 = vadd.f32 %v1261, %v1125
        %v1263 = vadd.f32 %v1262, %v1126
        %v1264 = vadd.f32 %v1263, %v1127
        %v1265 = vadd.f32 %v1264, %v1128
        %v1266 = vadd.f32 %v1265, %v1129
        %v1267 = vadd.f32 %v1266, %v1130
        %v1268 = vadd.f32 %v1267, %v1131
        %v1269 = vadd.f32 %v1268, %v1132
        %v1270 = vadd.f32 %v1269, %v1133
        %v1271 = vrot.slane %v1270, 4
        %v1272 = vadd.f32 %v1270, %v1271
        %v1273 = vrot.slane %v1272, 2
        %v1274 = vadd.f32 %v1272, %v1273
        %v1275 = vrot.slane %v1274, 1
        %v1276 = vadd.f32 %v1274, %v1275
        %v1277 = vadd.f32 %v1134, %v1135
        %v1278 = vadd.f32 %v1277, %v1136
        %v1279 = vadd.f32 %v1278, %v1137
        %v1280 = vadd.f32 %v1279, %v1138
        %v1281 = vadd.f32 %v1280, %v1139
        %v1282 = vadd.f32 %v1281, %v1140
        %v1283 = vadd.f32 %v1282, %v1141
        %v1284 = vadd.f32 %v1283, %v1142
        %v1285 = vadd.f32 %v1284, %v1143
        %v1286 = vadd.f32 %v1285, %v1144
        %v1287 = vadd.f32 %v1286, %v1145
        %v1288 = vadd.f32 %v1287, %v1146
        %v1289 = vadd.f32 %v1288, %v1147
        %v1290 = vadd.f32 %v1289, %v1148
        %v1291 = vadd.f32 %v1290, %v1149
        %v1292 = vrot.slane %v1291, 4
        %v1293 = vadd.f32 %v1291, %v1292
        %v1294 = vrot.slane %v1293, 2
        %v1295 = vadd.f32 %v1293, %v1294
        %v1296 = vrot.slane %v1295, 1
        %v1297 = vadd.f32 %v1295, %v1296
        %v1298 = vadd.f32 %v1150, %v1151
        %v1299 = vadd.f32 %v1298, %v1152
        %v1300 = vadd.f32 %v1299, %v1153
        %v1301 = vadd.f32 %v1300, %v1154
        %v1302 = vadd.f32 %v1301, %v1155
        %v1303 = vadd.f32 %v1302, %v1156
        %v1304 = vadd.f32 %v1303, %v1157
        %v1305 = vadd.f32 %v1304, %v1158
        %v1306 = vadd.f32 %v1305, %v1159
        %v1307 = vadd.f32 %v1306, %v1160
        %v1308 = vadd.f32 %v1307, %v1161
        %v1309 = vadd.f32 %v1308, %v1162
        %v1310 = vadd.f32 %v1309, %v1163
        %v1311 = vadd.f32 %v1310, %v1164
        %v1312 = vadd.f32 %v1311, %v1165
        %v1313 = vrot.slane %v1312, 4
        %v1314 = vadd.f32 %v1312, %v1313
        %v1315 = vrot.slane %v1314, 2
        %v1316 = vadd.f32 %v1314, %v1315
        %v1317 = vrot.slane %v1316, 1
        %v1318 = vadd.f32 %v1316, %v1317
        %v1319 = vadd.f32 %v1166, %v1167
        %v1320 = vadd.f32 %v1319, %v1168
        %v1321 = vadd.f32 %v1320, %v1169
        %v1322 = vadd.f32 %v1321, %v1170
        %v1323 = vadd.f32 %v1322, %v1171
        %v1324 = vadd.f32 %v1323, %v1172
        %v1325 = vadd.f32 %v1324, %v1173
        %v1326 = vadd.f32 %v1325, %v1174
        %v1327 = vadd.f32 %v1326, %v1175
        %v1328 = vadd.f32 %v1327, %v1176
        %v1329 = vadd.f32 %v1328, %v1177
        %v1330 = vadd.f32 %v1329, %v1178
        %v1331 = vadd.f32 %v1330, %v1179
        %v1332 = vadd.f32 %v1331, %v1180
        %v1333 = vadd.f32 %v1332, %v1181
        %v1334 = vrot.slane %v1333, 4
        %v1335 = vadd.f32 %v1333, %v1334
        %v1336 = vrot.slane %v1335, 2
        %v1337 = vadd.f32 %v1335, %v1336
        %v1338 = vrot.slane %v1337, 1
        %v1339 = vadd.f32 %v1337, %v1338
        %v1340 = vadd.f32 %v1182, %v1183
        %v1341 = vadd.f32 %v1340, %v1184
        %v1342 = vadd.f32 %v1341, %v1185
        %v1343 = vadd.f32 %v1342, %v1186
        %v1344 = vadd.f32 %v1343, %v1187
        %v1345 = vadd.f32 %v1344, %v1188
        %v1346 = vadd.f32 %v1345, %v1189
        %v1347 = vadd.f32 %v1346, %v1190
        %v1348 = vadd.f32 %v1347, %v1191
        %v1349 = vadd.f32 %v1348, %v1192
        %v1350 = vadd.f32 %v1349, %v1193
        %v1351 = vadd.f32 %v1350, %v1194
        %v1352 = vadd.f32 %v1351, %v1195
        %v1353 = vadd.f32 %v1352, %v1196
        %v1354 = vadd.f32 %v1353, %v1197
        %v1355 = vrot.slane %v1354, 4
        %v1356 = vadd.f32 %v1354, %v1355
        %v1357 = vrot.slane %v1356, 2
        %v1358 = vadd.f32 %v1356, %v1357
        %v1359 = vrot.slane %v1358, 1
        %v1360 = vadd.f32 %v1358, %v1359
        %v1361 = vadd.f32 %v1198, %v1199
        %v1362 = vadd.f32 %v1361, %v1200
        %v1363 = vadd.f32 %v1362, %v1201
        %v1364 = vadd.f32 %v1363, %v1202
        %v1365 = vadd.f32 %v1364, %v1203
        %v1366 = vadd.f32 %v1365, %v1204
        %v1367 = vadd.f32 %v1366, %v1205
        %v1368 = vadd.f32 %v1367, %v1206
        %v1369 = vadd.f32 %v1368, %v1207
        %v1370 = vadd.f32 %v1369, %v1208
        %v1371 = vadd.f32 %v1370, %v1209
        %v1372 = vadd.f32 %v1371, %v1210
        %v1373 = vadd.f32 %v1372, %v1211
        %v1374 = vadd.f32 %v1373, %v1212
        %v1375 = vadd.f32 %v1374, %v1213
        %v1376 = vrot.slane %v1375, 4
        %v1377 = vadd.f32 %v1375, %v1376
        %v1378 = vrot.slane %v1377, 2
        %v1379 = vadd.f32 %v1377, %v1378
        %v1380 = vrot.slane %v1379, 1
        %v1381 = vadd.f32 %v1379, %v1380
        %v1382 = vld [vmem:[#allocation2] sm:$0xff]
        %v1383 = vld [vmem:[#allocation2 + $0x8] sm:$0xff]
        %v1384 = vld [vmem:[#allocation2 + $0x10] sm:$0xff]
        %v1385 = vld [vmem:[#allocation2 + $0x18] sm:$0xff]
        %v1386 = vld [vmem:[#allocation7] sm:$0xff]
        %v1387 = vld [vmem:[#allocation7 + $0x8] sm:$0xff]
        %v1388 = vld [vmem:[#allocation7 + $0x10] sm:$0xff]
        %v1389 = vld [vmem:[#allocation7 + $0x18] sm:$0xff]
        %v1390 = vld [vmem:[#allocation7 + $0x20] sm:$0xff]
        %v1391 = vld [vmem:[#allocation7 + $0x28] sm:$0xff]
        %v1392 = vld [vmem:[#allocation7 + $0x30] sm:$0xff]
        %v1393 = vld [vmem:[#allocation7 + $0x38] sm:$0xff]
        %v1394 = vld [vmem:[#allocation7 + $0x40] sm:$0xff]
        %v1395 = vld [vmem:[#allocation7 + $0x48] sm:$0xff]
        %v1396 = vld [vmem:[#allocation7 + $0x50] sm:$0xff]
        %v1397 = vld [vmem:[#allocation7 + $0x58] sm:$0xff]
        %v1398 = vld [vmem:[#allocation7 + $0x60] sm:$0xff]
        %v1399 = vld [vmem:[#allocation7 + $0x68] sm:$0xff]
        %v1400 = vld [vmem:[#allocation7 + $0x70] sm:$0xff]
        %v1401 = vld [vmem:[#allocation7 + $0x78] sm:$0xff]
        %v1402 = vld [vmem:[#allocation7 + $0x80] sm:$0xff]
        %v1403 = vld [vmem:[#allocation7 + $0x88] sm:$0xff]
        %v1404 = vld [vmem:[#allocation7 + $0x90] sm:$0xff]
        %v1405 = vld [vmem:[#allocation7 + $0x98] sm:$0xff]
        %v1406 = vld [vmem:[#allocation7 + $0xa0] sm:$0xff]
        %v1407 = vld [vmem:[#allocation7 + $0xa8] sm:$0xff]
        %v1408 = vld [vmem:[#allocation7 + $0xb0] sm:$0xff]
        %v1409 = vld [vmem:[#allocation7 + $0xb8] sm:$0xff]
        %v1410 = vld [vmem:[#allocation7 + $0xc0] sm:$0xff]
        %v1411 = vld [vmem:[#allocation7 + $0xc8] sm:$0xff]
        %v1412 = vld [vmem:[#allocation7 + $0xd0] sm:$0xff]
        %v1413 = vld [vmem:[#allocation7 + $0xd8] sm:$0xff]
        %v1414 = vld [vmem:[#allocation7 + $0xe0] sm:$0xff]
        %v1415 = vld [vmem:[#allocation7 + $0xe8] sm:$0xff]
        %v1416 = vld [vmem:[#allocation7 + $0xf0] sm:$0xff]
        %v1417 = vld [vmem:[#allocation7 + $0xf8] sm:$0xff]
        %v1418 = vld [vmem:[#allocation7 + $0x100] sm:$0xff]
        %v1419 = vld [vmem:[#allocation7 + $0x108] sm:$0xff]
        %v1420 = vld [vmem:[#allocation7 + $0x110] sm:$0xff]
        %v1421 = vld [vmem:[#allocation7 + $0x118] sm:$0xff]
        %v1422 = vld [vmem:[#allocation7 + $0x120] sm:$0xff]
        %v1423 = vld [vmem:[#allocation7 + $0x128] sm:$0xff]
        %v1424 = vld [vmem:[#allocation7 + $0x130] sm:$0xff]
        %v1425 = vld [vmem:[#allocation7 + $0x138] sm:$0xff]
        %v1426 = vld [vmem:[#allocation7 + $0x140] sm:$0xff]
        %v1427 = vld [vmem:[#allocation7 + $0x148] sm:$0xff]
        %v1428 = vld [vmem:[#allocation7 + $0x150] sm:$0xff]
        %v1429 = vld [vmem:[#allocation7 + $0x158] sm:$0xff]
        %v1430 = vld [vmem:[#allocation7 + $0x160] sm:$0xff]
        %v1431 = vld [vmem:[#allocation7 + $0x168] sm:$0xff]
        %v1432 = vld [vmem:[#allocation7 + $0x170] sm:$0xff]
        %v1433 = vld [vmem:[#allocation7 + $0x178] sm:$0xff]
        %v1434 = vld [vmem:[#allocation7 + $0x180] sm:$0xff]
        %v1435 = vld [vmem:[#allocation7 + $0x188] sm:$0xff]
        %v1436 = vld [vmem:[#allocation7 + $0x190] sm:$0xff]
        %v1437 = vld [vmem:[#allocation7 + $0x198] sm:$0xff]
        %v1438 = vld [vmem:[#allocation7 + $0x1a0] sm:$0xff]
        %v1439 = vld [vmem:[#allocation7 + $0x1a8] sm:$0xff]
        %v1440 = vld [vmem:[#allocation7 + $0x1b0] sm:$0xff]
        %v1441 = vld [vmem:[#allocation7 + $0x1b8] sm:$0xff]
        %v1442 = vld [vmem:[#allocation7 + $0x1c0] sm:$0xff]
        %v1443 = vld [vmem:[#allocation7 + $0x1c8] sm:$0xff]
        %v1444 = vld [vmem:[#allocation7 + $0x1d0] sm:$0xff]
        %v1445 = vld [vmem:[#allocation7 + $0x1d8] sm:$0xff]
        %v1446 = vld [vmem:[#allocation7 + $0x1e0] sm:$0xff]
        %v1447 = vld [vmem:[#allocation7 + $0x1e8] sm:$0xff]
        %v1448 = vld [vmem:[#allocation7 + $0x1f0] sm:$0xff]
        %v1449 = vld [vmem:[#allocation7 + $0x1f8] sm:$0xff]
        %vm1458 = vcmask 1041409
        %v1459 = vsel %vm1458, %v1255, %v1234
        %vm1460 = vcmask 1042434
        %v1461 = vsel %vm1460, %v1276, %v1459
        %vm1462 = vcmask 1043459
        %v1463 = vsel %vm1462, %v1297, %v1461
        %vm1464 = vcmask 1044484
        %v1465 = vsel %vm1464, %v1318, %v1463
        %vm1466 = vcmask 1045509
        %v1467 = vsel %vm1466, %v1339, %v1465
        %vm1468 = vcmask 1046534
        %v1469 = vsel %vm1468, %v1360, %v1467
        %vm1470 = vcmask 1047559
        %v1471 = vsel %vm1470, %v1381, %v1469
        %v1473 = vand.u32 %v1387, 4294901760
        %1474 = vmatprep.subr.mxu0 %v1473
        %v1475 = vand.u32 %v1386, 4294901760
        %1476 = vmatpush1.msra.mxu0 %v1475
        %v1477 = vand.u32 %v1391, 4294901760
        %1478 = vmatprep.subr.mxu0 %v1477
        %v1479 = vand.u32 %v1390, 4294901760
        %1480 = vmatpush1.msra.mxu0 %v1479
        %v1481 = vand.u32 %v1395, 4294901760
        %1482 = vmatprep.subr.mxu0 %v1481
        %v1483 = vand.u32 %v1394, 4294901760
        %1484 = vmatpush1.msra.mxu0 %v1483
        %v1485 = vand.u32 %v1399, 4294901760
        %1486 = vmatprep.subr.mxu0 %v1485
        %v1487 = vand.u32 %v1398, 4294901760
        %1488 = vmatpush1.msra.mxu0 %v1487
        %v1489 = vand.u32 %v1403, 4294901760
        %1490 = vmatprep.subr.mxu0 %v1489
        %v1491 = vand.u32 %v1402, 4294901760
        %1492 = vmatpush1.msra.mxu0 %v1491
        %v1493 = vand.u32 %v1407, 4294901760
        %1494 = vmatprep.subr.mxu0 %v1493
        %v1495 = vand.u32 %v1406, 4294901760
        %1496 = vmatpush1.msra.mxu0 %v1495
        %v1497 = vand.u32 %v1411, 4294901760
        %1498 = vmatprep.subr.mxu0 %v1497
        %v1499 = vand.u32 %v1410, 4294901760
        %1500 = vmatpush1.msra.mxu0 %v1499
        %v1501 = vand.u32 %v1415, 4294901760
        %1502 = vmatprep.subr.mxu0 %v1501
        %v1503 = vand.u32 %v1414, 4294901760
        %1504 = vmatpush1.msra.mxu0 %v1503
        %v1505 = vand.u32 %v1419, 4294901760
        %1506 = vmatprep.subr.mxu0 %v1505
        %v1507 = vand.u32 %v1418, 4294901760
        %1508 = vmatpush1.msra.mxu0 %v1507
        %v1509 = vand.u32 %v1423, 4294901760
        %1510 = vmatprep.subr.mxu0 %v1509
        %v1511 = vand.u32 %v1422, 4294901760
        %1512 = vmatpush1.msra.mxu0 %v1511
        %v1513 = vand.u32 %v1427, 4294901760
        %1514 = vmatprep.subr.mxu0 %v1513
        %v1515 = vand.u32 %v1426, 4294901760
        %1516 = vmatpush1.msra.mxu0 %v1515
        %v1517 = vand.u32 %v1431, 4294901760
        %1518 = vmatprep.subr.mxu0 %v1517
        %v1519 = vand.u32 %v1430, 4294901760
        %1520 = vmatpush1.msra.mxu0 %v1519
        %v1521 = vand.u32 %v1435, 4294901760
        %1522 = vmatprep.subr.mxu0 %v1521
        %v1523 = vand.u32 %v1434, 4294901760
        %1524 = vmatpush1.msra.mxu0 %v1523
        %v1525 = vand.u32 %v1439, 4294901760
        %1526 = vmatprep.subr.mxu0 %v1525
        %v1527 = vand.u32 %v1438, 4294901760
        %1528 = vmatpush1.msra.mxu0 %v1527
        %v1529 = vand.u32 %v1443, 4294901760
        %1530 = vmatprep.subr.mxu0 %v1529
        %v1531 = vand.u32 %v1442, 4294901760
        %1532 = vmatpush1.msra.mxu0 %v1531
        %v1533 = vand.u32 %v1447, 4294901760
        %1534 = vmatprep.subr.mxu0 %v1533
        %v1535 = vand.u32 %v1446, 4294901760
        %1536 = vmatpush1.msra.mxu0 %v1535
        %1537 = vmatprep.subr.mxu0 0.0
        %1538 = vmatpush1.msra.mxu0 0.0
        %1539 = vmatprep.subr.mxu0 0.0
        %1540 = vmatpush1.msra.mxu0 0.0
        %1541 = vmatprep.subr.mxu0 0.0
        %1542 = vmatpush1.msra.mxu0 0.0
        %1543 = vmatprep.subr.mxu0 0.0
        %1544 = vmatpush1.msra.mxu0 0.0
        %1545 = vmatprep.subr.mxu0 0.0
        %1546 = vmatpush1.msra.mxu0 0.0
        %1547 = vmatprep.subr.mxu0 0.0
        %1548 = vmatpush1.msra.mxu0 0.0
        %1549 = vmatprep.subr.mxu0 0.0
        %1550 = vmatpush1.msra.mxu0 0.0
        %1551 = vmatprep.subr.mxu0 0.0
        %1552 = vmatpush1.msra.mxu0 0.0
        %1553 = vmatprep.subr.mxu0 0.0
        %1554 = vmatpush1.msra.mxu0 0.0
        %1555 = vmatprep.subr.mxu0 0.0
        %1556 = vmatpush1.msra.mxu0 0.0
        %1557 = vmatprep.subr.mxu0 0.0
        %1558 = vmatpush1.msra.mxu0 0.0
        %1559 = vmatprep.subr.mxu0 0.0
        %1560 = vmatpush1.msra.mxu0 0.0
        %1561 = vmatprep.subr.mxu0 0.0
        %1562 = vmatpush1.msra.mxu0 0.0
        %1563 = vmatprep.subr.mxu0 0.0
        %1564 = vmatpush1.msra.mxu0 0.0
        %1565 = vmatprep.subr.mxu0 0.0
        %1566 = vmatpush1.msra.mxu0 0.0
        %1567 = vmatprep.subr.mxu0 0.0
        %1568 = vmatpush1.msra.mxu0 0.0
        %1569 = vmatprep.mubr.f32.mxu0 0.0
        %v1570 = vand.u32 %v1471, 4294901760
        %v1571 = vsub.f32 %v1471, %v1570
        %v1572 = vand.u32 %v1571, 4294901760
        %v1573 = vsub.f32 %v1571, %v1572
        %v1574 = vand.u32 %v1573, 4294901760
        %1575 = vmatmul.mubr.f32.gmra.mrb[0].mxu0 %v1574
        %v1576 = vpop.f32.mrb[0].mxu0
        %v1577 = vadd.f32 0.0, %v1576
        %v1578 = vpop.f32.mrb[0].mxu0
        %v1579 = vadd.f32 0.0, %v1578
        %1580 = vdwg.mxu0
        %v1581 = vand.u32 %v1387, 4294901760
        %v1582 = vsub.f32 %v1387, %v1581
        %v1583 = vand.u32 %v1582, 4294901760
        %v1584 = vsub.f32 %v1582, %v1583
        %v1585 = vand.u32 %v1584, 4294901760
        %1586 = vmatprep.subr.mxu0 %v1585
        %v1587 = vand.u32 %v1386, 4294901760
        %v1588 = vsub.f32 %v1386, %v1587
        %v1589 = vand.u32 %v1588, 4294901760
        %v1590 = vsub.f32 %v1588, %v1589
        %v1591 = vand.u32 %v1590, 4294901760
        %1592 = vmatpush1.msra.mxu0 %v1591
        %v1593 = vand.u32 %v1391, 4294901760
        %v1594 = vsub.f32 %v1391, %v1593
        %v1595 = vand.u32 %v1594, 4294901760
        %v1596 = vsub.f32 %v1594, %v1595
        %v1597 = vand.u32 %v1596, 4294901760
        %1598 = vmatprep.subr.mxu0 %v1597
        %v1599 = vand.u32 %v1390, 4294901760
        %v1600 = vsub.f32 %v1390, %v1599
        %v1601 = vand.u32 %v1600, 4294901760
        %v1602 = vsub.f32 %v1600, %v1601
        %v1603 = vand.u32 %v1602, 4294901760
        %1604 = vmatpush1.msra.mxu0 %v1603
        %v1605 = vand.u32 %v1395, 4294901760
        %v1606 = vsub.f32 %v1395, %v1605
        %v1607 = vand.u32 %v1606, 4294901760
        %v1608 = vsub.f32 %v1606, %v1607
        %v1609 = vand.u32 %v1608, 4294901760
        %1610 = vmatprep.subr.mxu0 %v1609
        %v1611 = vand.u32 %v1394, 4294901760
        %v1612 = vsub.f32 %v1394, %v1611
        %v1613 = vand.u32 %v1612, 4294901760
        %v1614 = vsub.f32 %v1612, %v1613
        %v1615 = vand.u32 %v1614, 4294901760
        %1616 = vmatpush1.msra.mxu0 %v1615
        %v1617 = vand.u32 %v1399, 4294901760
        %v1618 = vsub.f32 %v1399, %v1617
        %v1619 = vand.u32 %v1618, 4294901760
        %v1620 = vsub.f32 %v1618, %v1619
        %v1621 = vand.u32 %v1620, 4294901760
        %1622 = vmatprep.subr.mxu0 %v1621
        %v1623 = vand.u32 %v1398, 4294901760
        %v1624 = vsub.f32 %v1398, %v1623
        %v1625 = vand.u32 %v1624, 4294901760
        %v1626 = vsub.f32 %v1624, %v1625
        %v1627 = vand.u32 %v1626, 4294901760
        %1628 = vmatpush1.msra.mxu0 %v1627
        %v1629 = vand.u32 %v1403, 4294901760
        %v1630 = vsub.f32 %v1403, %v1629
        %v1631 = vand.u32 %v1630, 4294901760
        %v1632 = vsub.f32 %v1630, %v1631
        %v1633 = vand.u32 %v1632, 4294901760
        %1634 = vmatprep.subr.mxu0 %v1633
        %v1635 = vand.u32 %v1402, 4294901760
        %v1636 = vsub.f32 %v1402, %v1635
        %v1637 = vand.u32 %v1636, 4294901760
        %v1638 = vsub.f32 %v1636, %v1637
        %v1639 = vand.u32 %v1638, 4294901760
        %1640 = vmatpush1.msra.mxu0 %v1639
        %v1641 = vand.u32 %v1407, 4294901760
        %v1642 = vsub.f32 %v1407, %v1641
        %v1643 = vand.u32 %v1642, 4294901760
        %v1644 = vsub.f32 %v1642, %v1643
        %v1645 = vand.u32 %v1644, 4294901760
        %1646 = vmatprep.subr.mxu0 %v1645
        %v1647 = vand.u32 %v1406, 4294901760
        %v1648 = vsub.f32 %v1406, %v1647
        %v1649 = vand.u32 %v1648, 4294901760
        %v1650 = vsub.f32 %v1648, %v1649
        %v1651 = vand.u32 %v1650, 4294901760
        %1652 = vmatpush1.msra.mxu0 %v1651
        %v1653 = vand.u32 %v1411, 4294901760
        %v1654 = vsub.f32 %v1411, %v1653
        %v1655 = vand.u32 %v1654, 4294901760
        %v1656 = vsub.f32 %v1654, %v1655
        %v1657 = vand.u32 %v1656, 4294901760
        %1658 = vmatprep.subr.mxu0 %v1657
        %v1659 = vand.u32 %v1410, 4294901760
        %v1660 = vsub.f32 %v1410, %v1659
        %v1661 = vand.u32 %v1660, 4294901760
        %v1662 = vsub.f32 %v1660, %v1661
        %v1663 = vand.u32 %v1662, 4294901760
        %1664 = vmatpush1.msra.mxu0 %v1663
        %v1665 = vand.u32 %v1415, 4294901760
        %v1666 = vsub.f32 %v1415, %v1665
        %v1667 = vand.u32 %v1666, 4294901760
        %v1668 = vsub.f32 %v1666, %v1667
        %v1669 = vand.u32 %v1668, 4294901760
        %1670 = vmatprep.subr.mxu0 %v1669
        %v1671 = vand.u32 %v1414, 4294901760
        %v1672 = vsub.f32 %v1414, %v1671
        %v1673 = vand.u32 %v1672, 4294901760
        %v1674 = vsub.f32 %v1672, %v1673
        %v1675 = vand.u32 %v1674, 4294901760
        %1676 = vmatpush1.msra.mxu0 %v1675
        %v1677 = vand.u32 %v1419, 4294901760
        %v1678 = vsub.f32 %v1419, %v1677
        %v1679 = vand.u32 %v1678, 4294901760
        %v1680 = vsub.f32 %v1678, %v1679
        %v1681 = vand.u32 %v1680, 4294901760
        %1682 = vmatprep.subr.mxu0 %v1681
        %v1683 = vand.u32 %v1418, 4294901760
        %v1684 = vsub.f32 %v1418, %v1683
        %v1685 = vand.u32 %v1684, 4294901760
        %v1686 = vsub.f32 %v1684, %v1685
        %v1687 = vand.u32 %v1686, 4294901760
        %1688 = vmatpush1.msra.mxu0 %v1687
        %v1689 = vand.u32 %v1423, 4294901760
        %v1690 = vsub.f32 %v1423, %v1689
        %v1691 = vand.u32 %v1690, 4294901760
        %v1692 = vsub.f32 %v1690, %v1691
        %v1693 = vand.u32 %v1692, 4294901760
        %1694 = vmatprep.subr.mxu0 %v1693
        %v1695 = vand.u32 %v1422, 4294901760
        %v1696 = vsub.f32 %v1422, %v1695
        %v1697 = vand.u32 %v1696, 4294901760
        %v1698 = vsub.f32 %v1696, %v1697
        %v1699 = vand.u32 %v1698, 4294901760
        %1700 = vmatpush1.msra.mxu0 %v1699
        %v1701 = vand.u32 %v1427, 4294901760
        %v1702 = vsub.f32 %v1427, %v1701
        %v1703 = vand.u32 %v1702, 4294901760
        %v1704 = vsub.f32 %v1702, %v1703
        %v1705 = vand.u32 %v1704, 4294901760
        %1706 = vmatprep.subr.mxu0 %v1705
        %v1707 = vand.u32 %v1426, 4294901760
        %v1708 = vsub.f32 %v1426, %v1707
        %v1709 = vand.u32 %v1708, 4294901760
        %v1710 = vsub.f32 %v1708, %v1709
        %v1711 = vand.u32 %v1710, 4294901760
        %1712 = vmatpush1.msra.mxu0 %v1711
        %v1713 = vand.u32 %v1431, 4294901760
        %v1714 = vsub.f32 %v1431, %v1713
        %v1715 = vand.u32 %v1714, 4294901760
        %v1716 = vsub.f32 %v1714, %v1715
        %v1717 = vand.u32 %v1716, 4294901760
        %1718 = vmatprep.subr.mxu0 %v1717
        %v1719 = vand.u32 %v1430, 4294901760
        %v1720 = vsub.f32 %v1430, %v1719
        %v1721 = vand.u32 %v1720, 4294901760
        %v1722 = vsub.f32 %v1720, %v1721
        %v1723 = vand.u32 %v1722, 4294901760
        %1724 = vmatpush1.msra.mxu0 %v1723
        %v1725 = vand.u32 %v1435, 4294901760
        %v1726 = vsub.f32 %v1435, %v1725
        %v1727 = vand.u32 %v1726, 4294901760
        %v1728 = vsub.f32 %v1726, %v1727
        %v1729 = vand.u32 %v1728, 4294901760
        %1730 = vmatprep.subr.mxu0 %v1729
        %v1731 = vand.u32 %v1434, 4294901760
        %v1732 = vsub.f32 %v1434, %v1731
        %v1733 = vand.u32 %v1732, 4294901760
        %v1734 = vsub.f32 %v1732, %v1733
        %v1735 = vand.u32 %v1734, 4294901760
        %1736 = vmatpush1.msra.mxu0 %v1735
        %v1737 = vand.u32 %v1439, 4294901760
        %v1738 = vsub.f32 %v1439, %v1737
        %v1739 = vand.u32 %v1738, 4294901760
        %v1740 = vsub.f32 %v1738, %v1739
        %v1741 = vand.u32 %v1740, 4294901760
        %1742 = vmatprep.subr.mxu0 %v1741
        %v1743 = vand.u32 %v1438, 4294901760
        %v1744 = vsub.f32 %v1438, %v1743
        %v1745 = vand.u32 %v1744, 4294901760
        %v1746 = vsub.f32 %v1744, %v1745
        %v1747 = vand.u32 %v1746, 4294901760
        %1748 = vmatpush1.msra.mxu0 %v1747
        %v1749 = vand.u32 %v1443, 4294901760
        %v1750 = vsub.f32 %v1443, %v1749
        %v1751 = vand.u32 %v1750, 4294901760
        %v1752 = vsub.f32 %v1750, %v1751
        %v1753 = vand.u32 %v1752, 4294901760
        %1754 = vmatprep.subr.mxu0 %v1753
        %v1755 = vand.u32 %v1442, 4294901760
        %v1756 = vsub.f32 %v1442, %v1755
        %v1757 = vand.u32 %v1756, 4294901760
        %v1758 = vsub.f32 %v1756, %v1757
        %v1759 = vand.u32 %v1758, 4294901760
        %1760 = vmatpush1.msra.mxu0 %v1759
        %v1761 = vand.u32 %v1447, 4294901760
        %v1762 = vsub.f32 %v1447, %v1761
        %v1763 = vand.u32 %v1762, 4294901760
        %v1764 = vsub.f32 %v1762, %v1763
        %v1765 = vand.u32 %v1764, 4294901760
        %1766 = vmatprep.subr.mxu0 %v1765
        %v1767 = vand.u32 %v1446, 4294901760
        %v1768 = vsub.f32 %v1446, %v1767
        %v1769 = vand.u32 %v1768, 4294901760
        %v1770 = vsub.f32 %v1768, %v1769
        %v1771 = vand.u32 %v1770, 4294901760
        %1772 = vmatpush1.msra.mxu0 %v1771
        %1773 = vmatprep.subr.mxu0 0.0
        %1774 = vmatpush1.msra.mxu0 0.0
        %1775 = vmatprep.subr.mxu0 0.0
        %1776 = vmatpush1.msra.mxu0 0.0
        %1777 = vmatprep.subr.mxu0 0.0
        %1778 = vmatpush1.msra.mxu0 0.0
        %1779 = vmatprep.subr.mxu0 0.0
        %1780 = vmatpush1.msra.mxu0 0.0
        %1781 = vmatprep.subr.mxu0 0.0
        %1782 = vmatpush1.msra.mxu0 0.0
        %1783 = vmatprep.subr.mxu0 0.0
        %1784 = vmatpush1.msra.mxu0 0.0
        %1785 = vmatprep.subr.mxu0 0.0
        %1786 = vmatpush1.msra.mxu0 0.0
        %1787 = vmatprep.subr.mxu0 0.0
        %1788 = vmatpush1.msra.mxu0 0.0
        %1789 = vmatprep.subr.mxu0 0.0
        %1790 = vmatpush1.msra.mxu0 0.0
        %1791 = vmatprep.subr.mxu0 0.0
        %1792 = vmatpush1.msra.mxu0 0.0
        %1793 = vmatprep.subr.mxu0 0.0
        %1794 = vmatpush1.msra.mxu0 0.0
        %1795 = vmatprep.subr.mxu0 0.0
        %1796 = vmatpush1.msra.mxu0 0.0
        %1797 = vmatprep.subr.mxu0 0.0
        %1798 = vmatpush1.msra.mxu0 0.0
        %1799 = vmatprep.subr.mxu0 0.0
        %1800 = vmatpush1.msra.mxu0 0.0
        %1801 = vmatprep.subr.mxu0 0.0
        %1802 = vmatpush1.msra.mxu0 0.0
        %1803 = vmatprep.subr.mxu0 0.0
        %1804 = vmatpush1.msra.mxu0 0.0
        %1805 = vmatprep.mubr.f32.mxu0 0.0
        %v1806 = vand.u32 %v1471, 4294901760
        %1807 = vmatmul.mubr.f32.gmra.mrb[0].mxu0 %v1806
        %v1808 = vpop.f32.mrb[0].mxu0
        %v1809 = vadd.f32 %v1577, %v1808
        %v1810 = vpop.f32.mrb[0].mxu0
        %v1811 = vadd.f32 %v1579, %v1810
        %1812 = vdwg.mxu0
        %v1813 = vand.u32 %v1387, 4294901760
        %v1814 = vsub.f32 %v1387, %v1813
        %1815 = vmatprep.subr.mxu0 %v1814
        %v1816 = vand.u32 %v1386, 4294901760
        %v1817 = vsub.f32 %v1386, %v1816
        %1818 = vmatpush1.msra.mxu0 %v1817
        %v1819 = vand.u32 %v1391, 4294901760
        %v1820 = vsub.f32 %v1391, %v1819
        %1821 = vmatprep.subr.mxu0 %v1820
        %v1822 = vand.u32 %v1390, 4294901760
        %v1823 = vsub.f32 %v1390, %v1822
        %1824 = vmatpush1.msra.mxu0 %v1823
        %v1825 = vand.u32 %v1395, 4294901760
        %v1826 = vsub.f32 %v1395, %v1825
        %1827 = vmatprep.subr.mxu0 %v1826
        %v1828 = vand.u32 %v1394, 4294901760
        %v1829 = vsub.f32 %v1394, %v1828
        %1830 = vmatpush1.msra.mxu0 %v1829
        %v1831 = vand.u32 %v1399, 4294901760
        %v1832 = vsub.f32 %v1399, %v1831
        %1833 = vmatprep.subr.mxu0 %v1832
        %v1834 = vand.u32 %v1398, 4294901760
        %v1835 = vsub.f32 %v1398, %v1834
        %1836 = vmatpush1.msra.mxu0 %v1835
        %v1837 = vand.u32 %v1403, 4294901760
        %v1838 = vsub.f32 %v1403, %v1837
        %1839 = vmatprep.subr.mxu0 %v1838
        %v1840 = vand.u32 %v1402, 4294901760
        %v1841 = vsub.f32 %v1402, %v1840
        %1842 = vmatpush1.msra.mxu0 %v1841
        %v1843 = vand.u32 %v1407, 4294901760
        %v1844 = vsub.f32 %v1407, %v1843
        %1845 = vmatprep.subr.mxu0 %v1844
        %v1846 = vand.u32 %v1406, 4294901760
        %v1847 = vsub.f32 %v1406, %v1846
        %1848 = vmatpush1.msra.mxu0 %v1847
        %v1849 = vand.u32 %v1411, 4294901760
        %v1850 = vsub.f32 %v1411, %v1849
        %1851 = vmatprep.subr.mxu0 %v1850
        %v1852 = vand.u32 %v1410, 4294901760
        %v1853 = vsub.f32 %v1410, %v1852
        %1854 = vmatpush1.msra.mxu0 %v1853
        %v1855 = vand.u32 %v1415, 4294901760
        %v1856 = vsub.f32 %v1415, %v1855
        %1857 = vmatprep.subr.mxu0 %v1856
        %v1858 = vand.u32 %v1414, 4294901760
        %v1859 = vsub.f32 %v1414, %v1858
        %1860 = vmatpush1.msra.mxu0 %v1859
        %v1861 = vand.u32 %v1419, 4294901760
        %v1862 = vsub.f32 %v1419, %v1861
        %1863 = vmatprep.subr.mxu0 %v1862
        %v1864 = vand.u32 %v1418, 4294901760
        %v1865 = vsub.f32 %v1418, %v1864
        %1866 = vmatpush1.msra.mxu0 %v1865
        %v1867 = vand.u32 %v1423, 4294901760
        %v1868 = vsub.f32 %v1423, %v1867
        %1869 = vmatprep.subr.mxu0 %v1868
        %v1870 = vand.u32 %v1422, 4294901760
        %v1871 = vsub.f32 %v1422, %v1870
        %1872 = vmatpush1.msra.mxu0 %v1871
        %v1873 = vand.u32 %v1427, 4294901760
        %v1874 = vsub.f32 %v1427, %v1873
        %1875 = vmatprep.subr.mxu0 %v1874
        %v1876 = vand.u32 %v1426, 4294901760
        %v1877 = vsub.f32 %v1426, %v1876
        %1878 = vmatpush1.msra.mxu0 %v1877
        %v1879 = vand.u32 %v1431, 4294901760
        %v1880 = vsub.f32 %v1431, %v1879
        %1881 = vmatprep.subr.mxu0 %v1880
        %v1882 = vand.u32 %v1430, 4294901760
        %v1883 = vsub.f32 %v1430, %v1882
        %1884 = vmatpush1.msra.mxu0 %v1883
        %v1885 = vand.u32 %v1435, 4294901760
        %v1886 = vsub.f32 %v1435, %v1885
        %1887 = vmatprep.subr.mxu0 %v1886
        %v1888 = vand.u32 %v1434, 4294901760
        %v1889 = vsub.f32 %v1434, %v1888
        %1890 = vmatpush1.msra.mxu0 %v1889
        %v1891 = vand.u32 %v1439, 4294901760
        %v1892 = vsub.f32 %v1439, %v1891
        %1893 = vmatprep.subr.mxu0 %v1892
        %v1894 = vand.u32 %v1438, 4294901760
        %v1895 = vsub.f32 %v1438, %v1894
        %1896 = vmatpush1.msra.mxu0 %v1895
        %v1897 = vand.u32 %v1443, 4294901760
        %v1898 = vsub.f32 %v1443, %v1897
        %1899 = vmatprep.subr.mxu0 %v1898
        %v1900 = vand.u32 %v1442, 4294901760
        %v1901 = vsub.f32 %v1442, %v1900
        %1902 = vmatpush1.msra.mxu0 %v1901
        %v1903 = vand.u32 %v1447, 4294901760
        %v1904 = vsub.f32 %v1447, %v1903
        %1905 = vmatprep.subr.mxu0 %v1904
        %v1906 = vand.u32 %v1446, 4294901760
        %v1907 = vsub.f32 %v1446, %v1906
        %1908 = vmatpush1.msra.mxu0 %v1907
        %1909 = vmatprep.subr.mxu0 0.0
        %1910 = vmatpush1.msra.mxu0 0.0
        %1911 = vmatprep.subr.mxu0 0.0
        %1912 = vmatpush1.msra.mxu0 0.0
        %1913 = vmatprep.subr.mxu0 0.0
        %1914 = vmatpush1.msra.mxu0 0.0
        %1915 = vmatprep.subr.mxu0 0.0
        %1916 = vmatpush1.msra.mxu0 0.0
        %1917 = vmatprep.subr.mxu0 0.0
        %1918 = vmatpush1.msra.mxu0 0.0
        %1919 = vmatprep.subr.mxu0 0.0
        %1920 = vmatpush1.msra.mxu0 0.0
        %1921 = vmatprep.subr.mxu0 0.0
        %1922 = vmatpush1.msra.mxu0 0.0
        %1923 = vmatprep.subr.mxu0 0.0
        %1924 = vmatpush1.msra.mxu0 0.0
        %1925 = vmatprep.subr.mxu0 0.0
        %1926 = vmatpush1.msra.mxu0 0.0
        %1927 = vmatprep.subr.mxu0 0.0
        %1928 = vmatpush1.msra.mxu0 0.0
        %1929 = vmatprep.subr.mxu0 0.0
        %1930 = vmatpush1.msra.mxu0 0.0
        %1931 = vmatprep.subr.mxu0 0.0
        %1932 = vmatpush1.msra.mxu0 0.0
        %1933 = vmatprep.subr.mxu0 0.0
        %1934 = vmatpush1.msra.mxu0 0.0
        %1935 = vmatprep.subr.mxu0 0.0
        %1936 = vmatpush1.msra.mxu0 0.0
        %1937 = vmatprep.subr.mxu0 0.0
        %1938 = vmatpush1.msra.mxu0 0.0
        %1939 = vmatprep.subr.mxu0 0.0
        %1940 = vmatpush1.msra.mxu0 0.0
        %1941 = vmatprep.mubr.f32.mxu0 0.0
        %v1942 = vand.u32 %v1471, 4294901760
        %v1943 = vsub.f32 %v1471, %v1942
        %1944 = vmatmul.mubr.f32.gmra.mrb[0].mxu0 %v1943
        %v1945 = vpop.f32.mrb[0].mxu0
        %v1946 = vadd.f32 %v1809, %v1945
        %v1947 = vpop.f32.mrb[0].mxu0
        %v1948 = vadd.f32 %v1811, %v1947
        %1949 = vdwg.mxu0
        %v1950 = vand.u32 %v1387, 4294901760
        %1951 = vmatprep.subr.mxu0 %v1950
        %v1952 = vand.u32 %v1386, 4294901760
        %1953 = vmatpush1.msra.mxu0 %v1952
        %v1954 = vand.u32 %v1391, 4294901760
        %1955 = vmatprep.subr.mxu0 %v1954
        %v1956 = vand.u32 %v1390, 4294901760
        %1957 = vmatpush1.msra.mxu0 %v1956
        %v1958 = vand.u32 %v1395, 4294901760
        %1959 = vmatprep.subr.mxu0 %v1958
        %v1960 = vand.u32 %v1394, 4294901760
        %1961 = vmatpush1.msra.mxu0 %v1960
        %v1962 = vand.u32 %v1399, 4294901760
        %1963 = vmatprep.subr.mxu0 %v1962
        %v1964 = vand.u32 %v1398, 4294901760
        %1965 = vmatpush1.msra.mxu0 %v1964
        %v1966 = vand.u32 %v1403, 4294901760
        %1967 = vmatprep.subr.mxu0 %v1966
        %v1968 = vand.u32 %v1402, 4294901760
        %1969 = vmatpush1.msra.mxu0 %v1968
        %v1970 = vand.u32 %v1407, 4294901760
        %1971 = vmatprep.subr.mxu0 %v1970
        %v1972 = vand.u32 %v1406, 4294901760
        %1973 = vmatpush1.msra.mxu0 %v1972
        %v1974 = vand.u32 %v1411, 4294901760
        %1975 = vmatprep.subr.mxu0 %v1974
        %v1976 = vand.u32 %v1410, 4294901760
        %1977 = vmatpush1.msra.mxu0 %v1976
        %v1978 = vand.u32 %v1415, 4294901760
        %1979 = vmatprep.subr.mxu0 %v1978
        %v1980 = vand.u32 %v1414, 4294901760
        %1981 = vmatpush1.msra.mxu0 %v1980
        %v1982 = vand.u32 %v1419, 4294901760
        %1983 = vmatprep.subr.mxu0 %v1982
        %v1984 = vand.u32 %v1418, 4294901760
        %1985 = vmatpush1.msra.mxu0 %v1984
        %v1986 = vand.u32 %v1423, 4294901760
        %1987 = vmatprep.subr.mxu0 %v1986
        %v1988 = vand.u32 %v1422, 4294901760
        %1989 = vmatpush1.msra.mxu0 %v1988
        %v1990 = vand.u32 %v1427, 4294901760
        %1991 = vmatprep.subr.mxu0 %v1990
        %v1992 = vand.u32 %v1426, 4294901760
        %1993 = vmatpush1.msra.mxu0 %v1992
        %v1994 = vand.u32 %v1431, 4294901760
        %1995 = vmatprep.subr.mxu0 %v1994
        %v1996 = vand.u32 %v1430, 4294901760
        %1997 = vmatpush1.msra.mxu0 %v1996
        %v1998 = vand.u32 %v1435, 4294901760
        %1999 = vmatprep.subr.mxu0 %v1998
        %v2000 = vand.u32 %v1434, 4294901760
        %2001 = vmatpush1.msra.mxu0 %v2000
        %v2002 = vand.u32 %v1439, 4294901760
        %2003 = vmatprep.subr.mxu0 %v2002
        %v2004 = vand.u32 %v1438, 4294901760
        %2005 = vmatpush1.msra.mxu0 %v2004
        %v2006 = vand.u32 %v1443, 4294901760
        %2007 = vmatprep.subr.mxu0 %v2006
        %v2008 = vand.u32 %v1442, 4294901760
        %2009 = vmatpush1.msra.mxu0 %v2008
        %v2010 = vand.u32 %v1447, 4294901760
        %2011 = vmatprep.subr.mxu0 %v2010
        %v2012 = vand.u32 %v1446, 4294901760
        %2013 = vmatpush1.msra.mxu0 %v2012
        %2014 = vmatprep.subr.mxu0 0.0
        %2015 = vmatpush1.msra.mxu0 0.0
        %2016 = vmatprep.subr.mxu0 0.0
        %2017 = vmatpush1.msra.mxu0 0.0
        %2018 = vmatprep.subr.mxu0 0.0
        %2019 = vmatpush1.msra.mxu0 0.0
        %2020 = vmatprep.subr.mxu0 0.0
        %2021 = vmatpush1.msra.mxu0 0.0
        %2022 = vmatprep.subr.mxu0 0.0
        %2023 = vmatpush1.msra.mxu0 0.0
        %2024 = vmatprep.subr.mxu0 0.0
        %2025 = vmatpush1.msra.mxu0 0.0
        %2026 = vmatprep.subr.mxu0 0.0
        %2027 = vmatpush1.msra.mxu0 0.0
        %2028 = vmatprep.subr.mxu0 0.0
        %2029 = vmatpush1.msra.mxu0 0.0
        %2030 = vmatprep.subr.mxu0 0.0
        %2031 = vmatpush1.msra.mxu0 0.0
        %2032 = vmatprep.subr.mxu0 0.0
        %2033 = vmatpush1.msra.mxu0 0.0
        %2034 = vmatprep.subr.mxu0 0.0
        %2035 = vmatpush1.msra.mxu0 0.0
        %2036 = vmatprep.subr.mxu0 0.0
        %2037 = vmatpush1.msra.mxu0 0.0
        %2038 = vmatprep.subr.mxu0 0.0
        %2039 = vmatpush1.msra.mxu0 0.0
        %2040 = vmatprep.subr.mxu0 0.0
        %2041 = vmatpush1.msra.mxu0 0.0
        %2042 = vmatprep.subr.mxu0 0.0
        %2043 = vmatpush1.msra.mxu0 0.0
        %2044 = vmatprep.subr.mxu0 0.0
        %2045 = vmatpush1.msra.mxu0 0.0
        %2046 = vmatprep.mubr.f32.mxu0 0.0
        %v2047 = vand.u32 %v1471, 4294901760
        %v2048 = vsub.f32 %v1471, %v2047
        %v2049 = vand.u32 %v2048, 4294901760
        %2050 = vmatmul.mubr.f32.gmra.mrb[0].mxu0 %v2049
        %v2051 = vpop.f32.mrb[0].mxu0
        %v2052 = vadd.f32 %v1946, %v2051
        %v2053 = vpop.f32.mrb[0].mxu0
        %v2054 = vadd.f32 %v1948, %v2053
        %2055 = vdwg.mxu0
        %v2056 = vand.u32 %v1387, 4294901760
        %v2057 = vsub.f32 %v1387, %v2056
        %v2058 = vand.u32 %v2057, 4294901760
        %2059 = vmatprep.subr.mxu0 %v2058
        %v2060 = vand.u32 %v1386, 4294901760
        %v2061 = vsub.f32 %v1386, %v2060
        %v2062 = vand.u32 %v2061, 4294901760
        %2063 = vmatpush1.msra.mxu0 %v2062
        %v2064 = vand.u32 %v1391, 4294901760
        %v2065 = vsub.f32 %v1391, %v2064
        %v2066 = vand.u32 %v2065, 4294901760
        %2067 = vmatprep.subr.mxu0 %v2066
        %v2068 = vand.u32 %v1390, 4294901760
        %v2069 = vsub.f32 %v1390, %v2068
        %v2070 = vand.u32 %v2069, 4294901760
        %2071 = vmatpush1.msra.mxu0 %v2070
        %v2072 = vand.u32 %v1395, 4294901760
        %v2073 = vsub.f32 %v1395, %v2072
        %v2074 = vand.u32 %v2073, 4294901760
        %2075 = vmatprep.subr.mxu0 %v2074
        %v2076 = vand.u32 %v1394, 4294901760
        %v2077 = vsub.f32 %v1394, %v2076
        %v2078 = vand.u32 %v2077, 4294901760
        %2079 = vmatpush1.msra.mxu0 %v2078
        %v2080 = vand.u32 %v1399, 4294901760
        %v2081 = vsub.f32 %v1399, %v2080
        %v2082 = vand.u32 %v2081, 4294901760
        %2083 = vmatprep.subr.mxu0 %v2082
        %v2084 = vand.u32 %v1398, 4294901760
        %v2085 = vsub.f32 %v1398, %v2084
        %v2086 = vand.u32 %v2085, 4294901760
        %2087 = vmatpush1.msra.mxu0 %v2086
        %v2088 = vand.u32 %v1403, 4294901760
        %v2089 = vsub.f32 %v1403, %v2088
        %v2090 = vand.u32 %v2089, 4294901760
        %2091 = vmatprep.subr.mxu0 %v2090
        %v2092 = vand.u32 %v1402, 4294901760
        %v2093 = vsub.f32 %v1402, %v2092
        %v2094 = vand.u32 %v2093, 4294901760
        %2095 = vmatpush1.msra.mxu0 %v2094
        %v2096 = vand.u32 %v1407, 4294901760
        %v2097 = vsub.f32 %v1407, %v2096
        %v2098 = vand.u32 %v2097, 4294901760
        %2099 = vmatprep.subr.mxu0 %v2098
        %v2100 = vand.u32 %v1406, 4294901760
        %v2101 = vsub.f32 %v1406, %v2100
        %v2102 = vand.u32 %v2101, 4294901760
        %2103 = vmatpush1.msra.mxu0 %v2102
        %v2104 = vand.u32 %v1411, 4294901760
        %v2105 = vsub.f32 %v1411, %v2104
        %v2106 = vand.u32 %v2105, 4294901760
        %2107 = vmatprep.subr.mxu0 %v2106
        %v2108 = vand.u32 %v1410, 4294901760
        %v2109 = vsub.f32 %v1410, %v2108
        %v2110 = vand.u32 %v2109, 4294901760
        %2111 = vmatpush1.msra.mxu0 %v2110
        %v2112 = vand.u32 %v1415, 4294901760
        %v2113 = vsub.f32 %v1415, %v2112
        %v2114 = vand.u32 %v2113, 4294901760
        %2115 = vmatprep.subr.mxu0 %v2114
        %v2116 = vand.u32 %v1414, 4294901760
        %v2117 = vsub.f32 %v1414, %v2116
        %v2118 = vand.u32 %v2117, 4294901760
        %2119 = vmatpush1.msra.mxu0 %v2118
        %v2120 = vand.u32 %v1419, 4294901760
        %v2121 = vsub.f32 %v1419, %v2120
        %v2122 = vand.u32 %v2121, 4294901760
        %2123 = vmatprep.subr.mxu0 %v2122
        %v2124 = vand.u32 %v1418, 4294901760
        %v2125 = vsub.f32 %v1418, %v2124
        %v2126 = vand.u32 %v2125, 4294901760
        %2127 = vmatpush1.msra.mxu0 %v2126
        %v2128 = vand.u32 %v1423, 4294901760
        %v2129 = vsub.f32 %v1423, %v2128
        %v2130 = vand.u32 %v2129, 4294901760
        %2131 = vmatprep.subr.mxu0 %v2130
        %v2132 = vand.u32 %v1422, 4294901760
        %v2133 = vsub.f32 %v1422, %v2132
        %v2134 = vand.u32 %v2133, 4294901760
        %2135 = vmatpush1.msra.mxu0 %v2134
        %v2136 = vand.u32 %v1427, 4294901760
        %v2137 = vsub.f32 %v1427, %v2136
        %v2138 = vand.u32 %v2137, 4294901760
        %2139 = vmatprep.subr.mxu0 %v2138
        %v2140 = vand.u32 %v1426, 4294901760
        %v2141 = vsub.f32 %v1426, %v2140
        %v2142 = vand.u32 %v2141, 4294901760
        %2143 = vmatpush1.msra.mxu0 %v2142
        %v2144 = vand.u32 %v1431, 4294901760
        %v2145 = vsub.f32 %v1431, %v2144
        %v2146 = vand.u32 %v2145, 4294901760
        %2147 = vmatprep.subr.mxu0 %v2146
        %v2148 = vand.u32 %v1430, 4294901760
        %v2149 = vsub.f32 %v1430, %v2148
        %v2150 = vand.u32 %v2149, 4294901760
        %2151 = vmatpush1.msra.mxu0 %v2150
        %v2152 = vand.u32 %v1435, 4294901760
        %v2153 = vsub.f32 %v1435, %v2152
        %v2154 = vand.u32 %v2153, 4294901760
        %2155 = vmatprep.subr.mxu0 %v2154
        %v2156 = vand.u32 %v1434, 4294901760
        %v2157 = vsub.f32 %v1434, %v2156
        %v2158 = vand.u32 %v2157, 4294901760
        %2159 = vmatpush1.msra.mxu0 %v2158
        %v2160 = vand.u32 %v1439, 4294901760
        %v2161 = vsub.f32 %v1439, %v2160
        %v2162 = vand.u32 %v2161, 4294901760
        %2163 = vmatprep.subr.mxu0 %v2162
        %v2164 = vand.u32 %v1438, 4294901760
        %v2165 = vsub.f32 %v1438, %v2164
        %v2166 = vand.u32 %v2165, 4294901760
        %2167 = vmatpush1.msra.mxu0 %v2166
        %v2168 = vand.u32 %v1443, 4294901760
        %v2169 = vsub.f32 %v1443, %v2168
        %v2170 = vand.u32 %v2169, 4294901760
        %2171 = vmatprep.subr.mxu0 %v2170
        %v2172 = vand.u32 %v1442, 4294901760
        %v2173 = vsub.f32 %v1442, %v2172
        %v2174 = vand.u32 %v2173, 4294901760
        %2175 = vmatpush1.msra.mxu0 %v2174
        %v2176 = vand.u32 %v1447, 4294901760
        %v2177 = vsub.f32 %v1447, %v2176
        %v2178 = vand.u32 %v2177, 4294901760
        %2179 = vmatprep.subr.mxu0 %v2178
        %v2180 = vand.u32 %v1446, 4294901760
        %v2181 = vsub.f32 %v1446, %v2180
        %v2182 = vand.u32 %v2181, 4294901760
        %2183 = vmatpush1.msra.mxu0 %v2182
        %2184 = vmatprep.subr.mxu0 0.0
        %2185 = vmatpush1.msra.mxu0 0.0
        %2186 = vmatprep.subr.mxu0 0.0
        %2187 = vmatpush1.msra.mxu0 0.0
        %2188 = vmatprep.subr.mxu0 0.0
        %2189 = vmatpush1.msra.mxu0 0.0
        %2190 = vmatprep.subr.mxu0 0.0
        %2191 = vmatpush1.msra.mxu0 0.0
        %2192 = vmatprep.subr.mxu0 0.0
        %2193 = vmatpush1.msra.mxu0 0.0
        %2194 = vmatprep.subr.mxu0 0.0
        %2195 = vmatpush1.msra.mxu0 0.0
        %2196 = vmatprep.subr.mxu0 0.0
        %2197 = vmatpush1.msra.mxu0 0.0
        %2198 = vmatprep.subr.mxu0 0.0
        %2199 = vmatpush1.msra.mxu0 0.0
        %2200 = vmatprep.subr.mxu0 0.0
        %2201 = vmatpush1.msra.mxu0 0.0
        %2202 = vmatprep.subr.mxu0 0.0
        %2203 = vmatpush1.msra.mxu0 0.0
        %2204 = vmatprep.subr.mxu0 0.0
        %2205 = vmatpush1.msra.mxu0 0.0
        %2206 = vmatprep.subr.mxu0 0.0
        %2207 = vmatpush1.msra.mxu0 0.0
        %2208 = vmatprep.subr.mxu0 0.0
        %2209 = vmatpush1.msra.mxu0 0.0
        %2210 = vmatprep.subr.mxu0 0.0
        %2211 = vmatpush1.msra.mxu0 0.0
        %2212 = vmatprep.subr.mxu0 0.0
        %2213 = vmatpush1.msra.mxu0 0.0
        %2214 = vmatprep.subr.mxu0 0.0
        %2215 = vmatpush1.msra.mxu0 0.0
        %2216 = vmatprep.mubr.f32.mxu0 0.0
        %v2217 = vand.u32 %v1471, 4294901760
        %2218 = vmatmul.mubr.f32.gmra.mrb[0].mxu0 %v2217
        %v2219 = vpop.f32.mrb[0].mxu0
        %v2220 = vadd.f32 %v2052, %v2219
        %v2221 = vpop.f32.mrb[0].mxu0
        %v2222 = vadd.f32 %v2054, %v2221
        %2223 = vdwg.mxu0
        %v2224 = vand.u32 %v1387, 4294901760
        %2225 = vmatprep.subr.mxu0 %v2224
        %v2226 = vand.u32 %v1386, 4294901760
        %2227 = vmatpush1.msra.mxu0 %v2226
        %v2228 = vand.u32 %v1391, 4294901760
        %2229 = vmatprep.subr.mxu0 %v2228
        %v2230 = vand.u32 %v1390, 4294901760
        %2231 = vmatpush1.msra.mxu0 %v2230
        %v2232 = vand.u32 %v1395, 4294901760
        %2233 = vmatprep.subr.mxu0 %v2232
        %v2234 = vand.u32 %v1394, 4294901760
        %2235 = vmatpush1.msra.mxu0 %v2234
        %v2236 = vand.u32 %v1399, 4294901760
        %2237 = vmatprep.subr.mxu0 %v2236
        %v2238 = vand.u32 %v1398, 4294901760
        %2239 = vmatpush1.msra.mxu0 %v2238
        %v2240 = vand.u32 %v1403, 4294901760
        %2241 = vmatprep.subr.mxu0 %v2240
        %v2242 = vand.u32 %v1402, 4294901760
        %2243 = vmatpush1.msra.mxu0 %v2242
        %v2244 = vand.u32 %v1407, 4294901760
        %2245 = vmatprep.subr.mxu0 %v2244
        %v2246 = vand.u32 %v1406, 4294901760
        %2247 = vmatpush1.msra.mxu0 %v2246
        %v2248 = vand.u32 %v1411, 4294901760
        %2249 = vmatprep.subr.mxu0 %v2248
        %v2250 = vand.u32 %v1410, 4294901760
        %2251 = vmatpush1.msra.mxu0 %v2250
        %v2252 = vand.u32 %v1415, 4294901760
        %2253 = vmatprep.subr.mxu0 %v2252
        %v2254 = vand.u32 %v1414, 4294901760
        %2255 = vmatpush1.msra.mxu0 %v2254
        %v2256 = vand.u32 %v1419, 4294901760
        %2257 = vmatprep.subr.mxu0 %v2256
        %v2258 = vand.u32 %v1418, 4294901760
        %2259 = vmatpush1.msra.mxu0 %v2258
        %v2260 = vand.u32 %v1423, 4294901760
        %2261 = vmatprep.subr.mxu0 %v2260
        %v2262 = vand.u32 %v1422, 4294901760
        %2263 = vmatpush1.msra.mxu0 %v2262
        %v2264 = vand.u32 %v1427, 4294901760
        %2265 = vmatprep.subr.mxu0 %v2264
        %v2266 = vand.u32 %v1426, 4294901760
        %2267 = vmatpush1.msra.mxu0 %v2266
        %v2268 = vand.u32 %v1431, 4294901760
        %2269 = vmatprep.subr.mxu0 %v2268
        %v2270 = vand.u32 %v1430, 4294901760
        %2271 = vmatpush1.msra.mxu0 %v2270
        %v2272 = vand.u32 %v1435, 4294901760
        %2273 = vmatprep.subr.mxu0 %v2272
        %v2274 = vand.u32 %v1434, 4294901760
        %2275 = vmatpush1.msra.mxu0 %v2274
        %v2276 = vand.u32 %v1439, 4294901760
        %2277 = vmatprep.subr.mxu0 %v2276
        %v2278 = vand.u32 %v1438, 4294901760
        %2279 = vmatpush1.msra.mxu0 %v2278
        %v2280 = vand.u32 %v1443, 4294901760
        %2281 = vmatprep.subr.mxu0 %v2280
        %v2282 = vand.u32 %v1442, 4294901760
        %2283 = vmatpush1.msra.mxu0 %v2282
        %v2284 = vand.u32 %v1447, 4294901760
        %2285 = vmatprep.subr.mxu0 %v2284
        %v2286 = vand.u32 %v1446, 4294901760
        %2287 = vmatpush1.msra.mxu0 %v2286
        %2288 = vmatprep.subr.mxu0 0.0
        %2289 = vmatpush1.msra.mxu0 0.0
        %2290 = vmatprep.subr.mxu0 0.0
        %2291 = vmatpush1.msra.mxu0 0.0
        %2292 = vmatprep.subr.mxu0 0.0
        %2293 = vmatpush1.msra.mxu0 0.0
        %2294 = vmatprep.subr.mxu0 0.0
        %2295 = vmatpush1.msra.mxu0 0.0
        %2296 = vmatprep.subr.mxu0 0.0
        %2297 = vmatpush1.msra.mxu0 0.0
        %2298 = vmatprep.subr.mxu0 0.0
        %2299 = vmatpush1.msra.mxu0 0.0
        %2300 = vmatprep.subr.mxu0 0.0
        %2301 = vmatpush1.msra.mxu0 0.0
        %2302 = vmatprep.subr.mxu0 0.0
        %2303 = vmatpush1.msra.mxu0 0.0
        %2304 = vmatprep.subr.mxu0 0.0
        %2305 = vmatpush1.msra.mxu0 0.0
        %2306 = vmatprep.subr.mxu0 0.0
        %2307 = vmatpush1.msra.mxu0 0.0
        %2308 = vmatprep.subr.mxu0 0.0
        %2309 = vmatpush1.msra.mxu0 0.0
        %2310 = vmatprep.subr.mxu0 0.0
        %2311 = vmatpush1.msra.mxu0 0.0
        %2312 = vmatprep.subr.mxu0 0.0
        %2313 = vmatpush1.msra.mxu0 0.0
        %2314 = vmatprep.subr.mxu0 0.0
        %2315 = vmatpush1.msra.mxu0 0.0
        %2316 = vmatprep.subr.mxu0 0.0
        %2317 = vmatpush1.msra.mxu0 0.0
        %2318 = vmatprep.subr.mxu0 0.0
        %2319 = vmatpush1.msra.mxu0 0.0
        %2320 = vmatprep.mubr.f32.mxu0 0.0
        %v2321 = vand.u32 %v1471, 4294901760
        %2322 = vmatmul.mubr.f32.gmra.mrb[0].mxu0 %v2321
        %v2323 = vpop.f32.mrb[0].mxu0
        %v2324 = vadd.f32 %v2220, %v2323
        %v2325 = vpop.f32.mrb[0].mxu0
        %v2326 = vadd.f32 %v2222, %v2325
        %2327 = vdwg.mxu0
        %v2328 = vand.u32 %v1389, 4294901760
        %2329 = vmatprep.subr.mxu0 %v2328
        %v2330 = vand.u32 %v1388, 4294901760
        %2331 = vmatpush1.msra.mxu0 %v2330
        %v2332 = vand.u32 %v1393, 4294901760
        %2333 = vmatprep.subr.mxu0 %v2332
        %v2334 = vand.u32 %v1392, 4294901760
        %2335 = vmatpush1.msra.mxu0 %v2334
        %v2336 = vand.u32 %v1397, 4294901760
        %2337 = vmatprep.subr.mxu0 %v2336
        %v2338 = vand.u32 %v1396, 4294901760
        %2339 = vmatpush1.msra.mxu0 %v2338
        %v2340 = vand.u32 %v1401, 4294901760
        %2341 = vmatprep.subr.mxu0 %v2340
        %v2342 = vand.u32 %v1400, 4294901760
        %2343 = vmatpush1.msra.mxu0 %v2342
        %v2344 = vand.u32 %v1405, 4294901760
        %2345 = vmatprep.subr.mxu0 %v2344
        %v2346 = vand.u32 %v1404, 4294901760
        %2347 = vmatpush1.msra.mxu0 %v2346
        %v2348 = vand.u32 %v1409, 4294901760
        %2349 = vmatprep.subr.mxu0 %v2348
        %v2350 = vand.u32 %v1408, 4294901760
        %2351 = vmatpush1.msra.mxu0 %v2350
        %v2352 = vand.u32 %v1413, 4294901760
        %2353 = vmatprep.subr.mxu0 %v2352
        %v2354 = vand.u32 %v1412, 4294901760
        %2355 = vmatpush1.msra.mxu0 %v2354
        %v2356 = vand.u32 %v1417, 4294901760
        %2357 = vmatprep.subr.mxu0 %v2356
        %v2358 = vand.u32 %v1416, 4294901760
        %2359 = vmatpush1.msra.mxu0 %v2358
        %v2360 = vand.u32 %v1421, 4294901760
        %2361 = vmatprep.subr.mxu0 %v2360
        %v2362 = vand.u32 %v1420, 4294901760
        %2363 = vmatpush1.msra.mxu0 %v2362
        %v2364 = vand.u32 %v1425, 4294901760
        %2365 = vmatprep.subr.mxu0 %v2364
        %v2366 = vand.u32 %v1424, 4294901760
        %2367 = vmatpush1.msra.mxu0 %v2366
        %v2368 = vand.u32 %v1429, 4294901760
        %2369 = vmatprep.subr.mxu0 %v2368
        %v2370 = vand.u32 %v1428, 4294901760
        %2371 = vmatpush1.msra.mxu0 %v2370
        %v2372 = vand.u32 %v1433, 4294901760
        %2373 = vmatprep.subr.mxu0 %v2372
        %v2374 = vand.u32 %v1432, 4294901760
        %2375 = vmatpush1.msra.mxu0 %v2374
        %v2376 = vand.u32 %v1437, 4294901760
        %2377 = vmatprep.subr.mxu0 %v2376
        %v2378 = vand.u32 %v1436, 4294901760
        %2379 = vmatpush1.msra.mxu0 %v2378
        %v2380 = vand.u32 %v1441, 4294901760
        %2381 = vmatprep.subr.mxu0 %v2380
        %v2382 = vand.u32 %v1440, 4294901760
        %2383 = vmatpush1.msra.mxu0 %v2382
        %v2384 = vand.u32 %v1445, 4294901760
        %2385 = vmatprep.subr.mxu0 %v2384
        %v2386 = vand.u32 %v1444, 4294901760
        %2387 = vmatpush1.msra.mxu0 %v2386
        %v2388 = vand.u32 %v1449, 4294901760
        %2389 = vmatprep.subr.mxu0 %v2388
        %v2390 = vand.u32 %v1448, 4294901760
        %2391 = vmatpush1.msra.mxu0 %v2390
        %2392 = vmatprep.subr.mxu0 0.0
        %2393 = vmatpush1.msra.mxu0 0.0
        %2394 = vmatprep.subr.mxu0 0.0
        %2395 = vmatpush1.msra.mxu0 0.0
        %2396 = vmatprep.subr.mxu0 0.0
        %2397 = vmatpush1.msra.mxu0 0.0
        %2398 = vmatprep.subr.mxu0 0.0
        %2399 = vmatpush1.msra.mxu0 0.0
        %2400 = vmatprep.subr.mxu0 0.0
        %2401 = vmatpush1.msra.mxu0 0.0
        %2402 = vmatprep.subr.mxu0 0.0
        %2403 = vmatpush1.msra.mxu0 0.0
        %2404 = vmatprep.subr.mxu0 0.0
        %2405 = vmatpush1.msra.mxu0 0.0
        %2406 = vmatprep.subr.mxu0 0.0
        %2407 = vmatpush1.msra.mxu0 0.0
        %2408 = vmatprep.subr.mxu0 0.0
        %2409 = vmatpush1.msra.mxu0 0.0
        %2410 = vmatprep.subr.mxu0 0.0
        %2411 = vmatpush1.msra.mxu0 0.0
        %2412 = vmatprep.subr.mxu0 0.0
        %2413 = vmatpush1.msra.mxu0 0.0
        %2414 = vmatprep.subr.mxu0 0.0
        %2415 = vmatpush1.msra.mxu0 0.0
        %2416 = vmatprep.subr.mxu0 0.0
        %2417 = vmatpush1.msra.mxu0 0.0
        %2418 = vmatprep.subr.mxu0 0.0
        %2419 = vmatpush1.msra.mxu0 0.0
        %2420 = vmatprep.subr.mxu0 0.0
        %2421 = vmatpush1.msra.mxu0 0.0
        %2422 = vmatprep.subr.mxu0 0.0
        %2423 = vmatpush1.msra.mxu0 0.0
        %2424 = vmatprep.mubr.f32.mxu0 0.0
        %v2425 = vand.u32 %v1471, 4294901760
        %v2426 = vsub.f32 %v1471, %v2425
        %v2427 = vand.u32 %v2426, 4294901760
        %v2428 = vsub.f32 %v2426, %v2427
        %v2429 = vand.u32 %v2428, 4294901760
        %2430 = vmatmul.mubr.f32.gmra.mrb[0].mxu0 %v2429
        %v2431 = vpop.f32.mrb[0].mxu0
        %v2432 = vadd.f32 0.0, %v2431
        %v2433 = vpop.f32.mrb[0].mxu0
        %v2434 = vadd.f32 0.0, %v2433
        %2435 = vdwg.mxu0
        %v2436 = vand.u32 %v1389, 4294901760
        %v2437 = vsub.f32 %v1389, %v2436
        %v2438 = vand.u32 %v2437, 4294901760
        %v2439 = vsub.f32 %v2437, %v2438
        %v2440 = vand.u32 %v2439, 4294901760
        %2441 = vmatprep.subr.mxu0 %v2440
        %v2442 = vand.u32 %v1388, 4294901760
        %v2443 = vsub.f32 %v1388, %v2442
        %v2444 = vand.u32 %v2443, 4294901760
        %v2445 = vsub.f32 %v2443, %v2444
        %v2446 = vand.u32 %v2445, 4294901760
        %2447 = vmatpush1.msra.mxu0 %v2446
        %v2448 = vand.u32 %v1393, 4294901760
        %v2449 = vsub.f32 %v1393, %v2448
        %v2450 = vand.u32 %v2449, 4294901760
        %v2451 = vsub.f32 %v2449, %v2450
        %v2452 = vand.u32 %v2451, 4294901760
        %2453 = vmatprep.subr.mxu0 %v2452
        %v2454 = vand.u32 %v1392, 4294901760
        %v2455 = vsub.f32 %v1392, %v2454
        %v2456 = vand.u32 %v2455, 4294901760
        %v2457 = vsub.f32 %v2455, %v2456
        %v2458 = vand.u32 %v2457, 4294901760
        %2459 = vmatpush1.msra.mxu0 %v2458
        %v2460 = vand.u32 %v1397, 4294901760
        %v2461 = vsub.f32 %v1397, %v2460
        %v2462 = vand.u32 %v2461, 4294901760
        %v2463 = vsub.f32 %v2461, %v2462
        %v2464 = vand.u32 %v2463, 4294901760
        %2465 = vmatprep.subr.mxu0 %v2464
        %v2466 = vand.u32 %v1396, 4294901760
        %v2467 = vsub.f32 %v1396, %v2466
        %v2468 = vand.u32 %v2467, 4294901760
        %v2469 = vsub.f32 %v2467, %v2468
        %v2470 = vand.u32 %v2469, 4294901760
        %2471 = vmatpush1.msra.mxu0 %v2470
        %v2472 = vand.u32 %v1401, 4294901760
        %v2473 = vsub.f32 %v1401, %v2472
        %v2474 = vand.u32 %v2473, 4294901760
        %v2475 = vsub.f32 %v2473, %v2474
        %v2476 = vand.u32 %v2475, 4294901760
        %2477 = vmatprep.subr.mxu0 %v2476
        %v2478 = vand.u32 %v1400, 4294901760
        %v2479 = vsub.f32 %v1400, %v2478
        %v2480 = vand.u32 %v2479, 4294901760
        %v2481 = vsub.f32 %v2479, %v2480
        %v2482 = vand.u32 %v2481, 4294901760
        %2483 = vmatpush1.msra.mxu0 %v2482
        %v2484 = vand.u32 %v1405, 4294901760
        %v2485 = vsub.f32 %v1405, %v2484
        %v2486 = vand.u32 %v2485, 4294901760
        %v2487 = vsub.f32 %v2485, %v2486
        %v2488 = vand.u32 %v2487, 4294901760
        %2489 = vmatprep.subr.mxu0 %v2488
        %v2490 = vand.u32 %v1404, 4294901760
        %v2491 = vsub.f32 %v1404, %v2490
        %v2492 = vand.u32 %v2491, 4294901760
        %v2493 = vsub.f32 %v2491, %v2492
        %v2494 = vand.u32 %v2493, 4294901760
        %2495 = vmatpush1.msra.mxu0 %v2494
        %v2496 = vand.u32 %v1409, 4294901760
        %v2497 = vsub.f32 %v1409, %v2496
        %v2498 = vand.u32 %v2497, 4294901760
        %v2499 = vsub.f32 %v2497, %v2498
        %v2500 = vand.u32 %v2499, 4294901760
        %2501 = vmatprep.subr.mxu0 %v2500
        %v2502 = vand.u32 %v1408, 4294901760
        %v2503 = vsub.f32 %v1408, %v2502
        %v2504 = vand.u32 %v2503, 4294901760
        %v2505 = vsub.f32 %v2503, %v2504
        %v2506 = vand.u32 %v2505, 4294901760
        %2507 = vmatpush1.msra.mxu0 %v2506
        %v2508 = vand.u32 %v1413, 4294901760
        %v2509 = vsub.f32 %v1413, %v2508
        %v2510 = vand.u32 %v2509, 4294901760
        %v2511 = vsub.f32 %v2509, %v2510
        %v2512 = vand.u32 %v2511, 4294901760
        %2513 = vmatprep.subr.mxu0 %v2512
        %v2514 = vand.u32 %v1412, 4294901760
        %v2515 = vsub.f32 %v1412, %v2514
        %v2516 = vand.u32 %v2515, 4294901760
        %v2517 = vsub.f32 %v2515, %v2516
        %v2518 = vand.u32 %v2517, 4294901760
        %2519 = vmatpush1.msra.mxu0 %v2518
        %v2520 = vand.u32 %v1417, 4294901760
        %v2521 = vsub.f32 %v1417, %v2520
        %v2522 = vand.u32 %v2521, 4294901760
        %v2523 = vsub.f32 %v2521, %v2522
        %v2524 = vand.u32 %v2523, 4294901760
        %2525 = vmatprep.subr.mxu0 %v2524
        %v2526 = vand.u32 %v1416, 4294901760
        %v2527 = vsub.f32 %v1416, %v2526
        %v2528 = vand.u32 %v2527, 4294901760
        %v2529 = vsub.f32 %v2527, %v2528
        %v2530 = vand.u32 %v2529, 4294901760
        %2531 = vmatpush1.msra.mxu0 %v2530
        %v2532 = vand.u32 %v1421, 4294901760
        %v2533 = vsub.f32 %v1421, %v2532
        %v2534 = vand.u32 %v2533, 4294901760
        %v2535 = vsub.f32 %v2533, %v2534
        %v2536 = vand.u32 %v2535, 4294901760
        %2537 = vmatprep.subr.mxu0 %v2536
        %v2538 = vand.u32 %v1420, 4294901760
        %v2539 = vsub.f32 %v1420, %v2538
        %v2540 = vand.u32 %v2539, 4294901760
        %v2541 = vsub.f32 %v2539, %v2540
        %v2542 = vand.u32 %v2541, 4294901760
        %2543 = vmatpush1.msra.mxu0 %v2542
        %v2544 = vand.u32 %v1425, 4294901760
        %v2545 = vsub.f32 %v1425, %v2544
        %v2546 = vand.u32 %v2545, 4294901760
        %v2547 = vsub.f32 %v2545, %v2546
        %v2548 = vand.u32 %v2547, 4294901760
        %2549 = vmatprep.subr.mxu0 %v2548
        %v2550 = vand.u32 %v1424, 4294901760
        %v2551 = vsub.f32 %v1424, %v2550
        %v2552 = vand.u32 %v2551, 4294901760
        %v2553 = vsub.f32 %v2551, %v2552
        %v2554 = vand.u32 %v2553, 4294901760
        %2555 = vmatpush1.msra.mxu0 %v2554
        %v2556 = vand.u32 %v1429, 4294901760
        %v2557 = vsub.f32 %v1429, %v2556
        %v2558 = vand.u32 %v2557, 4294901760
        %v2559 = vsub.f32 %v2557, %v2558
        %v2560 = vand.u32 %v2559, 4294901760
        %2561 = vmatprep.subr.mxu0 %v2560
        %v2562 = vand.u32 %v1428, 4294901760
        %v2563 = vsub.f32 %v1428, %v2562
        %v2564 = vand.u32 %v2563, 4294901760
        %v2565 = vsub.f32 %v2563, %v2564
        %v2566 = vand.u32 %v2565, 4294901760
        %2567 = vmatpush1.msra.mxu0 %v2566
        %v2568 = vand.u32 %v1433, 4294901760
        %v2569 = vsub.f32 %v1433, %v2568
        %v2570 = vand.u32 %v2569, 4294901760
        %v2571 = vsub.f32 %v2569, %v2570
        %v2572 = vand.u32 %v2571, 4294901760
        %2573 = vmatprep.subr.mxu0 %v2572
        %v2574 = vand.u32 %v1432, 4294901760
        %v2575 = vsub.f32 %v1432, %v2574
        %v2576 = vand.u32 %v2575, 4294901760
        %v2577 = vsub.f32 %v2575, %v2576
        %v2578 = vand.u32 %v2577, 4294901760
        %2579 = vmatpush1.msra.mxu0 %v2578
        %v2580 = vand.u32 %v1437, 4294901760
        %v2581 = vsub.f32 %v1437, %v2580
        %v2582 = vand.u32 %v2581, 4294901760
        %v2583 = vsub.f32 %v2581, %v2582
        %v2584 = vand.u32 %v2583, 4294901760
        %2585 = vmatprep.subr.mxu0 %v2584
        %v2586 = vand.u32 %v1436, 4294901760
        %v2587 = vsub.f32 %v1436, %v2586
        %v2588 = vand.u32 %v2587, 4294901760
        %v2589 = vsub.f32 %v2587, %v2588
        %v2590 = vand.u32 %v2589, 4294901760
        %2591 = vmatpush1.msra.mxu0 %v2590
        %v2592 = vand.u32 %v1441, 4294901760
        %v2593 = vsub.f32 %v1441, %v2592
        %v2594 = vand.u32 %v2593, 4294901760
        %v2595 = vsub.f32 %v2593, %v2594
        %v2596 = vand.u32 %v2595, 4294901760
        %2597 = vmatprep.subr.mxu0 %v2596
        %v2598 = vand.u32 %v1440, 4294901760
        %v2599 = vsub.f32 %v1440, %v2598
        %v2600 = vand.u32 %v2599, 4294901760
        %v2601 = vsub.f32 %v2599, %v2600
        %v2602 = vand.u32 %v2601, 4294901760
        %2603 = vmatpush1.msra.mxu0 %v2602
        %v2604 = vand.u32 %v1445, 4294901760
        %v2605 = vsub.f32 %v1445, %v2604
        %v2606 = vand.u32 %v2605, 4294901760
        %v2607 = vsub.f32 %v2605, %v2606
        %v2608 = vand.u32 %v2607, 4294901760
        %2609 = vmatprep.subr.mxu0 %v2608
        %v2610 = vand.u32 %v1444, 4294901760
        %v2611 = vsub.f32 %v1444, %v2610
        %v2612 = vand.u32 %v2611, 4294901760
        %v2613 = vsub.f32 %v2611, %v2612
        %v2614 = vand.u32 %v2613, 4294901760
        %2615 = vmatpush1.msra.mxu0 %v2614
        %v2616 = vand.u32 %v1449, 4294901760
        %v2617 = vsub.f32 %v1449, %v2616
        %v2618 = vand.u32 %v2617, 4294901760
        %v2619 = vsub.f32 %v2617, %v2618
        %v2620 = vand.u32 %v2619, 4294901760
        %2621 = vmatprep.subr.mxu0 %v2620
        %v2622 = vand.u32 %v1448, 4294901760
        %v2623 = vsub.f32 %v1448, %v2622
        %v2624 = vand.u32 %v2623, 4294901760
        %v2625 = vsub.f32 %v2623, %v2624
        %v2626 = vand.u32 %v2625, 4294901760
        %2627 = vmatpush1.msra.mxu0 %v2626
        %2628 = vmatprep.subr.mxu0 0.0
        %2629 = vmatpush1.msra.mxu0 0.0
        %2630 = vmatprep.subr.mxu0 0.0
        %2631 = vmatpush1.msra.mxu0 0.0
        %2632 = vmatprep.subr.mxu0 0.0
        %2633 = vmatpush1.msra.mxu0 0.0
        %2634 = vmatprep.subr.mxu0 0.0
        %2635 = vmatpush1.msra.mxu0 0.0
        %2636 = vmatprep.subr.mxu0 0.0
        %2637 = vmatpush1.msra.mxu0 0.0
        %2638 = vmatprep.subr.mxu0 0.0
        %2639 = vmatpush1.msra.mxu0 0.0
        %2640 = vmatprep.subr.mxu0 0.0
        %2641 = vmatpush1.msra.mxu0 0.0
        %2642 = vmatprep.subr.mxu0 0.0
        %2643 = vmatpush1.msra.mxu0 0.0
        %2644 = vmatprep.subr.mxu0 0.0
        %2645 = vmatpush1.msra.mxu0 0.0
        %2646 = vmatprep.subr.mxu0 0.0
        %2647 = vmatpush1.msra.mxu0 0.0
        %2648 = vmatprep.subr.mxu0 0.0
        %2649 = vmatpush1.msra.mxu0 0.0
        %2650 = vmatprep.subr.mxu0 0.0
        %2651 = vmatpush1.msra.mxu0 0.0
        %2652 = vmatprep.subr.mxu0 0.0
        %2653 = vmatpush1.msra.mxu0 0.0
        %2654 = vmatprep.subr.mxu0 0.0
        %2655 = vmatpush1.msra.mxu0 0.0
        %2656 = vmatprep.subr.mxu0 0.0
        %2657 = vmatpush1.msra.mxu0 0.0
        %2658 = vmatprep.subr.mxu0 0.0
        %2659 = vmatpush1.msra.mxu0 0.0
        %2660 = vmatprep.mubr.f32.mxu0 0.0
        %v2661 = vand.u32 %v1471, 4294901760
        %2662 = vmatmul.mubr.f32.gmra.mrb[0].mxu0 %v2661
        %v2663 = vpop.f32.mrb[0].mxu0
        %v2664 = vadd.f32 %v2432, %v2663
        %v2665 = vpop.f32.mrb[0].mxu0
        %v2666 = vadd.f32 %v2434, %v2665
        %2667 = vdwg.mxu0
        %v2668 = vand.u32 %v1389, 4294901760
        %v2669 = vsub.f32 %v1389, %v2668
        %2670 = vmatprep.subr.mxu0 %v2669
        %v2671 = vand.u32 %v1388, 4294901760
        %v2672 = vsub.f32 %v1388, %v2671
        %2673 = vmatpush1.msra.mxu0 %v2672
        %v2674 = vand.u32 %v1393, 4294901760
        %v2675 = vsub.f32 %v1393, %v2674
        %2676 = vmatprep.subr.mxu0 %v2675
        %v2677 = vand.u32 %v1392, 4294901760
        %v2678 = vsub.f32 %v1392, %v2677
        %2679 = vmatpush1.msra.mxu0 %v2678
        %v2680 = vand.u32 %v1397, 4294901760
        %v2681 = vsub.f32 %v1397, %v2680
        %2682 = vmatprep.subr.mxu0 %v2681
        %v2683 = vand.u32 %v1396, 4294901760
        %v2684 = vsub.f32 %v1396, %v2683
        %2685 = vmatpush1.msra.mxu0 %v2684
        %v2686 = vand.u32 %v1401, 4294901760
        %v2687 = vsub.f32 %v1401, %v2686
        %2688 = vmatprep.subr.mxu0 %v2687
        %v2689 = vand.u32 %v1400, 4294901760
        %v2690 = vsub.f32 %v1400, %v2689
        %2691 = vmatpush1.msra.mxu0 %v2690
        %v2692 = vand.u32 %v1405, 4294901760
        %v2693 = vsub.f32 %v1405, %v2692
        %2694 = vmatprep.subr.mxu0 %v2693
        %v2695 = vand.u32 %v1404, 4294901760
        %v2696 = vsub.f32 %v1404, %v2695
        %2697 = vmatpush1.msra.mxu0 %v2696
        %v2698 = vand.u32 %v1409, 4294901760
        %v2699 = vsub.f32 %v1409, %v2698
        %2700 = vmatprep.subr.mxu0 %v2699
        %v2701 = vand.u32 %v1408, 4294901760
        %v2702 = vsub.f32 %v1408, %v2701
        %2703 = vmatpush1.msra.mxu0 %v2702
        %v2704 = vand.u32 %v1413, 4294901760
        %v2705 = vsub.f32 %v1413, %v2704
        %2706 = vmatprep.subr.mxu0 %v2705
        %v2707 = vand.u32 %v1412, 4294901760
        %v2708 = vsub.f32 %v1412, %v2707
        %2709 = vmatpush1.msra.mxu0 %v2708
        %v2710 = vand.u32 %v1417, 4294901760
        %v2711 = vsub.f32 %v1417, %v2710
        %2712 = vmatprep.subr.mxu0 %v2711
        %v2713 = vand.u32 %v1416, 4294901760
        %v2714 = vsub.f32 %v1416, %v2713
        %2715 = vmatpush1.msra.mxu0 %v2714
        %v2716 = vand.u32 %v1421, 4294901760
        %v2717 = vsub.f32 %v1421, %v2716
        %2718 = vmatprep.subr.mxu0 %v2717
        %v2719 = vand.u32 %v1420, 4294901760
        %v2720 = vsub.f32 %v1420, %v2719
        %2721 = vmatpush1.msra.mxu0 %v2720
        %v2722 = vand.u32 %v1425, 4294901760
        %v2723 = vsub.f32 %v1425, %v2722
        %2724 = vmatprep.subr.mxu0 %v2723
        %v2725 = vand.u32 %v1424, 4294901760
        %v2726 = vsub.f32 %v1424, %v2725
        %2727 = vmatpush1.msra.mxu0 %v2726
        %v2728 = vand.u32 %v1429, 4294901760
        %v2729 = vsub.f32 %v1429, %v2728
        %2730 = vmatprep.subr.mxu0 %v2729
        %v2731 = vand.u32 %v1428, 4294901760
        %v2732 = vsub.f32 %v1428, %v2731
        %2733 = vmatpush1.msra.mxu0 %v2732
        %v2734 = vand.u32 %v1433, 4294901760
        %v2735 = vsub.f32 %v1433, %v2734
        %2736 = vmatprep.subr.mxu0 %v2735
        %v2737 = vand.u32 %v1432, 4294901760
        %v2738 = vsub.f32 %v1432, %v2737
        %2739 = vmatpush1.msra.mxu0 %v2738
        %v2740 = vand.u32 %v1437, 4294901760
        %v2741 = vsub.f32 %v1437, %v2740
        %2742 = vmatprep.subr.mxu0 %v2741
        %v2743 = vand.u32 %v1436, 4294901760
        %v2744 = vsub.f32 %v1436, %v2743
        %2745 = vmatpush1.msra.mxu0 %v2744
        %v2746 = vand.u32 %v1441, 4294901760
        %v2747 = vsub.f32 %v1441, %v2746
        %2748 = vmatprep.subr.mxu0 %v2747
        %v2749 = vand.u32 %v1440, 4294901760
        %v2750 = vsub.f32 %v1440, %v2749
        %2751 = vmatpush1.msra.mxu0 %v2750
        %v2752 = vand.u32 %v1445, 4294901760
        %v2753 = vsub.f32 %v1445, %v2752
        %2754 = vmatprep.subr.mxu0 %v2753
        %v2755 = vand.u32 %v1444, 4294901760
        %v2756 = vsub.f32 %v1444, %v2755
        %2757 = vmatpush1.msra.mxu0 %v2756
        %v2758 = vand.u32 %v1449, 4294901760
        %v2759 = vsub.f32 %v1449, %v2758
        %2760 = vmatprep.subr.mxu0 %v2759
        %v2761 = vand.u32 %v1448, 4294901760
        %v2762 = vsub.f32 %v1448, %v2761
        %2763 = vmatpush1.msra.mxu0 %v2762
        %2764 = vmatprep.subr.mxu0 0.0
        %2765 = vmatpush1.msra.mxu0 0.0
        %2766 = vmatprep.subr.mxu0 0.0
        %2767 = vmatpush1.msra.mxu0 0.0
        %2768 = vmatprep.subr.mxu0 0.0
        %2769 = vmatpush1.msra.mxu0 0.0
        %2770 = vmatprep.subr.mxu0 0.0
        %2771 = vmatpush1.msra.mxu0 0.0
        %2772 = vmatprep.subr.mxu0 0.0
        %2773 = vmatpush1.msra.mxu0 0.0
        %2774 = vmatprep.subr.mxu0 0.0
        %2775 = vmatpush1.msra.mxu0 0.0
        %2776 = vmatprep.subr.mxu0 0.0
        %2777 = vmatpush1.msra.mxu0 0.0
        %2778 = vmatprep.subr.mxu0 0.0
        %2779 = vmatpush1.msra.mxu0 0.0
        %2780 = vmatprep.subr.mxu0 0.0
        %2781 = vmatpush1.msra.mxu0 0.0
        %2782 = vmatprep.subr.mxu0 0.0
        %2783 = vmatpush1.msra.mxu0 0.0
        %2784 = vmatprep.subr.mxu0 0.0
        %2785 = vmatpush1.msra.mxu0 0.0
        %2786 = vmatprep.subr.mxu0 0.0
        %2787 = vmatpush1.msra.mxu0 0.0
        %2788 = vmatprep.subr.mxu0 0.0
        %2789 = vmatpush1.msra.mxu0 0.0
        %2790 = vmatprep.subr.mxu0 0.0
        %2791 = vmatpush1.msra.mxu0 0.0
        %2792 = vmatprep.subr.mxu0 0.0
        %2793 = vmatpush1.msra.mxu0 0.0
        %2794 = vmatprep.subr.mxu0 0.0
        %2795 = vmatpush1.msra.mxu0 0.0
        %2796 = vmatprep.mubr.f32.mxu0 0.0
        %v2797 = vand.u32 %v1471, 4294901760
        %v2798 = vsub.f32 %v1471, %v2797
        %2799 = vmatmul.mubr.f32.gmra.mrb[0].mxu0 %v2798
        %v2800 = vpop.f32.mrb[0].mxu0
        %v2801 = vadd.f32 %v2664, %v2800
        %v2802 = vpop.f32.mrb[0].mxu0
        %v2803 = vadd.f32 %v2666, %v2802
        %2804 = vdwg.mxu0
        %v2805 = vand.u32 %v1389, 4294901760
        %2806 = vmatprep.subr.mxu0 %v2805
        %v2807 = vand.u32 %v1388, 4294901760
        %2808 = vmatpush1.msra.mxu0 %v2807
        %v2809 = vand.u32 %v1393, 4294901760
        %2810 = vmatprep.subr.mxu0 %v2809
        %v2811 = vand.u32 %v1392, 4294901760
        %2812 = vmatpush1.msra.mxu0 %v2811
        %v2813 = vand.u32 %v1397, 4294901760
        %2814 = vmatprep.subr.mxu0 %v2813
        %v2815 = vand.u32 %v1396, 4294901760
        %2816 = vmatpush1.msra.mxu0 %v2815
        %v2817 = vand.u32 %v1401, 4294901760
        %2818 = vmatprep.subr.mxu0 %v2817
        %v2819 = vand.u32 %v1400, 4294901760
        %2820 = vmatpush1.msra.mxu0 %v2819
        %v2821 = vand.u32 %v1405, 4294901760
        %2822 = vmatprep.subr.mxu0 %v2821
        %v2823 = vand.u32 %v1404, 4294901760
        %2824 = vmatpush1.msra.mxu0 %v2823
        %v2825 = vand.u32 %v1409, 4294901760
        %2826 = vmatprep.subr.mxu0 %v2825
        %v2827 = vand.u32 %v1408, 4294901760
        %2828 = vmatpush1.msra.mxu0 %v2827
        %v2829 = vand.u32 %v1413, 4294901760
        %2830 = vmatprep.subr.mxu0 %v2829
        %v2831 = vand.u32 %v1412, 4294901760
        %2832 = vmatpush1.msra.mxu0 %v2831
        %v2833 = vand.u32 %v1417, 4294901760
        %2834 = vmatprep.subr.mxu0 %v2833
        %v2835 = vand.u32 %v1416, 4294901760
        %2836 = vmatpush1.msra.mxu0 %v2835
        %v2837 = vand.u32 %v1421, 4294901760
        %2838 = vmatprep.subr.mxu0 %v2837
        %v2839 = vand.u32 %v1420, 4294901760
        %2840 = vmatpush1.msra.mxu0 %v2839
        %v2841 = vand.u32 %v1425, 4294901760
        %2842 = vmatprep.subr.mxu0 %v2841
        %v2843 = vand.u32 %v1424, 4294901760
        %2844 = vmatpush1.msra.mxu0 %v2843
        %v2845 = vand.u32 %v1429, 4294901760
        %2846 = vmatprep.subr.mxu0 %v2845
        %v2847 = vand.u32 %v1428, 4294901760
        %2848 = vmatpush1.msra.mxu0 %v2847
        %v2849 = vand.u32 %v1433, 4294901760
        %2850 = vmatprep.subr.mxu0 %v2849
        %v2851 = vand.u32 %v1432, 4294901760
        %2852 = vmatpush1.msra.mxu0 %v2851
        %v2853 = vand.u32 %v1437, 4294901760
        %2854 = vmatprep.subr.mxu0 %v2853
        %v2855 = vand.u32 %v1436, 4294901760
        %2856 = vmatpush1.msra.mxu0 %v2855
        %v2857 = vand.u32 %v1441, 4294901760
        %2858 = vmatprep.subr.mxu0 %v2857
        %v2859 = vand.u32 %v1440, 4294901760
        %2860 = vmatpush1.msra.mxu0 %v2859
        %v2861 = vand.u32 %v1445, 4294901760
        %2862 = vmatprep.subr.mxu0 %v2861
        %v2863 = vand.u32 %v1444, 4294901760
        %2864 = vmatpush1.msra.mxu0 %v2863
        %v2865 = vand.u32 %v1449, 4294901760
        %2866 = vmatprep.subr.mxu0 %v2865
        %v2867 = vand.u32 %v1448, 4294901760
        %2868 = vmatpush1.msra.mxu0 %v2867
        %2869 = vmatprep.subr.mxu0 0.0
        %2870 = vmatpush1.msra.mxu0 0.0
        %2871 = vmatprep.subr.mxu0 0.0
        %2872 = vmatpush1.msra.mxu0 0.0
        %2873 = vmatprep.subr.mxu0 0.0
        %2874 = vmatpush1.msra.mxu0 0.0
        %2875 = vmatprep.subr.mxu0 0.0
        %2876 = vmatpush1.msra.mxu0 0.0
        %2877 = vmatprep.subr.mxu0 0.0
        %2878 = vmatpush1.msra.mxu0 0.0
        %2879 = vmatprep.subr.mxu0 0.0
        %2880 = vmatpush1.msra.mxu0 0.0
        %2881 = vmatprep.subr.mxu0 0.0
        %2882 = vmatpush1.msra.mxu0 0.0
        %2883 = vmatprep.subr.mxu0 0.0
        %2884 = vmatpush1.msra.mxu0 0.0
        %2885 = vmatprep.subr.mxu0 0.0
        %2886 = vmatpush1.msra.mxu0 0.0
        %2887 = vmatprep.subr.mxu0 0.0
        %2888 = vmatpush1.msra.mxu0 0.0
        %2889 = vmatprep.subr.mxu0 0.0
        %2890 = vmatpush1.msra.mxu0 0.0
        %2891 = vmatprep.subr.mxu0 0.0
        %2892 = vmatpush1.msra.mxu0 0.0
        %2893 = vmatprep.subr.mxu0 0.0
        %2894 = vmatpush1.msra.mxu0 0.0
        %2895 = vmatprep.subr.mxu0 0.0
        %2896 = vmatpush1.msra.mxu0 0.0
        %2897 = vmatprep.subr.mxu0 0.0
        %2898 = vmatpush1.msra.mxu0 0.0
        %2899 = vmatprep.subr.mxu0 0.0
        %2900 = vmatpush1.msra.mxu0 0.0
        %2901 = vmatprep.mubr.f32.mxu0 0.0
        %v2902 = vand.u32 %v1471, 4294901760
        %v2903 = vsub.f32 %v1471, %v2902
        %v2904 = vand.u32 %v2903, 4294901760
        %2905 = vmatmul.mubr.f32.gmra.mrb[0].mxu0 %v2904
        %v2906 = vpop.f32.mrb[0].mxu0
        %v2907 = vadd.f32 %v2801, %v2906
        %v2908 = vpop.f32.mrb[0].mxu0
        %v2909 = vadd.f32 %v2803, %v2908
        %2910 = vdwg.mxu0
        %v2911 = vand.u32 %v1389, 4294901760
        %v2912 = vsub.f32 %v1389, %v2911
        %v2913 = vand.u32 %v2912, 4294901760
        %2914 = vmatprep.subr.mxu0 %v2913
        %v2915 = vand.u32 %v1388, 4294901760
        %v2916 = vsub.f32 %v1388, %v2915
        %v2917 = vand.u32 %v2916, 4294901760
        %2918 = vmatpush1.msra.mxu0 %v2917
        %v2919 = vand.u32 %v1393, 4294901760
        %v2920 = vsub.f32 %v1393, %v2919
        %v2921 = vand.u32 %v2920, 4294901760
        %2922 = vmatprep.subr.mxu0 %v2921
        %v2923 = vand.u32 %v1392, 4294901760
        %v2924 = vsub.f32 %v1392, %v2923
        %v2925 = vand.u32 %v2924, 4294901760
        %2926 = vmatpush1.msra.mxu0 %v2925
        %v2927 = vand.u32 %v1397, 4294901760
        %v2928 = vsub.f32 %v1397, %v2927
        %v2929 = vand.u32 %v2928, 4294901760
        %2930 = vmatprep.subr.mxu0 %v2929
        %v2931 = vand.u32 %v1396, 4294901760
        %v2932 = vsub.f32 %v1396, %v2931
        %v2933 = vand.u32 %v2932, 4294901760
        %2934 = vmatpush1.msra.mxu0 %v2933
        %v2935 = vand.u32 %v1401, 4294901760
        %v2936 = vsub.f32 %v1401, %v2935
        %v2937 = vand.u32 %v2936, 4294901760
        %2938 = vmatprep.subr.mxu0 %v2937
        %v2939 = vand.u32 %v1400, 4294901760
        %v2940 = vsub.f32 %v1400, %v2939
        %v2941 = vand.u32 %v2940, 4294901760
        %2942 = vmatpush1.msra.mxu0 %v2941
        %v2943 = vand.u32 %v1405, 4294901760
        %v2944 = vsub.f32 %v1405, %v2943
        %v2945 = vand.u32 %v2944, 4294901760
        %2946 = vmatprep.subr.mxu0 %v2945
        %v2947 = vand.u32 %v1404, 4294901760
        %v2948 = vsub.f32 %v1404, %v2947
        %v2949 = vand.u32 %v2948, 4294901760
        %2950 = vmatpush1.msra.mxu0 %v2949
        %v2951 = vand.u32 %v1409, 4294901760
        %v2952 = vsub.f32 %v1409, %v2951
        %v2953 = vand.u32 %v2952, 4294901760
        %2954 = vmatprep.subr.mxu0 %v2953
        %v2955 = vand.u32 %v1408, 4294901760
        %v2956 = vsub.f32 %v1408, %v2955
        %v2957 = vand.u32 %v2956, 4294901760
        %2958 = vmatpush1.msra.mxu0 %v2957
        %v2959 = vand.u32 %v1413, 4294901760
        %v2960 = vsub.f32 %v1413, %v2959
        %v2961 = vand.u32 %v2960, 4294901760
        %2962 = vmatprep.subr.mxu0 %v2961
        %v2963 = vand.u32 %v1412, 4294901760
        %v2964 = vsub.f32 %v1412, %v2963
        %v2965 = vand.u32 %v2964, 4294901760
        %2966 = vmatpush1.msra.mxu0 %v2965
        %v2967 = vand.u32 %v1417, 4294901760
        %v2968 = vsub.f32 %v1417, %v2967
        %v2969 = vand.u32 %v2968, 4294901760
        %2970 = vmatprep.subr.mxu0 %v2969
        %v2971 = vand.u32 %v1416, 4294901760
        %v2972 = vsub.f32 %v1416, %v2971
        %v2973 = vand.u32 %v2972, 4294901760
        %2974 = vmatpush1.msra.mxu0 %v2973
        %v2975 = vand.u32 %v1421, 4294901760
        %v2976 = vsub.f32 %v1421, %v2975
        %v2977 = vand.u32 %v2976, 4294901760
        %2978 = vmatprep.subr.mxu0 %v2977
        %v2979 = vand.u32 %v1420, 4294901760
        %v2980 = vsub.f32 %v1420, %v2979
        %v2981 = vand.u32 %v2980, 4294901760
        %2982 = vmatpush1.msra.mxu0 %v2981
        %v2983 = vand.u32 %v1425, 4294901760
        %v2984 = vsub.f32 %v1425, %v2983
        %v2985 = vand.u32 %v2984, 4294901760
        %2986 = vmatprep.subr.mxu0 %v2985
        %v2987 = vand.u32 %v1424, 4294901760
        %v2988 = vsub.f32 %v1424, %v2987
        %v2989 = vand.u32 %v2988, 4294901760
        %2990 = vmatpush1.msra.mxu0 %v2989
        %v2991 = vand.u32 %v1429, 4294901760
        %v2992 = vsub.f32 %v1429, %v2991
        %v2993 = vand.u32 %v2992, 4294901760
        %2994 = vmatprep.subr.mxu0 %v2993
        %v2995 = vand.u32 %v1428, 4294901760
        %v2996 = vsub.f32 %v1428, %v2995
        %v2997 = vand.u32 %v2996, 4294901760
        %2998 = vmatpush1.msra.mxu0 %v2997
        %v2999 = vand.u32 %v1433, 4294901760
        %v3000 = vsub.f32 %v1433, %v2999
        %v3001 = vand.u32 %v3000, 4294901760
        %3002 = vmatprep.subr.mxu0 %v3001
        %v3003 = vand.u32 %v1432, 4294901760
        %v3004 = vsub.f32 %v1432, %v3003
        %v3005 = vand.u32 %v3004, 4294901760
        %3006 = vmatpush1.msra.mxu0 %v3005
        %v3007 = vand.u32 %v1437, 4294901760
        %v3008 = vsub.f32 %v1437, %v3007
        %v3009 = vand.u32 %v3008, 4294901760
        %3010 = vmatprep.subr.mxu0 %v3009
        %v3011 = vand.u32 %v1436, 4294901760
        %v3012 = vsub.f32 %v1436, %v3011
        %v3013 = vand.u32 %v3012, 4294901760
        %3014 = vmatpush1.msra.mxu0 %v3013
        %v3015 = vand.u32 %v1441, 4294901760
        %v3016 = vsub.f32 %v1441, %v3015
        %v3017 = vand.u32 %v3016, 4294901760
        %3018 = vmatprep.subr.mxu0 %v3017
        %v3019 = vand.u32 %v1440, 4294901760
        %v3020 = vsub.f32 %v1440, %v3019
        %v3021 = vand.u32 %v3020, 4294901760
        %3022 = vmatpush1.msra.mxu0 %v3021
        %v3023 = vand.u32 %v1445, 4294901760
        %v3024 = vsub.f32 %v1445, %v3023
        %v3025 = vand.u32 %v3024, 4294901760
        %3026 = vmatprep.subr.mxu0 %v3025
        %v3027 = vand.u32 %v1444, 4294901760
        %v3028 = vsub.f32 %v1444, %v3027
        %v3029 = vand.u32 %v3028, 4294901760
        %3030 = vmatpush1.msra.mxu0 %v3029
        %v3031 = vand.u32 %v1449, 4294901760
        %v3032 = vsub.f32 %v1449, %v3031
        %v3033 = vand.u32 %v3032, 4294901760
        %3034 = vmatprep.subr.mxu0 %v3033
        %v3035 = vand.u32 %v1448, 4294901760
        %v3036 = vsub.f32 %v1448, %v3035
        %v3037 = vand.u32 %v3036, 4294901760
        %3038 = vmatpush1.msra.mxu0 %v3037
        %3039 = vmatprep.subr.mxu0 0.0
        %3040 = vmatpush1.msra.mxu0 0.0
        %3041 = vmatprep.subr.mxu0 0.0
        %3042 = vmatpush1.msra.mxu0 0.0
        %3043 = vmatprep.subr.mxu0 0.0
        %3044 = vmatpush1.msra.mxu0 0.0
        %3045 = vmatprep.subr.mxu0 0.0
        %3046 = vmatpush1.msra.mxu0 0.0
        %3047 = vmatprep.subr.mxu0 0.0
        %3048 = vmatpush1.msra.mxu0 0.0
        %3049 = vmatprep.subr.mxu0 0.0
        %3050 = vmatpush1.msra.mxu0 0.0
        %3051 = vmatprep.subr.mxu0 0.0
        %3052 = vmatpush1.msra.mxu0 0.0
        %3053 = vmatprep.subr.mxu0 0.0
        %3054 = vmatpush1.msra.mxu0 0.0
        %3055 = vmatprep.subr.mxu0 0.0
        %3056 = vmatpush1.msra.mxu0 0.0
        %3057 = vmatprep.subr.mxu0 0.0
        %3058 = vmatpush1.msra.mxu0 0.0
        %3059 = vmatprep.subr.mxu0 0.0
        %3060 = vmatpush1.msra.mxu0 0.0
        %3061 = vmatprep.subr.mxu0 0.0
        %3062 = vmatpush1.msra.mxu0 0.0
        %3063 = vmatprep.subr.mxu0 0.0
        %3064 = vmatpush1.msra.mxu0 0.0
        %3065 = vmatprep.subr.mxu0 0.0
        %3066 = vmatpush1.msra.mxu0 0.0
        %3067 = vmatprep.subr.mxu0 0.0
        %3068 = vmatpush1.msra.mxu0 0.0
        %3069 = vmatprep.subr.mxu0 0.0
        %3070 = vmatpush1.msra.mxu0 0.0
        %3071 = vmatprep.mubr.f32.mxu0 0.0
        %v3072 = vand.u32 %v1471, 4294901760
        %3073 = vmatmul.mubr.f32.gmra.mrb[0].mxu0 %v3072
        %v3074 = vpop.f32.mrb[0].mxu0
        %v3075 = vadd.f32 %v2907, %v3074
        %v3076 = vpop.f32.mrb[0].mxu0
        %v3077 = vadd.f32 %v2909, %v3076
        %3078 = vdwg.mxu0
        %v3079 = vand.u32 %v1389, 4294901760
        %3080 = vmatprep.subr.mxu0 %v3079
        %v3081 = vand.u32 %v1388, 4294901760
        %3082 = vmatpush1.msra.mxu0 %v3081
        %v3083 = vand.u32 %v1393, 4294901760
        %3084 = vmatprep.subr.mxu0 %v3083
        %v3085 = vand.u32 %v1392, 4294901760
        %3086 = vmatpush1.msra.mxu0 %v3085
        %v3087 = vand.u32 %v1397, 4294901760
        %3088 = vmatprep.subr.mxu0 %v3087
        %v3089 = vand.u32 %v1396, 4294901760
        %3090 = vmatpush1.msra.mxu0 %v3089
        %v3091 = vand.u32 %v1401, 4294901760
        %3092 = vmatprep.subr.mxu0 %v3091
        %v3093 = vand.u32 %v1400, 4294901760
        %3094 = vmatpush1.msra.mxu0 %v3093
        %v3095 = vand.u32 %v1405, 4294901760
        %3096 = vmatprep.subr.mxu0 %v3095
        %v3097 = vand.u32 %v1404, 4294901760
        %3098 = vmatpush1.msra.mxu0 %v3097
        %v3099 = vand.u32 %v1409, 4294901760
        %3100 = vmatprep.subr.mxu0 %v3099
        %v3101 = vand.u32 %v1408, 4294901760
        %3102 = vmatpush1.msra.mxu0 %v3101
        %v3103 = vand.u32 %v1413, 4294901760
        %3104 = vmatprep.subr.mxu0 %v3103
        %v3105 = vand.u32 %v1412, 4294901760
        %3106 = vmatpush1.msra.mxu0 %v3105
        %v3107 = vand.u32 %v1417, 4294901760
        %3108 = vmatprep.subr.mxu0 %v3107
        %v3109 = vand.u32 %v1416, 4294901760
        %3110 = vmatpush1.msra.mxu0 %v3109
        %v3111 = vand.u32 %v1421, 4294901760
        %3112 = vmatprep.subr.mxu0 %v3111
        %v3113 = vand.u32 %v1420, 4294901760
        %3114 = vmatpush1.msra.mxu0 %v3113
        %v3115 = vand.u32 %v1425, 4294901760
        %3116 = vmatprep.subr.mxu0 %v3115
        %v3117 = vand.u32 %v1424, 4294901760
        %3118 = vmatpush1.msra.mxu0 %v3117
        %v3119 = vand.u32 %v1429, 4294901760
        %3120 = vmatprep.subr.mxu0 %v3119
        %v3121 = vand.u32 %v1428, 4294901760
        %3122 = vmatpush1.msra.mxu0 %v3121
        %v3123 = vand.u32 %v1433, 4294901760
        %3124 = vmatprep.subr.mxu0 %v3123
        %v3125 = vand.u32 %v1432, 4294901760
        %3126 = vmatpush1.msra.mxu0 %v3125
        %v3127 = vand.u32 %v1437, 4294901760
        %3128 = vmatprep.subr.mxu0 %v3127
        %v3129 = vand.u32 %v1436, 4294901760
        %3130 = vmatpush1.msra.mxu0 %v3129
        %v3131 = vand.u32 %v1441, 4294901760
        %3132 = vmatprep.subr.mxu0 %v3131
        %v3133 = vand.u32 %v1440, 4294901760
        %3134 = vmatpush1.msra.mxu0 %v3133
        %v3135 = vand.u32 %v1445, 4294901760
        %3136 = vmatprep.subr.mxu0 %v3135
        %v3137 = vand.u32 %v1444, 4294901760
        %3138 = vmatpush1.msra.mxu0 %v3137
        %v3139 = vand.u32 %v1449, 4294901760
        %3140 = vmatprep.subr.mxu0 %v3139
        %v3141 = vand.u32 %v1448, 4294901760
        %3142 = vmatpush1.msra.mxu0 %v3141
        %3143 = vmatprep.subr.mxu0 0.0
        %3144 = vmatpush1.msra.mxu0 0.0
        %3145 = vmatprep.subr.mxu0 0.0
        %3146 = vmatpush1.msra.mxu0 0.0
        %3147 = vmatprep.subr.mxu0 0.0
        %3148 = vmatpush1.msra.mxu0 0.0
        %3149 = vmatprep.subr.mxu0 0.0
        %3150 = vmatpush1.msra.mxu0 0.0
        %3151 = vmatprep.subr.mxu0 0.0
        %3152 = vmatpush1.msra.mxu0 0.0
        %3153 = vmatprep.subr.mxu0 0.0
        %3154 = vmatpush1.msra.mxu0 0.0
        %3155 = vmatprep.subr.mxu0 0.0
        %3156 = vmatpush1.msra.mxu0 0.0
        %3157 = vmatprep.subr.mxu0 0.0
        %3158 = vmatpush1.msra.mxu0 0.0
        %3159 = vmatprep.subr.mxu0 0.0
        %3160 = vmatpush1.msra.mxu0 0.0
        %3161 = vmatprep.subr.mxu0 0.0
        %3162 = vmatpush1.msra.mxu0 0.0
        %3163 = vmatprep.subr.mxu0 0.0
        %3164 = vmatpush1.msra.mxu0 0.0
        %3165 = vmatprep.subr.mxu0 0.0
        %3166 = vmatpush1.msra.mxu0 0.0
        %3167 = vmatprep.subr.mxu0 0.0
        %3168 = vmatpush1.msra.mxu0 0.0
        %3169 = vmatprep.subr.mxu0 0.0
        %3170 = vmatpush1.msra.mxu0 0.0
        %3171 = vmatprep.subr.mxu0 0.0
        %3172 = vmatpush1.msra.mxu0 0.0
        %3173 = vmatprep.subr.mxu0 0.0
        %3174 = vmatpush1.msra.mxu0 0.0
        %3175 = vmatprep.mubr.f32.mxu0 0.0
        %v3176 = vand.u32 %v1471, 4294901760
        %3177 = vmatmul.mubr.f32.gmra.mrb[0].mxu0 %v3176
        %v3178 = vpop.f32.mrb[0].mxu0
        %v3179 = vadd.f32 %v3075, %v3178
        %v3180 = vpop.f32.mrb[0].mxu0
        %v3181 = vadd.f32 %v3077, %v3180
        %3182 = vdwg.mxu0
        %v3183 = vadd.f32 %v1382, %v2324
        %v3184 = vadd.f32 %v1383, %v2326
        %v3185 = vadd.f32 %v1384, %v3179
        %v3186 = vadd.f32 %v1385, %v3181
        %3187 = vst [vmem:[#allocation2] sm:$0xff] %v3183
        %3188 = vst [vmem:[#allocation2 + $0x8] sm:$0xff] %v3184
        %3189 = vst [vmem:[#allocation2 + $0x10] sm:$0xff] %v3185
        %3190 = vst [vmem:[#allocation2 + $0x18] sm:$0xff] %v3186
        %p3191 = scmp.eq.s32.totalorder %s27, 1
        // Predicated region
        $region53: #{tpu_custom_call.1} parent=39 // pred_check
          %p3192 = pneg %p3191
        $region54: #{tpu_custom_call.1} parent=39 // pred_check_branch
          %3194 = sbr.rel (%p3192) target = $region56
        $region55: #{tpu_custom_call.1} parent=39 // pred_region
          %v3195 = vld [vmem:[#allocation2] sm:$0xff]
          %v3196 = vld [vmem:[#allocation2 + $0x8] sm:$0xff]
          %v3197 = vld [vmem:[#allocation2 + $0x10] sm:$0xff]
          %v3198 = vld [vmem:[#allocation2 + $0x18] sm:$0xff]
          %v3199 = vmul.f32 %v3195, 0.00390625
          %v3200 = vmul.f32 %v3196, 0.00390625
          %v3201 = vmul.f32 %v3197, 0.00390625
          %v3202 = vmul.f32 %v3198, 0.00390625
          %v3203 = vld [vmem:[%s4] sm:$0xf]
          %v3205 = vlaneseq
          %v3206 = vshrl.u32 %v3205, 7
          %v3207 = vsub.s32 0, %v3206
          %v3208 = vrot.slane %v3203, %v3207
          %v3209 = vlaneseq
          %v3210 = vshrl.u32 %v3209, 7
          %v3211 = vsub.s32 1, %v3210
          %v3212 = vrot.slane %v3203, %v3211
          %v3213 = vlaneseq
          %v3214 = vshrl.u32 %v3213, 7
          %v3215 = vsub.s32 2, %v3214
          %v3216 = vrot.slane %v3203, %v3215
          %v3217 = vlaneseq
          %v3218 = vshrl.u32 %v3217, 7
          %v3219 = vsub.s32 3, %v3218
          %v3220 = vrot.slane %v3203, %v3219
          %v3225 = vmul.f32 %v3199, %v3208
          %v3226 = vmul.f32 %v3200, %v3212
          %v3227 = vmul.f32 %v3201, %v3216
          %v3228 = vmul.f32 %v3202, %v3220
          %v3229 = vadd.f32 %v3225, %v3226
          %v3230 = vadd.f32 %v3229, %v3227
          %v3231 = vadd.f32 %v3230, %v3228
          %3232 = vadd.xlane.f32.xlu0 %v3231
          %v3233 = vpop.xlane.xlu0 %3232
          %s3234 = sld [smem:[#allocation4]]
          %v3235 = vstv %s3234
          %v3236 = vadd.f32 %v3233, %v3235
          %v3237 = vxor.u32 %v3236, 2147483648
          %v3238 = vmul.f32 %v3237, 1.442695
          %v3239 = vpow.pop %v3238
          %v3240 = vadd.f32 %v3239, 1.0
          %v3241 = vrcp.pop %v3240
          %v3242 = vmul.f32 1.0, %v3241
          %vm3243 = vcmask 7168
          %3244 = vst.msk [vmem:[%s272] sm:$0xff] %vm3243, %v3242
        $region56: #{tpu_custom_call.1} parent=39 // pred_fallthru
          _
        %p3245 = scmp.lt.s32.totalorder %s26, 1
        %s3246 = scalar_select %p3245, %s26, 1
        %s3247 = smul.addr %s3246, 8
        %s3248 = scalar_lea.vmem %s5, %s3247
        // Predicated region
        $region57: #{tpu_custom_call.1} parent=39 // pred_check
          %p3249 = pneg %p164
        $region58: #{tpu_custom_call.1} parent=39 // pred_check_branch
          %3251 = sbr.rel (%p3249) target = $region60
        $region59: #{tpu_custom_call.1} parent=39 // pred_region
          _
        $region60: #{tpu_custom_call.1} parent=39 // pred_fallthru
          _
      $region40: #{tpu_custom_call.1} parent=5 // pred_fallthru
        _
      %p3252 = scmp.le.s32.totalorder 2, %s17
      // Predicated region
      $region61: #{tpu_custom_call.1} parent=5 // pred_check
        %p3253 = pneg %p3252
      $region62: #{tpu_custom_call.1} parent=5 // pred_check_branch
        %3255 = sbr.rel (%p3253) target = $region64
      $region63: #{tpu_custom_call.1} parent=5 // pred_region
        %s3256 = ssub.s32 %s17, 2
        // Predicated region
        $region65: #{tpu_custom_call.1} parent=63 // pred_check
          %p3257 = pneg %p170
        $region66: #{tpu_custom_call.1} parent=63 // pred_check_branch
          %3259 = sbr.rel (%p3257) target = $region68
        $region67: #{tpu_custom_call.1} parent=63 // pred_region
          %p3260 = scmp.lt.s32.totalorder %s28, 1
          %s3261 = scalar_select %p3260, %s28, 1
          %s3262 = smul.addr %s3261, 8
          %s3263 = scalar_lea.vmem %s5, %s3262
        $region68: #{tpu_custom_call.1} parent=63 // pred_fallthru
          _
      $region64: #{tpu_custom_call.1} parent=5 // pred_fallthru
        _
    $region6: #{tpu_custom_call.1} parent=1 // loop_footer
      %s21 = sadd.s32 1, %s17
    $region7: #{tpu_custom_call.1} parent=1 // loop_footer_branch
      %16 = sbr.rel target = $region3
    $region8: #{tpu_custom_call.1} parent=1 // loop_exit
      _
    %3264 = vsyncpa [#allocation6], 1
    %s3265 = scalar_lea.sflag [#allocation6], 1
    %3266 = vsyncpa %s3265, 1
    %3267 = vsyncpa [#allocation8], 1

</llo_original>
